<compile_context>
chip_gen: v7x
topology: tpu7x:2x2x1
jax: 0.10.0
libtpu: 0.0.40
codegen_flags: <defaults>
</compile_context>

<pallas_src>
import functools
import math

import jax
import jax.numpy as jnp
from jax.experimental import pallas as pl
from jax.experimental.pallas import tpu as pltpu


# ----------------------------------------------------------------------------
# The single fused kernel.  grid = (batch, layer).
# ----------------------------------------------------------------------------
def _bertnet_kernel(
    # embedding inputs (constant over layers, used at layer 0)
    xcol_ref, w1f_ref, b1_ref, sel_e_ref, sel_o_ref, w2f_ref, b2_ref,
    sp_ref, adj_ref,
    # per-head lane masks (constant)
    hmask_ref,
    # per-layer stacked transformer-block weights
    ln1g_ref, ln1b_ref, wq_ref, bq_ref, wk_ref, bk_ref, wv_ref, bv_ref,
    ln2g_ref, ln2b_ref, fw1_ref, fb1_ref, fw2_ref, fb2_ref,
    # projection head (constant, used at the last layer)
    pw1f_ref, pb1_ref, psel_e_ref, psel_o_ref, pw2f_ref, pb2_ref,
    # output
    o_ref,
    # scratch
    h_ref, pad_ref,
    *, n_heads):
    layer = pl.program_id(1)
    n_layers = pl.num_programs(1)
    S, E = h_ref.shape
    H = n_heads
    D = E // H

    # ------------- MeasureEmbedding2 + attention pad mask (layer 0) ---------
    @pl.when(layer == 0)
    def _embed():
        xcol = xcol_ref[0]                                  # (K1*Nm, L1) im2col
        # Conv1d(k=11) as ONE K=88 matmul, + bias, ReLU.
        y = jnp.maximum(
            jnp.dot(w1f_ref[...], xcol, preferred_element_type=jnp.float32)
            + b1_ref[...], 0.0)                             # (Nn, L1)
        # MaxPool1d(2): two 0/1 selection matmuls (constant matrices) + max.
        yp = jnp.maximum(
            jnp.dot(y, sel_e_ref[...], preferred_element_type=jnp.float32),
            jnp.dot(y, sel_o_ref[...], preferred_element_type=jnp.float32))
        # Conv1d(k=K2): in-kernel im2col (sublane concat) + ONE matmul.
        Lp = yp.shape[1]
        K2 = Lp - E + 1
        ycol = jnp.concatenate([yp[:, j:j + E] for j in range(K2)], axis=0)
        z = jnp.dot(w2f_ref[...], ycol,
                    preferred_element_type=jnp.float32) + b2_ref[...]  # (Nn,E)
        # spatial GEMM + ReLU, then D^-1/2 Z D^-1/2 GEMM.
        hs = jnp.maximum(
            jnp.dot(z, sp_ref[...], preferred_element_type=jnp.float32), 0.0)
        emb = jnp.dot(adj_ref[...], hs, preferred_element_type=jnp.float32)
        h_ref[...] = emb                                    # resident (S, E)
        # get_attn_pad_mask: key k is padded iff emb[k, 0] == 0.  Broadcast to
        # an (S_q, S_k) matrix with a K=1 outer-product matmul (no transpose).
        key_pad = (emb[:, 0:1] == 0.0).astype(jnp.float32)  # (S, 1)
        pad_ref[...] = jnp.einsum('qi,ki->qk',
                                  jnp.ones((S, 1), jnp.float32), key_pad,
                                  preferred_element_type=jnp.float32)

    # ------------------------ transformer Block (every layer) ---------------
    x = h_ref[...]                                          # (S, E)
    padmat = pad_ref[...]                                   # (S, S), 1.0 = pad
    hmask = hmask_ref[...]                                  # (H, E) 0/1 lanes

    def layernorm(v, g, b):
        mu = jnp.mean(v, axis=-1, keepdims=True)
        c = v - mu
        var = jnp.mean(c * c, axis=-1, keepdims=True)
        return c * jax.lax.rsqrt(var + 1e-5) * g + b

    x1 = layernorm(x, ln1g_ref[0], ln1b_ref[0])
    q = jnp.dot(x1, wq_ref[0], preferred_element_type=jnp.float32) + bq_ref[0]
    k = jnp.dot(x1, wk_ref[0], preferred_element_type=jnp.float32) + bk_ref[0]
    v = jnp.dot(x1, wv_ref[0], preferred_element_type=jnp.float32) + bv_ref[0]
    scale = 1.0 / math.sqrt(D)

    # Relayout-free multi-head attention: mask the head's lanes instead of
    # slicing/reshaping; each head's PV result lands directly in its lanes.
    attn = jnp.zeros((S, E), jnp.float32)
    for hd in range(H):
        m = hmask[hd:hd + 1, :]                             # (1, E) 0/1
        s = jnp.einsum('qe,ke->qk', q * m, k,
                       preferred_element_type=jnp.float32) * scale
        s = jnp.where(padmat > 0.5, jnp.float32(-1e10), s)
        s = s - jnp.max(s, axis=-1, keepdims=True)
        p = jnp.exp(s)
        p = p / jnp.sum(p, axis=-1, keepdims=True)          # exact softmax
        attn = attn + jnp.dot(p, v * m, preferred_element_type=jnp.float32)
    # NOTE: reference MultiHeadAttention returns the pre-`fc` tensor; fc omitted.
    xa = x + attn

    xf = layernorm(xa, ln2g_ref[0], ln2b_ref[0])
    hid = jnp.maximum(
        jnp.dot(xf, fw1_ref[0], preferred_element_type=jnp.float32)
        + fb1_ref[0], 0.0)
    ffn = jnp.dot(hid, fw2_ref[0], preferred_element_type=jnp.float32) \
        + fb2_ref[0]
    h_ref[...] = xa + ffn

    # --------------------- projection head (last layer only) ----------------
    @pl.when(layer == n_layers - 1)
    def _proj():
        hf = h_ref[...]                                     # (Nn, E)
        Nn = hf.shape[0]
        L1p = psel_e_ref.shape[0]
        K1p = E - L1p + 1
        # Conv1d(k=11): in-kernel im2col + ONE K=88 matmul, + bias, ReLU.
        xc = jnp.concatenate([hf[:, j:j + L1p] for j in range(K1p)], axis=0)
        z = jnp.maximum(
            jnp.dot(pw1f_ref[...], xc, preferred_element_type=jnp.float32)
            + pb1_ref[...], 0.0)                            # (Nm, L1p)
        # MaxPool1d(2) via selection matmuls.
        zp = jnp.maximum(
            jnp.dot(z, psel_e_ref[...], preferred_element_type=jnp.float32),
            jnp.dot(z, psel_o_ref[...], preferred_element_type=jnp.float32))
        # Conv1d(k=K2p) with output length 1: flatten + ONE matmul.
        K2p = pw2f_ref.shape[1] // Nn
        zvec = jnp.concatenate([zp[:, j:j + 1] for j in range(K2p)], axis=0)
        out_col = jnp.dot(pw2f_ref[...], zvec,
                          preferred_element_type=jnp.float32) + pb2_ref[...]
        # Lane-dense (1, Nm) row store (transpose via a K=1 matmul, not XLU).
        o_ref[0] = jnp.einsum('ab,mb->am', jnp.ones((1, 1), jnp.float32),
                              out_col, preferred_element_type=jnp.float32)


# ----------------------------------------------------------------------------
# Wrapper: tiny one-time XLA prep (im2col of the raw input, normalized
# adjacency, constant selection / head-mask matrices) + ONE pallas_call.
# ----------------------------------------------------------------------------
def _pool_selectors(n_in, n_out):
    i = jnp.arange(n_in)[:, None]
    j = jnp.arange(n_out)[None, :]
    sel_e = (i == 2 * j).astype(jnp.float32)
    sel_o = (i == 2 * j + 1).astype(jnp.float32)
    return sel_e, sel_o


def bertnet_forward(x, mask_pos, Z, params, cfg):
    B, Nm, ts = x.shape
    Nn, E = cfg['n_nodes'], cfg['n_embed']
    F, H, L = cfg['ffn_dim'], cfg['n_head'], cfg['n_layers']
    S = Nn
    assert Nm == Nn, "module requires n_meas == n_nodes for its conv chains"

    # im2col of the raw input for the first time-conv (k-major, channel-minor).
    K1 = params['te_w1f'].shape[1] // Nm
    L1 = ts - K1 + 1
    x_col = jnp.concatenate(
        [x[:, :, j:j + L1] for j in range(K1)], axis=1).astype(jnp.float32)

    # normalized adjacency D^-1/2 Z D^-1/2 (tiny, once per call, plain XLA).
    d = jnp.power(Z.sum(1), -0.5)
    adj = (d[:, None] * Z * d[None, :]).astype(jnp.float32)

    # constant maxpool selection matrices + per-head lane masks (DMA'd once).
    Lp = L1 // 2
    sel_e, sel_o = _pool_selectors(L1, Lp)
    K1p = params['pr_w1f'].shape[1] // Nn
    L1p = E - K1p + 1
    psel_e, psel_o = _pool_selectors(L1p, L1p // 2)
    Dh = E // H
    hmask = (jnp.arange(E)[None, :] // Dh ==
             jnp.arange(H)[:, None]).astype(jnp.float32)     # (H, E)

    # static sanity checks of the conv chain geometry.
    K2 = params['te_w2f'].shape[1] // Nm
    assert Lp - K2 + 1 == E
    K2p = params['pr_w2f'].shape[1] // Nn
    assert (L1p // 2) - K2p + 1 == 1

    bp = params['blocks']

    def bspec(shape):      # per-batch input: block index follows batch axis
        nd = len(shape)
        return pl.BlockSpec((1,) + shape, lambda b, l: (b,) + (0,) * nd)

    def cspec(shape):      # constant input: fetched once (index never changes)
        nd = len(shape)
        return pl.BlockSpec(shape, lambda b, l: (0,) * nd)

    def lspec(shape):      # per-layer stacked weight: block index = layer
        nd = len(shape)
        return pl.BlockSpec((1,) + shape, lambda b, l: (l,) + (0,) * nd)

    out = pl.pallas_call(
        functools.partial(_bertnet_kernel, n_heads=H),
        out_shape=jax.ShapeDtypeStruct((B, 1, Nm), jnp.float32),
        grid=(B, L),
        in_specs=[
            bspec((K1 * Nm, L1)),                           # x im2col
            cspec(params['te_w1f'].shape), cspec(params['te_b1'].shape),
            cspec(sel_e.shape), cspec(sel_o.shape),
            cspec(params['te_w2f'].shape), cspec(params['te_b2'].shape),
            cspec((E, E)), cspec((Nn, Nn)),                 # spatial, adj
            cspec((H, E)),                                  # head lane masks
            lspec((1, E)), lspec((1, E)),                   # ln1 gamma / beta
            lspec((E, E)), lspec((1, E)),                   # w_q / b_q
            lspec((E, E)), lspec((1, E)),                   # w_k / b_k
            lspec((E, E)), lspec((1, E)),                   # w_v / b_v
            lspec((1, E)), lspec((1, E)),                   # ln2 gamma / beta
            lspec((E, F)), lspec((1, F)),                   # ffn w1 / b1
            lspec((F, E)), lspec((1, E)),                   # ffn w2 / b2
            cspec(params['pr_w1f'].shape), cspec(params['pr_b1'].shape),
            cspec(psel_e.shape), cspec(psel_o.shape),
            cspec(params['pr_w2f'].shape), cspec(params['pr_b2'].shape),
        ],
        out_specs=pl.BlockSpec((1, 1, Nm), lambda b, l: (b, 0, 0)),
        scratch_shapes=[pltpu.VMEM((S, E), jnp.float32),    # resident activations
                        pltpu.VMEM((S, S), jnp.float32)],   # pad-mask matrix
        compiler_params=pltpu.CompilerParams(
            # batch axis parallel (v7x megacore splits it); the layer axis is a
            # serial dependency.  Usage is <1 MiB so a 32 MiB scoped VMEM limit
            # is safe on every generation (v7x physical VMEM is 64 MiB).
            dimension_semantics=("parallel", "arbitrary"),
            vmem_limit_bytes=32 * 1024 * 1024),
    )(x_col, params['te_w1f'], params['te_b1'], sel_e, sel_o,
      params['te_w2f'], params['te_b2'], params['spatial'], adj, hmask,
      bp['ln1_g'], bp['ln1_b'], bp['wq'], bp['bq'], bp['wk'], bp['bk'],
      bp['wv'], bp['bv'], bp['ln2_g'], bp['ln2_b'],
      bp['w1'], bp['b1'], bp['w2'], bp['b2'],
      params['pr_w1f'], params['pr_b1'], psel_e, psel_o,
      params['pr_w2f'], params['pr_b2'])

    # (B, 1, Nm) lane-dense kernel output -> (B, Nm, 1), then gather.
    # TODO(synk): reference's `.view(bsz, n_meas*n_nodes, 1)` is inconsistent
    # with its own proj output shape; the actual (B, n_meas, 1) tensor is kept.
    out = out.reshape(B, Nm, 1)
    pred = jnp.take_along_axis(out, mask_pos[:, :, None], axis=1)
    return out, pred


# ----------------------------------------------------------------------------
# Deterministic parameter init (PyTorch-style uniform bounds), stored directly
# in the kernel-friendly flattened / stacked layouts.
# ----------------------------------------------------------------------------
def _uniform(key, shape, bound):
    return jax.random.uniform(key, shape, jnp.float32, -bound, bound)


def init_params(key, cfg):
    E, F = cfg['n_embed'], cfg['ffn_dim']
    Nn, Nm, ts = cfg['n_nodes'], cfg['n_meas'], cfg['ts']
    L = cfg['n_layers']
    keys = iter(jax.random.split(key, 32))
    p = {}

    def flat(w):   # (K, Cout, Cin) conv weight -> (Cout, K*Cin), k-major rows
        K, Co, Ci = w.shape
        return jnp.transpose(w, (1, 0, 2)).reshape(Co, K * Ci)

    k1 = 11
    k2 = int((ts - 10) / 2 - E + 1)
    b = 1.0 / math.sqrt(Nm * k1)
    p['te_w1f'] = flat(_uniform(next(keys), (k1, Nn, Nm), b))
    p['te_b1'] = _uniform(next(keys), (Nn, 1), b)
    b = 1.0 / math.sqrt(Nm * k2)
    p['te_w2f'] = flat(_uniform(next(keys), (k2, Nn, Nm), b))
    p['te_b2'] = _uniform(next(keys), (Nn, 1), b)
    p['spatial'] = _uniform(next(keys), (E, E), 1.0 / math.sqrt(E))

    be = 1.0 / math.sqrt(E)
    bf = 1.0 / math.sqrt(F)
    # TODO(synk): weights kept f32 everywhere (v5e-safe); casting the MXU
    # operands to bf16 is a small extra win on v6e/v7x if E/F/B ever grow.
    p['blocks'] = {
        'ln1_g': jnp.ones((L, 1, E), jnp.float32),
        'ln1_b': jnp.zeros((L, 1, E), jnp.float32),
        'ln2_g': jnp.ones((L, 1, E), jnp.float32),
        'ln2_b': jnp.zeros((L, 1, E), jnp.float32),
        'wq': _uniform(next(keys), (L, E, E), be),
        'bq': _uniform(next(keys), (L, 1, E), be),
        'wk': _uniform(next(keys), (L, E, E), be),
        'bk': _uniform(next(keys), (L, 1, E), be),
        'wv': _uniform(next(keys), (L, E, E), be),
        'bv': _uniform(next(keys), (L, 1, E), be),
        'w1': _uniform(next(keys), (L, E, F), be),
        'b1': _uniform(next(keys), (L, 1, F), be),
        'w2': _uniform(next(keys), (L, F, E), bf),
        'b2': _uniform(next(keys), (L, 1, E), bf),
    }

    pk1 = 11
    pk2 = int((E - 10) / 2)
    b = 1.0 / math.sqrt(Nn * pk1)
    p['pr_w1f'] = flat(_uniform(next(keys), (pk1, Nm, Nn), b))
    p['pr_b1'] = _uniform(next(keys), (Nm, 1), b)
    b = 1.0 / math.sqrt(Nn * pk2)
    p['pr_w2f'] = flat(_uniform(next(keys), (pk2, Nm, Nn), b))
    p['pr_b2'] = _uniform(next(keys), (Nm, 1), b)
    return p


if __name__ == "__main__":
    cfg = dict(n_embed=32, ffn_dim=64, n_nodes=8, n_meas=8, ts=80,
               n_head=4, n_layers=2, dropout=0.0)
    key = jax.random.PRNGKey(0)
    kp, kx, kz, km = jax.random.split(key, 4)

    params = init_params(kp, cfg)
    B = 2
    x = jax.random.normal(kx, (B, cfg['n_meas'], cfg['ts']), jnp.float32)
    Z = jax.random.uniform(kz, (cfg['n_nodes'], cfg['n_nodes']),
                           jnp.float32, 0.1, 1.0) \
        + jnp.eye(cfg['n_nodes'], dtype=jnp.float32)
    mask_pos = jax.random.randint(km, (B, 3), 0, cfg['n_meas'])

    fwd = jax.jit(lambda xx, mp, zz, pp: bertnet_forward(xx, mp, zz, pp, cfg))
    out, pred = fwd(x, mask_pos, Z, params)
    jax.block_until_ready((out, pred))
    assert out.shape == (B, cfg['n_meas'], 1) and pred.shape == (B, 3, 1)
    print("KERNEL_OK")
</pallas_src>

<mosaic_0001>
module attributes {stable_mosaic.version = 11 : i64} {
  func.func @_bertnet_kernel(%arg0: i32, %arg1: i32, %arg2: memref<1x88x70xf32, #tpu.memory_space<vmem>>, %arg3: memref<8x88xf32, #tpu.memory_space<vmem>>, %arg4: memref<8x1xf32, #tpu.memory_space<vmem>>, %arg5: memref<70x35xf32, #tpu.memory_space<vmem>>, %arg6: memref<70x35xf32, #tpu.memory_space<vmem>>, %arg7: memref<8x32xf32, #tpu.memory_space<vmem>>, %arg8: memref<8x1xf32, #tpu.memory_space<vmem>>, %arg9: memref<32x32xf32, #tpu.memory_space<vmem>>, %arg10: memref<8x8xf32, #tpu.memory_space<vmem>>, %arg11: memref<4x32xf32, #tpu.memory_space<vmem>>, %arg12: memref<1x1x32xf32, #tpu.memory_space<vmem>>, %arg13: memref<1x1x32xf32, #tpu.memory_space<vmem>>, %arg14: memref<1x32x32xf32, #tpu.memory_space<vmem>>, %arg15: memref<1x1x32xf32, #tpu.memory_space<vmem>>, %arg16: memref<1x32x32xf32, #tpu.memory_space<vmem>>, %arg17: memref<1x1x32xf32, #tpu.memory_space<vmem>>, %arg18: memref<1x32x32xf32, #tpu.memory_space<vmem>>, %arg19: memref<1x1x32xf32, #tpu.memory_space<vmem>>, %arg20: memref<1x1x32xf32, #tpu.memory_space<vmem>>, %arg21: memref<1x1x32xf32, #tpu.memory_space<vmem>>, %arg22: memref<1x32x64xf32, #tpu.memory_space<vmem>>, %arg23: memref<1x1x64xf32, #tpu.memory_space<vmem>>, %arg24: memref<1x64x32xf32, #tpu.memory_space<vmem>>, %arg25: memref<1x1x32xf32, #tpu.memory_space<vmem>>, %arg26: memref<8x88xf32, #tpu.memory_space<vmem>>, %arg27: memref<8x1xf32, #tpu.memory_space<vmem>>, %arg28: memref<22x11xf32, #tpu.memory_space<vmem>>, %arg29: memref<22x11xf32, #tpu.memory_space<vmem>>, %arg30: memref<8x88xf32, #tpu.memory_space<vmem>>, %arg31: memref<8x1xf32, #tpu.memory_space<vmem>>, %arg32: memref<1x1x8xf32, #tpu.memory_space<vmem>>, %arg33: memref<8x32xf32, #tpu.memory_space<vmem>>, %arg34: memref<8x8xf32, #tpu.memory_space<vmem>>) attributes {dimension_semantics = [#tpu.dimension_semantics<parallel>, #tpu.dimension_semantics<arbitrary>], iteration_bounds = array<i64: 2, 2>, scalar_prefetch = 0 : i64, scratch_operands = 2 : i64, tpu.core_type = #tpu.core_type<tc>, window_params = [{transform_indices = @transform_0, window_bounds = array<i64: 1, 88, 70>}, {pipeline_mode = #tpu.pipeline_mode<synchronous>, transform_indices = @transform_1, window_bounds = array<i64: 8, 88>}, {pipeline_mode = #tpu.pipeline_mode<synchronous>, transform_indices = @transform_2, window_bounds = array<i64: 8, 1>}, {pipeline_mode = #tpu.pipeline_mode<synchronous>, transform_indices = @transform_3, window_bounds = array<i64: 70, 35>}, {pipeline_mode = #tpu.pipeline_mode<synchronous>, transform_indices = @transform_4, window_bounds = array<i64: 70, 35>}, {pipeline_mode = #tpu.pipeline_mode<synchronous>, transform_indices = @transform_5, window_bounds = array<i64: 8, 32>}, {pipeline_mode = #tpu.pipeline_mode<synchronous>, transform_indices = @transform_6, window_bounds = array<i64: 8, 1>}, {pipeline_mode = #tpu.pipeline_mode<synchronous>, transform_indices = @transform_7, window_bounds = array<i64: 32, 32>}, {pipeline_mode = #tpu.pipeline_mode<synchronous>, transform_indices = @transform_8, window_bounds = array<i64: 8, 8>}, {pipeline_mode = #tpu.pipeline_mode<synchronous>, transform_indices = @transform_9, window_bounds = array<i64: 4, 32>}, {transform_indices = @transform_10, window_bounds = array<i64: 1, 1, 32>}, {transform_indices = @transform_11, window_bounds = array<i64: 1, 1, 32>}, {transform_indices = @transform_12, window_bounds = array<i64: 1, 32, 32>}, {transform_indices = @transform_13, window_bounds = array<i64: 1, 1, 32>}, {transform_indices = @transform_14, window_bounds = array<i64: 1, 32, 32>}, {transform_indices = @transform_15, window_bounds = array<i64: 1, 1, 32>}, {transform_indices = @transform_16, window_bounds = array<i64: 1, 32, 32>}, {transform_indices = @transform_17, window_bounds = array<i64: 1, 1, 32>}, {transform_indices = @transform_18, window_bounds = array<i64: 1, 1, 32>}, {transform_indices = @transform_19, window_bounds = array<i64: 1, 1, 32>}, {transform_indices = @transform_20, window_bounds = array<i64: 1, 32, 64>}, {transform_indices = @transform_21, window_bounds = array<i64: 1, 1, 64>}, {transform_indices = @transform_22, window_bounds = array<i64: 1, 64, 32>}, {transform_indices = @transform_23, window_bounds = array<i64: 1, 1, 32>}, {pipeline_mode = #tpu.pipeline_mode<synchronous>, transform_indices = @transform_24, window_bounds = array<i64: 8, 88>}, {pipeline_mode = #tpu.pipeline_mode<synchronous>, transform_indices = @transform_25, window_bounds = array<i64: 8, 1>}, {pipeline_mode = #tpu.pipeline_mode<synchronous>, transform_indices = @transform_26, window_bounds = array<i64: 22, 11>}, {pipeline_mode = #tpu.pipeline_mode<synchronous>, transform_indices = @transform_27, window_bounds = array<i64: 22, 11>}, {pipeline_mode = #tpu.pipeline_mode<synchronous>, transform_indices = @transform_28, window_bounds = array<i64: 8, 88>}, {pipeline_mode = #tpu.pipeline_mode<synchronous>, transform_indices = @transform_29, window_bounds = array<i64: 8, 1>}, {transform_indices = @transform_30, window_bounds = array<i64: 1, 1, 8>}]} {
    %c0_i32 = arith.constant 0 : i32
    %0 = arith.cmpi eq, %arg1, %c0_i32 : i32
    %1 = arith.extui %0 : i1 to i32
    %c0_i32_0 = arith.constant 0 : i32
    %2 = arith.cmpi ne, %1, %c0_i32_0 : i32
    scf.if %2 {
      %c0_95 = arith.constant 0 : index
      %c0_96 = arith.constant 0 : index
      %c0_97 = arith.constant 0 : index
      %190 = vector.load %arg2[%c0_95, %c0_96, %c0_97] : memref<1x88x70xf32, #tpu.memory_space<vmem>>, vector<1x88x70xf32>
      %191 = vector.shape_cast %190 : vector<1x88x70xf32> to vector<88x70xf32>
      %c0_98 = arith.constant 0 : index
      %c0_99 = arith.constant 0 : index
      %192 = vector.load %arg3[%c0_98, %c0_99] : memref<8x88xf32, #tpu.memory_space<vmem>>, vector<8x88xf32>
      %cst_100 = arith.constant dense<0.000000e+00> : vector<8x70xf32>
      %193 = tpu.matmul %192, %191, %cst_100 {dimension_numbers = #tpu.dot_dimension_numbers<[1], [0], [0], [1], [0, 0, 1, 1], [], []>} : vector<8x88xf32>, vector<88x70xf32>, vector<8x70xf32> -> vector<8x70xf32>
      %c0_101 = arith.constant 0 : index
      %c0_102 = arith.constant 0 : index
      %194 = vector.load %arg4[%c0_101, %c0_102] : memref<8x1xf32, #tpu.memory_space<vmem>>, vector<8x1xf32>
      %195 = vector.broadcast %194 : vector<8x1xf32> to vector<8x70xf32>
      %196 = arith.addf %193, %195 : vector<8x70xf32>
      %cst_103 = arith.constant 0.000000e+00 : f32
      %197 = vector.broadcast %cst_103 : f32 to vector<8x70xf32>
      %198 = arith.maximumf %196, %197 : vector<8x70xf32>
      %c0_104 = arith.constant 0 : index
      %c0_105 = arith.constant 0 : index
      %199 = vector.load %arg5[%c0_104, %c0_105] : memref<70x35xf32, #tpu.memory_space<vmem>>, vector<70x35xf32>
      %cst_106 = arith.constant dense<0.000000e+00> : vector<8x35xf32>
      %200 = tpu.matmul %198, %199, %cst_106 {dimension_numbers = #tpu.dot_dimension_numbers<[1], [0], [0], [1], [0, 0, 1, 1], [], []>} : vector<8x70xf32>, vector<70x35xf32>, vector<8x35xf32> -> vector<8x35xf32>
      %c0_107 = arith.constant 0 : index
      %c0_108 = arith.constant 0 : index
      %201 = vector.load %arg6[%c0_107, %c0_108] : memref<70x35xf32, #tpu.memory_space<vmem>>, vector<70x35xf32>
      %cst_109 = arith.constant dense<0.000000e+00> : vector<8x35xf32>
      %202 = tpu.matmul %198, %201, %cst_109 {dimension_numbers = #tpu.dot_dimension_numbers<[1], [0], [0], [1], [0, 0, 1, 1], [], []>} : vector<8x70xf32>, vector<70x35xf32>, vector<8x35xf32> -> vector<8x35xf32>
      %203 = arith.maximumf %200, %202 : vector<8x35xf32>
      %204 = vector.extract_strided_slice %203 {offsets = [0, 0], sizes = [8, 32], strides = [1, 1]} : vector<8x35xf32> to vector<8x32xf32>
      %205 = vector.extract_strided_slice %203 {offsets = [0, 1], sizes = [8, 32], strides = [1, 1]} : vector<8x35xf32> to vector<8x32xf32>
      %206 = vector.extract_strided_slice %203 {offsets = [0, 2], sizes = [8, 32], strides = [1, 1]} : vector<8x35xf32> to vector<8x32xf32>
      %207 = vector.extract_strided_slice %203 {offsets = [0, 3], sizes = [8, 32], strides = [1, 1]} : vector<8x35xf32> to vector<8x32xf32>
      %208 = tpu.concatenate %204, %205, %206, %207 in 0 : vector<8x32xf32>, vector<8x32xf32>, vector<8x32xf32>, vector<8x32xf32> -> vector<32x32xf32>
      %c0_110 = arith.constant 0 : index
      %c0_111 = arith.constant 0 : index
      %209 = vector.load %arg7[%c0_110, %c0_111] : memref<8x32xf32, #tpu.memory_space<vmem>>, vector<8x32xf32>
      %cst_112 = arith.constant dense<0.000000e+00> : vector<8x32xf32>
      %210 = tpu.matmul %209, %208, %cst_112 {dimension_numbers = #tpu.dot_dimension_numbers<[1], [0], [0], [1], [0, 0, 1, 1], [], []>} : vector<8x32xf32>, vector<32x32xf32>, vector<8x32xf32> -> vector<8x32xf32>
      %c0_113 = arith.constant 0 : index
      %c0_114 = arith.constant 0 : index
      %211 = vector.load %arg8[%c0_113, %c0_114] : memref<8x1xf32, #tpu.memory_space<vmem>>, vector<8x1xf32>
      %212 = vector.broadcast %211 : vector<8x1xf32> to vector<8x32xf32>
      %213 = arith.addf %210, %212 : vector<8x32xf32>
      %c0_115 = arith.constant 0 : index
      %c0_116 = arith.constant 0 : index
      %214 = vector.load %arg9[%c0_115, %c0_116] : memref<32x32xf32, #tpu.memory_space<vmem>>, vector<32x32xf32>
      %cst_117 = arith.constant dense<0.000000e+00> : vector<8x32xf32>
      %215 = tpu.matmul %213, %214, %cst_117 {dimension_numbers = #tpu.dot_dimension_numbers<[1], [0], [0], [1], [0, 0, 1, 1], [], []>} : vector<8x32xf32>, vector<32x32xf32>, vector<8x32xf32> -> vector<8x32xf32>
      %cst_118 = arith.constant 0.000000e+00 : f32
      %216 = vector.broadcast %cst_118 : f32 to vector<8x32xf32>
      %217 = arith.maximumf %215, %216 : vector<8x32xf32>
      %c0_119 = arith.constant 0 : index
      %c0_120 = arith.constant 0 : index
      %218 = vector.load %arg10[%c0_119, %c0_120] : memref<8x8xf32, #tpu.memory_space<vmem>>, vector<8x8xf32>
      %cst_121 = arith.constant dense<0.000000e+00> : vector<8x32xf32>
      %219 = tpu.matmul %218, %217, %cst_121 {dimension_numbers = #tpu.dot_dimension_numbers<[1], [0], [0], [1], [0, 0, 1, 1], [], []>} : vector<8x8xf32>, vector<8x32xf32>, vector<8x32xf32> -> vector<8x32xf32>
      %c0_122 = arith.constant 0 : index
      %c0_123 = arith.constant 0 : index
      %220 = vector.load %arg33[%c0_122, %c0_123] : memref<8x32xf32, #tpu.memory_space<vmem>>, vector<8x32xf32>
      tpu.vector_store %arg33[%c0_122, %c0_123], %219 {strides = array<i32>} : memref<8x32xf32, #tpu.memory_space<vmem>>, vector<8x32xf32>,
      %221 = vector.extract_strided_slice %219 {offsets = [0, 0], sizes = [8, 1], strides = [1, 1]} : vector<8x32xf32> to vector<8x1xf32>
      %cst_124 = arith.constant 0.000000e+00 : f32
      %222 = vector.broadcast %cst_124 : f32 to vector<8x1xf32>
      %223 = arith.cmpf oeq, %221, %222 : vector<8x1xf32>
      %224 = arith.extui %223 : vector<8x1xi1> to vector<8x1xi32>
      %225 = arith.sitofp %224 : vector<8x1xi32> to vector<8x1xf32>
      %cst_125 = arith.constant 1.000000e+00 : f32
      %226 = vector.broadcast %cst_125 : f32 to vector<8x1xf32>
      "tpu.trace_start"() <{level = 10 : i32, message = "qi,ki->qk"}> : () -> ()
      %cst_126 = arith.constant dense<0.000000e+00> : vector<8x8xf32>
      %227 = tpu.matmul %226, %225, %cst_126 {dimension_numbers = #tpu.dot_dimension_numbers<[1], [1], [0], [0], [0, 0, 1, 0], [], []>} : vector<8x1xf32>, vector<8x1xf32>, vector<8x8xf32> -> vector<8x8xf32>
      "tpu.trace_stop"() : () -> ()
      %c0_127 = arith.constant 0 : index
      %c0_128 = arith.constant 0 : index
      %228 = vector.load %arg34[%c0_127, %c0_128] : memref<8x8xf32, #tpu.memory_space<vmem>>, vector<8x8xf32>
      tpu.vector_store %arg34[%c0_127, %c0_128], %227 {strides = array<i32>} : memref<8x8xf32, #tpu.memory_space<vmem>>, vector<8x8xf32>,
    } else {
    }
    %c0 = arith.constant 0 : index
    %c0_1 = arith.constant 0 : index
    %3 = vector.load %arg33[%c0, %c0_1] : memref<8x32xf32, #tpu.memory_space<vmem>>, vector<8x32xf32>
    %c0_2 = arith.constant 0 : index
    %c0_3 = arith.constant 0 : index
    %4 = vector.load %arg34[%c0_2, %c0_3] : memref<8x8xf32, #tpu.memory_space<vmem>>, vector<8x8xf32>
    %c0_4 = arith.constant 0 : index
    %c0_5 = arith.constant 0 : index
    %5 = vector.load %arg11[%c0_4, %c0_5] : memref<4x32xf32, #tpu.memory_space<vmem>>, vector<4x32xf32>
    %c0_6 = arith.constant 0 : index
    %c0_7 = arith.constant 0 : index
    %c0_8 = arith.constant 0 : index
    %6 = vector.load %arg12[%c0_6, %c0_7, %c0_8] : memref<1x1x32xf32, #tpu.memory_space<vmem>>, vector<1x1x32xf32>
    %7 = vector.shape_cast %6 : vector<1x1x32xf32> to vector<1x32xf32>
    %c0_9 = arith.constant 0 : index
    %c0_10 = arith.constant 0 : index
    %c0_11 = arith.constant 0 : index
    %8 = vector.load %arg13[%c0_9, %c0_10, %c0_11] : memref<1x1x32xf32, #tpu.memory_space<vmem>>, vector<1x1x32xf32>
    %9 = vector.shape_cast %8 : vector<1x1x32xf32> to vector<1x32xf32>
    %cst = arith.constant dense<0.000000e+00> : vector<8xf32>
    %10 = vector.multi_reduction <add>, %3, %cst [1] : vector<8x32xf32> to vector<8xf32>
    %11 = vector.shape_cast %10 : vector<8xf32> to vector<8x1xf32>
    %cst_12 = arith.constant 3.200000e+01 : f32
    %12 = vector.broadcast %cst_12 : f32 to vector<8x1xf32>
    %13 = arith.divf %11, %12 : vector<8x1xf32>
    %14 = vector.broadcast %13 : vector<8x1xf32> to vector<8x32xf32>
    %15 = arith.subf %3, %14 : vector<8x32xf32>
    %16 = arith.mulf %15, %15 : vector<8x32xf32>
    %cst_13 = arith.constant dense<0.000000e+00> : vector<8xf32>
    %17 = vector.multi_reduction <add>, %16, %cst_13 [1] : vector<8x32xf32> to vector<8xf32>
    %18 = vector.shape_cast %17 : vector<8xf32> to vector<8x1xf32>
    %cst_14 = arith.constant 3.200000e+01 : f32
    %19 = vector.broadcast %cst_14 : f32 to vector<8x1xf32>
    %20 = arith.divf %18, %19 : vector<8x1xf32>
    %cst_15 = arith.constant 9.99999974E-6 : f32
    %21 = vector.broadcast %cst_15 : f32 to vector<8x1xf32>
    %22 = arith.addf %20, %21 : vector<8x1xf32>
    %23 = math.rsqrt %22 : vector<8x1xf32>
    %24 = vector.broadcast %23 : vector<8x1xf32> to vector<8x32xf32>
    %25 = arith.mulf %15, %24 : vector<8x32xf32>
    %26 = vector.broadcast %7 : vector<1x32xf32> to vector<8x32xf32>
    %27 = arith.mulf %25, %26 : vector<8x32xf32>
    %28 = vector.broadcast %9 : vector<1x32xf32> to vector<8x32xf32>
    %29 = arith.addf %27, %28 : vector<8x32xf32>
    %c0_16 = arith.constant 0 : index
    %c0_17 = arith.constant 0 : index
    %c0_18 = arith.constant 0 : index
    %30 = vector.load %arg14[%c0_16, %c0_17, %c0_18] : memref<1x32x32xf32, #tpu.memory_space<vmem>>, vector<1x32x32xf32>
    %31 = vector.shape_cast %30 : vector<1x32x32xf32> to vector<32x32xf32>
    %cst_19 = arith.constant dense<0.000000e+00> : vector<8x32xf32>
    %32 = tpu.matmul %29, %31, %cst_19 {dimension_numbers = #tpu.dot_dimension_numbers<[1], [0], [0], [1], [0, 0, 1, 1], [], []>} : vector<8x32xf32>, vector<32x32xf32>, vector<8x32xf32> -> vector<8x32xf32>
    %c0_20 = arith.constant 0 : index
    %c0_21 = arith.constant 0 : index
    %c0_22 = arith.constant 0 : index
    %33 = vector.load %arg15[%c0_20, %c0_21, %c0_22] : memref<1x1x32xf32, #tpu.memory_space<vmem>>, vector<1x1x32xf32>
    %34 = vector.shape_cast %33 : vector<1x1x32xf32> to vector<1x32xf32>
    %35 = vector.broadcast %34 : vector<1x32xf32> to vector<8x32xf32>
    %36 = arith.addf %32, %35 : vector<8x32xf32>
    %c0_23 = arith.constant 0 : index
    %c0_24 = arith.constant 0 : index
    %c0_25 = arith.constant 0 : index
    %37 = vector.load %arg16[%c0_23, %c0_24, %c0_25] : memref<1x32x32xf32, #tpu.memory_space<vmem>>, vector<1x32x32xf32>
    %38 = vector.shape_cast %37 : vector<1x32x32xf32> to vector<32x32xf32>
    %cst_26 = arith.constant dense<0.000000e+00> : vector<8x32xf32>
    %39 = tpu.matmul %29, %38, %cst_26 {dimension_numbers = #tpu.dot_dimension_numbers<[1], [0], [0], [1], [0, 0, 1, 1], [], []>} : vector<8x32xf32>, vector<32x32xf32>, vector<8x32xf32> -> vector<8x32xf32>
    %c0_27 = arith.constant 0 : index
    %c0_28 = arith.constant 0 : index
    %c0_29 = arith.constant 0 : index
    %40 = vector.load %arg17[%c0_27, %c0_28, %c0_29] : memref<1x1x32xf32, #tpu.memory_space<vmem>>, vector<1x1x32xf32>
    %41 = vector.shape_cast %40 : vector<1x1x32xf32> to vector<1x32xf32>
    %42 = vector.broadcast %41 : vector<1x32xf32> to vector<8x32xf32>
    %43 = arith.addf %39, %42 : vector<8x32xf32>
    %c0_30 = arith.constant 0 : index
    %c0_31 = arith.constant 0 : index
    %c0_32 = arith.constant 0 : index
    %44 = vector.load %arg18[%c0_30, %c0_31, %c0_32] : memref<1x32x32xf32, #tpu.memory_space<vmem>>, vector<1x32x32xf32>
    %45 = vector.shape_cast %44 : vector<1x32x32xf32> to vector<32x32xf32>
    %cst_33 = arith.constant dense<0.000000e+00> : vector<8x32xf32>
    %46 = tpu.matmul %29, %45, %cst_33 {dimension_numbers = #tpu.dot_dimension_numbers<[1], [0], [0], [1], [0, 0, 1, 1], [], []>} : vector<8x32xf32>, vector<32x32xf32>, vector<8x32xf32> -> vector<8x32xf32>
    %c0_34 = arith.constant 0 : index
    %c0_35 = arith.constant 0 : index
    %c0_36 = arith.constant 0 : index
    %47 = vector.load %arg19[%c0_34, %c0_35, %c0_36] : memref<1x1x32xf32, #tpu.memory_space<vmem>>, vector<1x1x32xf32>
    %48 = vector.shape_cast %47 : vector<1x1x32xf32> to vector<1x32xf32>
    %49 = vector.broadcast %48 : vector<1x32xf32> to vector<8x32xf32>
    %50 = arith.addf %46, %49 : vector<8x32xf32>
    %cst_37 = arith.constant 0.000000e+00 : f32
    %51 = vector.broadcast %cst_37 : f32 to vector<8x32xf32>
    %52 = vector.extract_strided_slice %5 {offsets = [0, 0], sizes = [1, 32], strides = [1, 1]} : vector<4x32xf32> to vector<1x32xf32>
    %53 = vector.broadcast %52 : vector<1x32xf32> to vector<8x32xf32>
    %54 = arith.mulf %36, %53 : vector<8x32xf32>
    "tpu.trace_start"() <{level = 10 : i32, message = "qe,ke->qk"}> : () -> ()
    %cst_38 = arith.constant dense<0.000000e+00> : vector<8x8xf32>
    %55 = tpu.matmul %54, %43, %cst_38 {dimension_numbers = #tpu.dot_dimension_numbers<[1], [1], [0], [0], [0, 0, 1, 0], [], []>} : vector<8x32xf32>, vector<8x32xf32>, vector<8x8xf32> -> vector<8x8xf32>
    "tpu.trace_stop"() : () -> ()
    %cst_39 = arith.constant 0.353553385 : f32
    %56 = vector.broadcast %cst_39 : f32 to vector<8x8xf32>
    %57 = arith.mulf %55, %56 : vector<8x8xf32>
    %cst_40 = arith.constant 5.000000e-01 : f32
    %58 = vector.broadcast %cst_40 : f32 to vector<8x8xf32>
    %59 = arith.cmpf ogt, %4, %58 : vector<8x8xf32>
    %cst_41 = arith.constant -1.000000e+10 : f32
    %60 = vector.broadcast %cst_41 : f32 to vector<8x8xf32>
    %61 = arith.select %59, %60, %57 : vector<8x8xi1>, vector<8x8xf32>
    %cst_42 = arith.constant dense<0xFF800000> : vector<8xf32>
    %62 = vector.multi_reduction <maximumf>, %61, %cst_42 [1] : vector<8x8xf32> to vector<8xf32>
    %63 = vector.shape_cast %62 : vector<8xf32> to vector<8x1xf32>
    %64 = vector.broadcast %63 : vector<8x1xf32> to vector<8x8xf32>
    %65 = arith.subf %61, %64 : vector<8x8xf32>
    %66 = math.exp %65 : vector<8x8xf32>
    %cst_43 = arith.constant dense<0.000000e+00> : vector<8xf32>
    %67 = vector.multi_reduction <add>, %66, %cst_43 [1] : vector<8x8xf32> to vector<8xf32>
    %68 = vector.shape_cast %67 : vector<8xf32> to vector<8x1xf32>
    %69 = vector.broadcast %68 : vector<8x1xf32> to vector<8x8xf32>
    %70 = arith.divf %66, %69 : vector<8x8xf32>
    %71 = vector.broadcast %52 : vector<1x32xf32> to vector<8x32xf32>
    %72 = arith.mulf %50, %71 : vector<8x32xf32>
    %cst_44 = arith.constant dense<0.000000e+00> : vector<8x32xf32>
    %73 = tpu.matmul %70, %72, %cst_44 {dimension_numbers = #tpu.dot_dimension_numbers<[1], [0], [0], [1], [0, 0, 1, 1], [], []>} : vector<8x8xf32>, vector<8x32xf32>, vector<8x32xf32> -> vector<8x32xf32>
    %74 = arith.addf %51, %73 : vector<8x32xf32>
    %75 = vector.extract_strided_slice %5 {offsets = [1, 0], sizes = [1, 32], strides = [1, 1]} : vector<4x32xf32> to vector<1x32xf32>
    %76 = vector.broadcast %75 : vector<1x32xf32> to vector<8x32xf32>
    %77 = arith.mulf %36, %76 : vector<8x32xf32>
    "tpu.trace_start"() <{level = 10 : i32, message = "qe,ke->qk"}> : () -> ()
    %cst_45 = arith.constant dense<0.000000e+00> : vector<8x8xf32>
    %78 = tpu.matmul %77, %43, %cst_45 {dimension_numbers = #tpu.dot_dimension_numbers<[1], [1], [0], [0], [0, 0, 1, 0], [], []>} : vector<8x32xf32>, vector<8x32xf32>, vector<8x8xf32> -> vector<8x8xf32>
    "tpu.trace_stop"() : () -> ()
    %cst_46 = arith.constant 0.353553385 : f32
    %79 = vector.broadcast %cst_46 : f32 to vector<8x8xf32>
    %80 = arith.mulf %78, %79 : vector<8x8xf32>
    %cst_47 = arith.constant 5.000000e-01 : f32
    %81 = vector.broadcast %cst_47 : f32 to vector<8x8xf32>
    %82 = arith.cmpf ogt, %4, %81 : vector<8x8xf32>
    %cst_48 = arith.constant -1.000000e+10 : f32
    %83 = vector.broadcast %cst_48 : f32 to vector<8x8xf32>
    %84 = arith.select %82, %83, %80 : vector<8x8xi1>, vector<8x8xf32>
    %cst_49 = arith.constant dense<0xFF800000> : vector<8xf32>
    %85 = vector.multi_reduction <maximumf>, %84, %cst_49 [1] : vector<8x8xf32> to vector<8xf32>
    %86 = vector.shape_cast %85 : vector<8xf32> to vector<8x1xf32>
    %87 = vector.broadcast %86 : vector<8x1xf32> to vector<8x8xf32>
    %88 = arith.subf %84, %87 : vector<8x8xf32>
    %89 = math.exp %88 : vector<8x8xf32>
    %cst_50 = arith.constant dense<0.000000e+00> : vector<8xf32>
    %90 = vector.multi_reduction <add>, %89, %cst_50 [1] : vector<8x8xf32> to vector<8xf32>
    %91 = vector.shape_cast %90 : vector<8xf32> to vector<8x1xf32>
    %92 = vector.broadcast %91 : vector<8x1xf32> to vector<8x8xf32>
    %93 = arith.divf %89, %92 : vector<8x8xf32>
    %94 = vector.broadcast %75 : vector<1x32xf32> to vector<8x32xf32>
    %95 = arith.mulf %50, %94 : vector<8x32xf32>
    %cst_51 = arith.constant dense<0.000000e+00> : vector<8x32xf32>
    %96 = tpu.matmul %93, %95, %cst_51 {dimension_numbers = #tpu.dot_dimension_numbers<[1], [0], [0], [1], [0, 0, 1, 1], [], []>} : vector<8x8xf32>, vector<8x32xf32>, vector<8x32xf32> -> vector<8x32xf32>
    %97 = arith.addf %74, %96 : vector<8x32xf32>
    %98 = vector.extract_strided_slice %5 {offsets = [2, 0], sizes = [1, 32], strides = [1, 1]} : vector<4x32xf32> to vector<1x32xf32>
    %99 = vector.broadcast %98 : vector<1x32xf32> to vector<8x32xf32>
    %100 = arith.mulf %36, %99 : vector<8x32xf32>
    "tpu.trace_start"() <{level = 10 : i32, message = "qe,ke->qk"}> : () -> ()
    %cst_52 = arith.constant dense<0.000000e+00> : vector<8x8xf32>
    %101 = tpu.matmul %100, %43, %cst_52 {dimension_numbers = #tpu.dot_dimension_numbers<[1], [1], [0], [0], [0, 0, 1, 0], [], []>} : vector<8x32xf32>, vector<8x32xf32>, vector<8x8xf32> -> vector<8x8xf32>
    "tpu.trace_stop"() : () -> ()
    %cst_53 = arith.constant 0.353553385 : f32
    %102 = vector.broadcast %cst_53 : f32 to vector<8x8xf32>
    %103 = arith.mulf %101, %102 : vector<8x8xf32>
    %cst_54 = arith.constant 5.000000e-01 : f32
    %104 = vector.broadcast %cst_54 : f32 to vector<8x8xf32>
    %105 = arith.cmpf ogt, %4, %104 : vector<8x8xf32>
    %cst_55 = arith.constant -1.000000e+10 : f32
    %106 = vector.broadcast %cst_55 : f32 to vector<8x8xf32>
    %107 = arith.select %105, %106, %103 : vector<8x8xi1>, vector<8x8xf32>
    %cst_56 = arith.constant dense<0xFF800000> : vector<8xf32>
    %108 = vector.multi_reduction <maximumf>, %107, %cst_56 [1] : vector<8x8xf32> to vector<8xf32>
    %109 = vector.shape_cast %108 : vector<8xf32> to vector<8x1xf32>
    %110 = vector.broadcast %109 : vector<8x1xf32> to vector<8x8xf32>
    %111 = arith.subf %107, %110 : vector<8x8xf32>
    %112 = math.exp %111 : vector<8x8xf32>
    %cst_57 = arith.constant dense<0.000000e+00> : vector<8xf32>
    %113 = vector.multi_reduction <add>, %112, %cst_57 [1] : vector<8x8xf32> to vector<8xf32>
    %114 = vector.shape_cast %113 : vector<8xf32> to vector<8x1xf32>
    %115 = vector.broadcast %114 : vector<8x1xf32> to vector<8x8xf32>
    %116 = arith.divf %112, %115 : vector<8x8xf32>
    %117 = vector.broadcast %98 : vector<1x32xf32> to vector<8x32xf32>
    %118 = arith.mulf %50, %117 : vector<8x32xf32>
    %cst_58 = arith.constant dense<0.000000e+00> : vector<8x32xf32>
    %119 = tpu.matmul %116, %118, %cst_58 {dimension_numbers = #tpu.dot_dimension_numbers<[1], [0], [0], [1], [0, 0, 1, 1], [], []>} : vector<8x8xf32>, vector<8x32xf32>, vector<8x32xf32> -> vector<8x32xf32>
    %120 = arith.addf %97, %119 : vector<8x32xf32>
    %121 = vector.extract_strided_slice %5 {offsets = [3, 0], sizes = [1, 32], strides = [1, 1]} : vector<4x32xf32> to vector<1x32xf32>
    %122 = vector.broadcast %121 : vector<1x32xf32> to vector<8x32xf32>
    %123 = arith.mulf %36, %122 : vector<8x32xf32>
    "tpu.trace_start"() <{level = 10 : i32, message = "qe,ke->qk"}> : () -> ()
    %cst_59 = arith.constant dense<0.000000e+00> : vector<8x8xf32>
    %124 = tpu.matmul %123, %43, %cst_59 {dimension_numbers = #tpu.dot_dimension_numbers<[1], [1], [0], [0], [0, 0, 1, 0], [], []>} : vector<8x32xf32>, vector<8x32xf32>, vector<8x8xf32> -> vector<8x8xf32>
    "tpu.trace_stop"() : () -> ()
    %cst_60 = arith.constant 0.353553385 : f32
    %125 = vector.broadcast %cst_60 : f32 to vector<8x8xf32>
    %126 = arith.mulf %124, %125 : vector<8x8xf32>
    %cst_61 = arith.constant 5.000000e-01 : f32
    %127 = vector.broadcast %cst_61 : f32 to vector<8x8xf32>
    %128 = arith.cmpf ogt, %4, %127 : vector<8x8xf32>
    %cst_62 = arith.constant -1.000000e+10 : f32
    %129 = vector.broadcast %cst_62 : f32 to vector<8x8xf32>
    %130 = arith.select %128, %129, %126 : vector<8x8xi1>, vector<8x8xf32>
    %cst_63 = arith.constant dense<0xFF800000> : vector<8xf32>
    %131 = vector.multi_reduction <maximumf>, %130, %cst_63 [1] : vector<8x8xf32> to vector<8xf32>
    %132 = vector.shape_cast %131 : vector<8xf32> to vector<8x1xf32>
    %133 = vector.broadcast %132 : vector<8x1xf32> to vector<8x8xf32>
    %134 = arith.subf %130, %133 : vector<8x8xf32>
    %135 = math.exp %134 : vector<8x8xf32>
    %cst_64 = arith.constant dense<0.000000e+00> : vector<8xf32>
    %136 = vector.multi_reduction <add>, %135, %cst_64 [1] : vector<8x8xf32> to vector<8xf32>
    %137 = vector.shape_cast %136 : vector<8xf32> to vector<8x1xf32>
    %138 = vector.broadcast %137 : vector<8x1xf32> to vector<8x8xf32>
    %139 = arith.divf %135, %138 : vector<8x8xf32>
    %140 = vector.broadcast %121 : vector<1x32xf32> to vector<8x32xf32>
    %141 = arith.mulf %50, %140 : vector<8x32xf32>
    %cst_65 = arith.constant dense<0.000000e+00> : vector<8x32xf32>
    %142 = tpu.matmul %139, %141, %cst_65 {dimension_numbers = #tpu.dot_dimension_numbers<[1], [0], [0], [1], [0, 0, 1, 1], [], []>} : vector<8x8xf32>, vector<8x32xf32>, vector<8x32xf32> -> vector<8x32xf32>
    %143 = arith.addf %120, %142 : vector<8x32xf32>
    %144 = arith.addf %3, %143 : vector<8x32xf32>
    %c0_66 = arith.constant 0 : index
    %c0_67 = arith.constant 0 : index
    %c0_68 = arith.constant 0 : index
    %145 = vector.load %arg20[%c0_66, %c0_67, %c0_68] : memref<1x1x32xf32, #tpu.memory_space<vmem>>, vector<1x1x32xf32>
    %146 = vector.shape_cast %145 : vector<1x1x32xf32> to vector<1x32xf32>
    %c0_69 = arith.constant 0 : index
    %c0_70 = arith.constant 0 : index
    %c0_71 = arith.constant 0 : index
    %147 = vector.load %arg21[%c0_69, %c0_70, %c0_71] : memref<1x1x32xf32, #tpu.memory_space<vmem>>, vector<1x1x32xf32>
    %148 = vector.shape_cast %147 : vector<1x1x32xf32> to vector<1x32xf32>
    %cst_72 = arith.constant dense<0.000000e+00> : vector<8xf32>
    %149 = vector.multi_reduction <add>, %144, %cst_72 [1] : vector<8x32xf32> to vector<8xf32>
    %150 = vector.shape_cast %149 : vector<8xf32> to vector<8x1xf32>
    %cst_73 = arith.constant 3.200000e+01 : f32
    %151 = vector.broadcast %cst_73 : f32 to vector<8x1xf32>
    %152 = arith.divf %150, %151 : vector<8x1xf32>
    %153 = vector.broadcast %152 : vector<8x1xf32> to vector<8x32xf32>
    %154 = arith.subf %144, %153 : vector<8x32xf32>
    %155 = arith.mulf %154, %154 : vector<8x32xf32>
    %cst_74 = arith.constant dense<0.000000e+00> : vector<8xf32>
    %156 = vector.multi_reduction <add>, %155, %cst_74 [1] : vector<8x32xf32> to vector<8xf32>
    %157 = vector.shape_cast %156 : vector<8xf32> to vector<8x1xf32>
    %cst_75 = arith.constant 3.200000e+01 : f32
    %158 = vector.broadcast %cst_75 : f32 to vector<8x1xf32>
    %159 = arith.divf %157, %158 : vector<8x1xf32>
    %cst_76 = arith.constant 9.99999974E-6 : f32
    %160 = vector.broadcast %cst_76 : f32 to vector<8x1xf32>
    %161 = arith.addf %159, %160 : vector<8x1xf32>
    %162 = math.rsqrt %161 : vector<8x1xf32>
    %163 = vector.broadcast %162 : vector<8x1xf32> to vector<8x32xf32>
    %164 = arith.mulf %154, %163 : vector<8x32xf32>
    %165 = vector.broadcast %146 : vector<1x32xf32> to vector<8x32xf32>
    %166 = arith.mulf %164, %165 : vector<8x32xf32>
    %167 = vector.broadcast %148 : vector<1x32xf32> to vector<8x32xf32>
    %168 = arith.addf %166, %167 : vector<8x32xf32>
    %c0_77 = arith.constant 0 : index
    %c0_78 = arith.constant 0 : index
    %c0_79 = arith.constant 0 : index
    %169 = vector.load %arg22[%c0_77, %c0_78, %c0_79] : memref<1x32x64xf32, #tpu.memory_space<vmem>>, vector<1x32x64xf32>
    %170 = vector.shape_cast %169 : vector<1x32x64xf32> to vector<32x64xf32>
    %cst_80 = arith.constant dense<0.000000e+00> : vector<8x64xf32>
    %171 = tpu.matmul %168, %170, %cst_80 {dimension_numbers = #tpu.dot_dimension_numbers<[1], [0], [0], [1], [0, 0, 1, 1], [], []>} : vector<8x32xf32>, vector<32x64xf32>, vector<8x64xf32> -> vector<8x64xf32>
    %c0_81 = arith.constant 0 : index
    %c0_82 = arith.constant 0 : index
    %c0_83 = arith.constant 0 : index
    %172 = vector.load %arg23[%c0_81, %c0_82, %c0_83] : memref<1x1x64xf32, #tpu.memory_space<vmem>>, vector<1x1x64xf32>
    %173 = vector.shape_cast %172 : vector<1x1x64xf32> to vector<1x64xf32>
    %174 = vector.broadcast %173 : vector<1x64xf32> to vector<8x64xf32>
    %175 = arith.addf %171, %174 : vector<8x64xf32>
    %cst_84 = arith.constant 0.000000e+00 : f32
    %176 = vector.broadcast %cst_84 : f32 to vector<8x64xf32>
    %177 = arith.maximumf %175, %176 : vector<8x64xf32>
    %c0_85 = arith.constant 0 : index
    %c0_86 = arith.constant 0 : index
    %c0_87 = arith.constant 0 : index
    %178 = vector.load %arg24[%c0_85, %c0_86, %c0_87] : memref<1x64x32xf32, #tpu.memory_space<vmem>>, vector<1x64x32xf32>
    %179 = vector.shape_cast %178 : vector<1x64x32xf32> to vector<64x32xf32>
    %cst_88 = arith.constant dense<0.000000e+00> : vector<8x32xf32>
    %180 = tpu.matmul %177, %179, %cst_88 {dimension_numbers = #tpu.dot_dimension_numbers<[1], [0], [0], [1], [0, 0, 1, 1], [], []>} : vector<8x64xf32>, vector<64x32xf32>, vector<8x32xf32> -> vector<8x32xf32>
    %c0_89 = arith.constant 0 : index
    %c0_90 = arith.constant 0 : index
    %c0_91 = arith.constant 0 : index
    %181 = vector.load %arg25[%c0_89, %c0_90, %c0_91] : memref<1x1x32xf32, #tpu.memory_space<vmem>>, vector<1x1x32xf32>
    %182 = vector.shape_cast %181 : vector<1x1x32xf32> to vector<1x32xf32>
    %183 = vector.broadcast %182 : vector<1x32xf32> to vector<8x32xf32>
    %184 = arith.addf %180, %183 : vector<8x32xf32>
    %185 = arith.addf %144, %184 : vector<8x32xf32>
    %c0_92 = arith.constant 0 : index
    %c0_93 = arith.constant 0 : index
    %186 = vector.load %arg33[%c0_92, %c0_93] : memref<8x32xf32, #tpu.memory_space<vmem>>, vector<8x32xf32>
    tpu.vector_store %arg33[%c0_92, %c0_93], %185 {strides = array<i32>} : memref<8x32xf32, #tpu.memory_space<vmem>>, vector<8x32xf32>,
    %c1_i32 = arith.constant 1 : i32
    %187 = arith.cmpi eq, %arg1, %c1_i32 : i32
    %188 = arith.extui %187 : i1 to i32
    %c0_i32_94 = arith.constant 0 : i32
    %189 = arith.cmpi ne, %188, %c0_i32_94 : i32
    scf.if %189 {
      %c0_95 = arith.constant 0 : index
      %c0_96 = arith.constant 0 : index
      %190 = vector.load %arg33[%c0_95, %c0_96] : memref<8x32xf32, #tpu.memory_space<vmem>>, vector<8x32xf32>
      %191 = vector.extract_strided_slice %190 {offsets = [0, 0], sizes = [8, 22], strides = [1, 1]} : vector<8x32xf32> to vector<8x22xf32>
      %192 = vector.extract_strided_slice %190 {offsets = [0, 1], sizes = [8, 22], strides = [1, 1]} : vector<8x32xf32> to vector<8x22xf32>
      %193 = vector.extract_strided_slice %190 {offsets = [0, 2], sizes = [8, 22], strides = [1, 1]} : vector<8x32xf32> to vector<8x22xf32>
      %194 = vector.extract_strided_slice %190 {offsets = [0, 3], sizes = [8, 22], strides = [1, 1]} : vector<8x32xf32> to vector<8x22xf32>
      %195 = vector.extract_strided_slice %190 {offsets = [0, 4], sizes = [8, 22], strides = [1, 1]} : vector<8x32xf32> to vector<8x22xf32>
      %196 = vector.extract_strided_slice %190 {offsets = [0, 5], sizes = [8, 22], strides = [1, 1]} : vector<8x32xf32> to vector<8x22xf32>
      %197 = vector.extract_strided_slice %190 {offsets = [0, 6], sizes = [8, 22], strides = [1, 1]} : vector<8x32xf32> to vector<8x22xf32>
      %198 = vector.extract_strided_slice %190 {offsets = [0, 7], sizes = [8, 22], strides = [1, 1]} : vector<8x32xf32> to vector<8x22xf32>
      %199 = vector.extract_strided_slice %190 {offsets = [0, 8], sizes = [8, 22], strides = [1, 1]} : vector<8x32xf32> to vector<8x22xf32>
      %200 = vector.extract_strided_slice %190 {offsets = [0, 9], sizes = [8, 22], strides = [1, 1]} : vector<8x32xf32> to vector<8x22xf32>
      %201 = vector.extract_strided_slice %190 {offsets = [0, 10], sizes = [8, 22], strides = [1, 1]} : vector<8x32xf32> to vector<8x22xf32>
      %202 = tpu.concatenate %191, %192, %193, %194, %195, %196, %197, %198, %199, %200, %201 in 0 : vector<8x22xf32>, vector<8x22xf32>, vector<8x22xf32>, vector<8x22xf32>, vector<8x22xf32>, vector<8x22xf32>, vector<8x22xf32>, vector<8x22xf32>, vector<8x22xf32>, vector<8x22xf32>, vector<8x22xf32> -> vector<88x22xf32>
      %c0_97 = arith.constant 0 : index
      %c0_98 = arith.constant 0 : index
      %203 = vector.load %arg26[%c0_97, %c0_98] : memref<8x88xf32, #tpu.memory_space<vmem>>, vector<8x88xf32>
      %cst_99 = arith.constant dense<0.000000e+00> : vector<8x22xf32>
      %204 = tpu.matmul %203, %202, %cst_99 {dimension_numbers = #tpu.dot_dimension_numbers<[1], [0], [0], [1], [0, 0, 1, 1], [], []>} : vector<8x88xf32>, vector<88x22xf32>, vector<8x22xf32> -> vector<8x22xf32>
      %c0_100 = arith.constant 0 : index
      %c0_101 = arith.constant 0 : index
      %205 = vector.load %arg27[%c0_100, %c0_101] : memref<8x1xf32, #tpu.memory_space<vmem>>, vector<8x1xf32>
      %206 = vector.broadcast %205 : vector<8x1xf32> to vector<8x22xf32>
      %207 = arith.addf %204, %206 : vector<8x22xf32>
      %cst_102 = arith.constant 0.000000e+00 : f32
      %208 = vector.broadcast %cst_102 : f32 to vector<8x22xf32>
      %209 = arith.maximumf %207, %208 : vector<8x22xf32>
      %c0_103 = arith.constant 0 : index
      %c0_104 = arith.constant 0 : index
      %210 = vector.load %arg28[%c0_103, %c0_104] : memref<22x11xf32, #tpu.memory_space<vmem>>, vector<22x11xf32>
      %cst_105 = arith.constant dense<0.000000e+00> : vector<8x11xf32>
      %211 = tpu.matmul %209, %210, %cst_105 {dimension_numbers = #tpu.dot_dimension_numbers<[1], [0], [0], [1], [0, 0, 1, 1], [], []>} : vector<8x22xf32>, vector<22x11xf32>, vector<8x11xf32> -> vector<8x11xf32>
      %c0_106 = arith.constant 0 : index
      %c0_107 = arith.constant 0 : index
      %212 = vector.load %arg29[%c0_106, %c0_107] : memref<22x11xf32, #tpu.memory_space<vmem>>, vector<22x11xf32>
      %cst_108 = arith.constant dense<0.000000e+00> : vector<8x11xf32>
      %213 = tpu.matmul %209, %212, %cst_108 {dimension_numbers = #tpu.dot_dimension_numbers<[1], [0], [0], [1], [0, 0, 1, 1], [], []>} : vector<8x22xf32>, vector<22x11xf32>, vector<8x11xf32> -> vector<8x11xf32>
      %214 = arith.maximumf %211, %213 : vector<8x11xf32>
      %215 = vector.extract_strided_slice %214 {offsets = [0, 0], sizes = [8, 1], strides = [1, 1]} : vector<8x11xf32> to vector<8x1xf32>
      %216 = vector.extract_strided_slice %214 {offsets = [0, 1], sizes = [8, 1], strides = [1, 1]} : vector<8x11xf32> to vector<8x1xf32>
      %217 = vector.extract_strided_slice %214 {offsets = [0, 2], sizes = [8, 1], strides = [1, 1]} : vector<8x11xf32> to vector<8x1xf32>
      %218 = vector.extract_strided_slice %214 {offsets = [0, 3], sizes = [8, 1], strides = [1, 1]} : vector<8x11xf32> to vector<8x1xf32>
      %219 = vector.extract_strided_slice %214 {offsets = [0, 4], sizes = [8, 1], strides = [1, 1]} : vector<8x11xf32> to vector<8x1xf32>
      %220 = vector.extract_strided_slice %214 {offsets = [0, 5], sizes = [8, 1], strides = [1, 1]} : vector<8x11xf32> to vector<8x1xf32>
      %221 = vector.extract_strided_slice %214 {offsets = [0, 6], sizes = [8, 1], strides = [1, 1]} : vector<8x11xf32> to vector<8x1xf32>
      %222 = vector.extract_strided_slice %214 {offsets = [0, 7], sizes = [8, 1], strides = [1, 1]} : vector<8x11xf32> to vector<8x1xf32>
      %223 = vector.extract_strided_slice %214 {offsets = [0, 8], sizes = [8, 1], strides = [1, 1]} : vector<8x11xf32> to vector<8x1xf32>
      %224 = vector.extract_strided_slice %214 {offsets = [0, 9], sizes = [8, 1], strides = [1, 1]} : vector<8x11xf32> to vector<8x1xf32>
      %225 = vector.extract_strided_slice %214 {offsets = [0, 10], sizes = [8, 1], strides = [1, 1]} : vector<8x11xf32> to vector<8x1xf32>
      %226 = tpu.concatenate %215, %216, %217, %218, %219, %220, %221, %222, %223, %224, %225 in 0 : vector<8x1xf32>, vector<8x1xf32>, vector<8x1xf32>, vector<8x1xf32>, vector<8x1xf32>, vector<8x1xf32>, vector<8x1xf32>, vector<8x1xf32>, vector<8x1xf32>, vector<8x1xf32>, vector<8x1xf32> -> vector<88x1xf32>
      %c0_109 = arith.constant 0 : index
      %c0_110 = arith.constant 0 : index
      %227 = vector.load %arg30[%c0_109, %c0_110] : memref<8x88xf32, #tpu.memory_space<vmem>>, vector<8x88xf32>
      %cst_111 = arith.constant dense<0.000000e+00> : vector<8x1xf32>
      %228 = tpu.matmul %227, %226, %cst_111 {dimension_numbers = #tpu.dot_dimension_numbers<[1], [0], [0], [1], [0, 0, 1, 1], [], []>} : vector<8x88xf32>, vector<88x1xf32>, vector<8x1xf32> -> vector<8x1xf32>
      %c0_112 = arith.constant 0 : index
      %c0_113 = arith.constant 0 : index
      %229 = vector.load %arg31[%c0_112, %c0_113] : memref<8x1xf32, #tpu.memory_space<vmem>>, vector<8x1xf32>
      %230 = arith.addf %228, %229 : vector<8x1xf32>
      %cst_114 = arith.constant 1.000000e+00 : f32
      %231 = vector.broadcast %cst_114 : f32 to vector<1x1xf32>
      "tpu.trace_start"() <{level = 10 : i32, message = "ab,mb->am"}> : () -> ()
      %cst_115 = arith.constant dense<0.000000e+00> : vector<1x8xf32>
      %232 = tpu.matmul %231, %230, %cst_115 {dimension_numbers = #tpu.dot_dimension_numbers<[1], [1], [0], [0], [0, 0, 1, 0], [], []>} : vector<1x1xf32>, vector<8x1xf32>, vector<1x8xf32> -> vector<1x8xf32>
      "tpu.trace_stop"() : () -> ()
      %c0_116 = arith.constant 0 : index
      %c0_117 = arith.constant 0 : index
      %c0_118 = arith.constant 0 : index
      %233 = vector.load %arg32[%c0_116, %c0_117, %c0_118] : memref<1x1x8xf32, #tpu.memory_space<vmem>>, vector<1x1x8xf32>
      %234 = vector.shape_cast %233 : vector<1x1x8xf32> to vector<1x8xf32>
      %235 = vector.shape_cast %232 : vector<1x8xf32> to vector<1x1x8xf32>
      tpu.vector_store %arg32[%c0_116, %c0_117, %c0_118], %235 {strides = array<i32>} : memref<1x1x8xf32, #tpu.memory_space<vmem>>, vector<1x1x8xf32>,
    } else {
    }
    return
  }
  func.func @transform_0(%arg0: i32, %arg1: i32) -> (i32, i32, i32) {
    %c0_i32 = arith.constant 0 : i32
    %c0_i32_0 = arith.constant 0 : i32
    %c0_i32_1 = arith.constant 0 : i32
    return %arg0, %c0_i32, %c0_i32_0 : i32, i32, i32
  }
  func.func @transform_1(%arg0: i32, %arg1: i32) -> (i32, i32) {
    %c0_i32 = arith.constant 0 : i32
    %c0_i32_0 = arith.constant 0 : i32
    %c0_i32_1 = arith.constant 0 : i32
    return %c0_i32, %c0_i32_0 : i32, i32
  }
  func.func @transform_2(%arg0: i32, %arg1: i32) -> (i32, i32) {
    %c0_i32 = arith.constant 0 : i32
    %c0_i32_0 = arith.constant 0 : i32
    %c0_i32_1 = arith.constant 0 : i32
    return %c0_i32, %c0_i32_0 : i32, i32
  }
  func.func @transform_3(%arg0: i32, %arg1: i32) -> (i32, i32) {
    %c0_i32 = arith.constant 0 : i32
    %c0_i32_0 = arith.constant 0 : i32
    %c0_i32_1 = arith.constant 0 : i32
    return %c0_i32, %c0_i32_0 : i32, i32
  }
  func.func @transform_4(%arg0: i32, %arg1: i32) -> (i32, i32) {
    %c0_i32 = arith.constant 0 : i32
    %c0_i32_0 = arith.constant 0 : i32
    %c0_i32_1 = arith.constant 0 : i32
    return %c0_i32, %c0_i32_0 : i32, i32
  }
  func.func @transform_5(%arg0: i32, %arg1: i32) -> (i32, i32) {
    %c0_i32 = arith.constant 0 : i32
    %c0_i32_0 = arith.constant 0 : i32
    %c0_i32_1 = arith.constant 0 : i32
    return %c0_i32, %c0_i32_0 : i32, i32
  }
  func.func @transform_6(%arg0: i32, %arg1: i32) -> (i32, i32) {
    %c0_i32 = arith.constant 0 : i32
    %c0_i32_0 = arith.constant 0 : i32
    %c0_i32_1 = arith.constant 0 : i32
    return %c0_i32, %c0_i32_0 : i32, i32
  }
  func.func @transform_7(%arg0: i32, %arg1: i32) -> (i32, i32) {
    %c0_i32 = arith.constant 0 : i32
    %c0_i32_0 = arith.constant 0 : i32
    %c0_i32_1 = arith.constant 0 : i32
    return %c0_i32, %c0_i32_0 : i32, i32
  }
  func.func @transform_8(%arg0: i32, %arg1: i32) -> (i32, i32) {
    %c0_i32 = arith.constant 0 : i32
    %c0_i32_0 = arith.constant 0 : i32
    %c0_i32_1 = arith.constant 0 : i32
    return %c0_i32, %c0_i32_0 : i32, i32
  }
  func.func @transform_9(%arg0: i32, %arg1: i32) -> (i32, i32) {
    %c0_i32 = arith.constant 0 : i32
    %c0_i32_0 = arith.constant 0 : i32
    %c0_i32_1 = arith.constant 0 : i32
    return %c0_i32, %c0_i32_0 : i32, i32
  }
  func.func @transform_10(%arg0: i32, %arg1: i32) -> (i32, i32, i32) {
    %c0_i32 = arith.constant 0 : i32
    %c0_i32_0 = arith.constant 0 : i32
    %c0_i32_1 = arith.constant 0 : i32
    return %arg1, %c0_i32, %c0_i32_0 : i32, i32, i32
  }
  func.func @transform_11(%arg0: i32, %arg1: i32) -> (i32, i32, i32) {
    %c0_i32 = arith.constant 0 : i32
    %c0_i32_0 = arith.constant 0 : i32
    %c0_i32_1 = arith.constant 0 : i32
    return %arg1, %c0_i32, %c0_i32_0 : i32, i32, i32
  }
  func.func @transform_12(%arg0: i32, %arg1: i32) -> (i32, i32, i32) {
    %c0_i32 = arith.constant 0 : i32
    %c0_i32_0 = arith.constant 0 : i32
    %c0_i32_1 = arith.constant 0 : i32
    return %arg1, %c0_i32, %c0_i32_0 : i32, i32, i32
  }
  func.func @transform_13(%arg0: i32, %arg1: i32) -> (i32, i32, i32) {
    %c0_i32 = arith.constant 0 : i32
    %c0_i32_0 = arith.constant 0 : i32
    %c0_i32_1 = arith.constant 0 : i32
    return %arg1, %c0_i32, %c0_i32_0 : i32, i32, i32
  }
  func.func @transform_14(%arg0: i32, %arg1: i32) -> (i32, i32, i32) {
    %c0_i32 = arith.constant 0 : i32
    %c0_i32_0 = arith.constant 0 : i32
    %c0_i32_1 = arith.constant 0 : i32
    return %arg1, %c0_i32, %c0_i32_0 : i32, i32, i32
  }
  func.func @transform_15(%arg0: i32, %arg1: i32) -> (i32, i32, i32) {
    %c0_i32 = arith.constant 0 : i32
    %c0_i32_0 = arith.constant 0 : i32
    %c0_i32_1 = arith.constant 0 : i32
    return %arg1, %c0_i32, %c0_i32_0 : i32, i32, i32
  }
  func.func @transform_16(%arg0: i32, %arg1: i32) -> (i32, i32, i32) {
    %c0_i32 = arith.constant 0 : i32
    %c0_i32_0 = arith.constant 0 : i32
    %c0_i32_1 = arith.constant 0 : i32
    return %arg1, %c0_i32, %c0_i32_0 : i32, i32, i32
  }
  func.func @transform_17(%arg0: i32, %arg1: i32) -> (i32, i32, i32) {
    %c0_i32 = arith.constant 0 : i32
    %c0_i32_0 = arith.constant 0 : i32
    %c0_i32_1 = arith.constant 0 : i32
    return %arg1, %c0_i32, %c0_i32_0 : i32, i32, i32
  }
  func.func @transform_18(%arg0: i32, %arg1: i32) -> (i32, i32, i32) {
    %c0_i32 = arith.constant 0 : i32
    %c0_i32_0 = arith.constant 0 : i32
    %c0_i32_1 = arith.constant 0 : i32
    return %arg1, %c0_i32, %c0_i32_0 : i32, i32, i32
  }
  func.func @transform_19(%arg0: i32, %arg1: i32) -> (i32, i32, i32) {
    %c0_i32 = arith.constant 0 : i32
    %c0_i32_0 = arith.constant 0 : i32
    %c0_i32_1 = arith.constant 0 : i32
    return %arg1, %c0_i32, %c0_i32_0 : i32, i32, i32
  }
  func.func @transform_20(%arg0: i32, %arg1: i32) -> (i32, i32, i32) {
    %c0_i32 = arith.constant 0 : i32
    %c0_i32_0 = arith.constant 0 : i32
    %c0_i32_1 = arith.constant 0 : i32
    return %arg1, %c0_i32, %c0_i32_0 : i32, i32, i32
  }
  func.func @transform_21(%arg0: i32, %arg1: i32) -> (i32, i32, i32) {
    %c0_i32 = arith.constant 0 : i32
    %c0_i32_0 = arith.constant 0 : i32
    %c0_i32_1 = arith.constant 0 : i32
    return %arg1, %c0_i32, %c0_i32_0 : i32, i32, i32
  }
  func.func @transform_22(%arg0: i32, %arg1: i32) -> (i32, i32, i32) {
    %c0_i32 = arith.constant 0 : i32
    %c0_i32_0 = arith.constant 0 : i32
    %c0_i32_1 = arith.constant 0 : i32
    return %arg1, %c0_i32, %c0_i32_0 : i32, i32, i32
  }
  func.func @transform_23(%arg0: i32, %arg1: i32) -> (i32, i32, i32) {
    %c0_i32 = arith.constant 0 : i32
    %c0_i32_0 = arith.constant 0 : i32
    %c0_i32_1 = arith.constant 0 : i32
    return %arg1, %c0_i32, %c0_i32_0 : i32, i32, i32
  }
  func.func @transform_24(%arg0: i32, %arg1: i32) -> (i32, i32) {
    %c0_i32 = arith.constant 0 : i32
    %c0_i32_0 = arith.constant 0 : i32
    %c0_i32_1 = arith.constant 0 : i32
    return %c0_i32, %c0_i32_0 : i32, i32
  }
  func.func @transform_25(%arg0: i32, %arg1: i32) -> (i32, i32) {
    %c0_i32 = arith.constant 0 : i32
    %c0_i32_0 = arith.constant 0 : i32
    %c0_i32_1 = arith.constant 0 : i32
    return %c0_i32, %c0_i32_0 : i32, i32
  }
  func.func @transform_26(%arg0: i32, %arg1: i32) -> (i32, i32) {
    %c0_i32 = arith.constant 0 : i32
    %c0_i32_0 = arith.constant 0 : i32
    %c0_i32_1 = arith.constant 0 : i32
    return %c0_i32, %c0_i32_0 : i32, i32
  }
  func.func @transform_27(%arg0: i32, %arg1: i32) -> (i32, i32) {
    %c0_i32 = arith.constant 0 : i32
    %c0_i32_0 = arith.constant 0 : i32
    %c0_i32_1 = arith.constant 0 : i32
    return %c0_i32, %c0_i32_0 : i32, i32
  }
  func.func @transform_28(%arg0: i32, %arg1: i32) -> (i32, i32) {
    %c0_i32 = arith.constant 0 : i32
    %c0_i32_0 = arith.constant 0 : i32
    %c0_i32_1 = arith.constant 0 : i32
    return %c0_i32, %c0_i32_0 : i32, i32
  }
  func.func @transform_29(%arg0: i32, %arg1: i32) -> (i32, i32) {
    %c0_i32 = arith.constant 0 : i32
    %c0_i32_0 = arith.constant 0 : i32
    %c0_i32_1 = arith.constant 0 : i32
    return %c0_i32, %c0_i32_0 : i32, i32
  }
  func.func @transform_30(%arg0: i32, %arg1: i32) -> (i32, i32, i32) {
    %c0_i32 = arith.constant 0 : i32
    %c0_i32_0 = arith.constant 0 : i32
    %c0_i32_1 = arith.constant 0 : i32
    return %arg0, %c0_i32, %c0_i32_0 : i32, i32, i32
  }
}

</mosaic_0001>

<llo_original>
// kernel: _lambda_.1
$region0: #{_lambda_.1}
  #allocation0 [shape = 'u32[]', space=smem, size = 0x4, offset = 0x4, fixed_abs, tag = 'smem constant byte address 0x4 - core index']
  #allocation1 [shape = 'u32[144,128]{1,0:T(1,128)}', space=vmem, size = 0x12000, scoped, tag = 'internal scratch']
  #allocation2 [shape = 'f32[8,32]{1,0:T(8,128)}', space=vmem, size = 0x1000, scoped, tag = 'scratch operand']
  #allocation3 [shape = 'f32[8,8]{1,0:T(8,128)}', space=vmem, size = 0x1000, scoped, tag = 'scratch operand']
  %s0 = inlined_call_operand.smem [shape: u32[31], index: -1, kind: input, shape index: {}]
  %s1 = sld [smem:[%s0]]
  %s2 = scalar_lea.smem %s0, 1
  %s3 = sld [smem:[%s2]]
  %s4 = scalar_lea.smem %s0, 2
  %s5 = sld [smem:[%s4]]
  %s6 = scalar_lea.smem %s0, 3
  %s7 = sld [smem:[%s6]]
  %s8 = scalar_lea.smem %s0, 4
  %s9 = sld [smem:[%s8]]
  %s10 = scalar_lea.smem %s0, 5
  %s11 = sld [smem:[%s10]]
  %s12 = scalar_lea.smem %s0, 6
  %s13 = sld [smem:[%s12]]
  %s14 = scalar_lea.smem %s0, 7
  %s15 = sld [smem:[%s14]]
  %s16 = scalar_lea.smem %s0, 8
  %s17 = sld [smem:[%s16]]
  %s18 = scalar_lea.smem %s0, 9
  %s19 = sld [smem:[%s18]]
  %s20 = scalar_lea.smem %s0, 10
  %s21 = sld [smem:[%s20]]
  %s22 = scalar_lea.smem %s0, 11
  %s23 = sld [smem:[%s22]]
  %s24 = scalar_lea.smem %s0, 12
  %s25 = sld [smem:[%s24]]
  %s26 = scalar_lea.smem %s0, 13
  %s27 = sld [smem:[%s26]]
  %s28 = scalar_lea.smem %s0, 14
  %s29 = sld [smem:[%s28]]
  %s30 = scalar_lea.smem %s0, 15
  %s31 = sld [smem:[%s30]]
  %s32 = scalar_lea.smem %s0, 16
  %s33 = sld [smem:[%s32]]
  %s34 = scalar_lea.smem %s0, 17
  %s35 = sld [smem:[%s34]]
  %s36 = scalar_lea.smem %s0, 18
  %s37 = sld [smem:[%s36]]
  %s38 = scalar_lea.smem %s0, 19
  %s39 = sld [smem:[%s38]]
  %s40 = scalar_lea.smem %s0, 20
  %s41 = sld [smem:[%s40]]
  %s42 = scalar_lea.smem %s0, 21
  %s43 = sld [smem:[%s42]]
  %s44 = scalar_lea.smem %s0, 22
  %s45 = sld [smem:[%s44]]
  %s46 = scalar_lea.smem %s0, 23
  %s47 = sld [smem:[%s46]]
  %s48 = scalar_lea.smem %s0, 24
  %s49 = sld [smem:[%s48]]
  %s50 = scalar_lea.smem %s0, 25
  %s51 = sld [smem:[%s50]]
  %s52 = scalar_lea.smem %s0, 26
  %s53 = sld [smem:[%s52]]
  %s54 = scalar_lea.smem %s0, 27
  %s55 = sld [smem:[%s54]]
  %s56 = scalar_lea.smem %s0, 28
  %s57 = sld [smem:[%s56]]
  %s58 = scalar_lea.smem %s0, 29
  %s59 = sld [smem:[%s58]]
  %s60 = scalar_lea.smem %s0, 30
  %s61 = sld [smem:[%s60]]
  %s62 = sld [smem:[#allocation0]]
  $region161: #{_lambda_.1} parent=0
    _
  %s64 = ssub.s32 1, %s62
  %s65 = scalar_select 0, %s64, %s62
  loop: start=0, step=1, limit=6
  $region2: #{_lambda_.1} parent=0 // loop_pre_header
    _
  $region3: #{_lambda_.1} parent=0 // loop_header
    %s67 = sphi 0, %s71
    %p68 = scmp.ge.s32.totalorder %s67, 6
    %s74 = sphi 0, %s86
    %s75 = sphi 0, %s82
    %s76 = sphi 0, %s74
    %s77 = sphi 0, %s75
    %s78 = sphi 0, %s76
    %s79 = sphi 0, %s77
    %s89 = sphi 0, %s91
    %s92 = sphi 0, %s89
    %s93 = sphi 0, %s92
    %s109 = sphi 0, %s93
    %s113 = sphi 0, %s113
    %s115 = sphi 0, %s113
    %s116 = sphi 0, %s115
    %s130 = sphi 0, %s116
    %s134 = sphi 0, %s134
    %s136 = sphi 0, %s134
    %s137 = sphi 0, %s136
    %s151 = sphi 0, %s137
    %s155 = sphi 0, %s155
    %s157 = sphi 0, %s155
    %s158 = sphi 0, %s157
    %s172 = sphi 0, %s158
    %s176 = sphi 0, %s176
    %s178 = sphi 0, %s176
    %s179 = sphi 0, %s178
    %s193 = sphi 0, %s179
    %s197 = sphi 0, %s197
    %s199 = sphi 0, %s197
    %s200 = sphi 0, %s199
    %s214 = sphi 0, %s200
    %s218 = sphi 0, %s218
    %s220 = sphi 0, %s218
    %s221 = sphi 0, %s220
    %s235 = sphi 0, %s221
    %s239 = sphi 0, %s239
    %s241 = sphi 0, %s239
    %s242 = sphi 0, %s241
    %s256 = sphi 0, %s242
    %s260 = sphi 0, %s260
    %s262 = sphi 0, %s260
    %s263 = sphi 0, %s262
    %s277 = sphi 0, %s263
    %s281 = sphi 0, %s281
    %s283 = sphi 0, %s281
    %s284 = sphi 0, %s283
    %s298 = sphi 0, %s284
    %s304 = sphi 0, %s306
    %s307 = sphi 0, %s304
    %s308 = sphi 0, %s307
    %s324 = sphi 0, %s308
    %s330 = sphi 0, %s332
    %s333 = sphi 0, %s330
    %s334 = sphi 0, %s333
    %s350 = sphi 0, %s334
    %s356 = sphi 0, %s358
    %s359 = sphi 0, %s356
    %s360 = sphi 0, %s359
    %s376 = sphi 0, %s360
    %s382 = sphi 0, %s384
    %s385 = sphi 0, %s382
    %s386 = sphi 0, %s385
    %s402 = sphi 0, %s386
    %s408 = sphi 0, %s410
    %s411 = sphi 0, %s408
    %s412 = sphi 0, %s411
    %s428 = sphi 0, %s412
    %s434 = sphi 0, %s436
    %s437 = sphi 0, %s434
    %s438 = sphi 0, %s437
    %s454 = sphi 0, %s438
    %s460 = sphi 0, %s462
    %s463 = sphi 0, %s460
    %s464 = sphi 0, %s463
    %s480 = sphi 0, %s464
    %s486 = sphi 0, %s488
    %s489 = sphi 0, %s486
    %s490 = sphi 0, %s489
    %s506 = sphi 0, %s490
    %s512 = sphi 0, %s514
    %s515 = sphi 0, %s512
    %s516 = sphi 0, %s515
    %s532 = sphi 0, %s516
    %s538 = sphi 0, %s540
    %s541 = sphi 0, %s538
    %s542 = sphi 0, %s541
    %s558 = sphi 0, %s542
    %s564 = sphi 0, %s566
    %s567 = sphi 0, %s564
    %s568 = sphi 0, %s567
    %s584 = sphi 0, %s568
    %s590 = sphi 0, %s592
    %s593 = sphi 0, %s590
    %s594 = sphi 0, %s593
    %s610 = sphi 0, %s594
    %s616 = sphi 0, %s618
    %s619 = sphi 0, %s616
    %s620 = sphi 0, %s619
    %s636 = sphi 0, %s620
    %s642 = sphi 0, %s644
    %s645 = sphi 0, %s642
    %s646 = sphi 0, %s645
    %s662 = sphi 0, %s646
    %s666 = sphi 0, %s666
    %s668 = sphi 0, %s666
    %s669 = sphi 0, %s668
    %s683 = sphi 0, %s669
    %s687 = sphi 0, %s687
    %s689 = sphi 0, %s687
    %s690 = sphi 0, %s689
    %s704 = sphi 0, %s690
    %s708 = sphi 0, %s708
    %s710 = sphi 0, %s708
    %s711 = sphi 0, %s710
    %s725 = sphi 0, %s711
    %s729 = sphi 0, %s729
    %s731 = sphi 0, %s729
    %s732 = sphi 0, %s731
    %s746 = sphi 0, %s732
    %s750 = sphi 0, %s750
    %s752 = sphi 0, %s750
    %s753 = sphi 0, %s752
    %s767 = sphi 0, %s753
    %s771 = sphi 0, %s771
    %s773 = sphi 0, %s771
    %s774 = sphi 0, %s773
    %s788 = sphi 0, %s774
    %s794 = sphi 0, %s796
    %s797 = sphi 0, %s794
    %s798 = sphi 0, %s797
    %s814 = sphi 0, %s798
  $region4: #{_lambda_.1} parent=0 // loop_header_branch
    %70 = sbr.rel (%p68) target = $region8
  $region5: #{_lambda_.1} parent=0 // loop_body
    %s72 = ssub.s32 %s67, 1
    %s73 = ssub.s32 %s67, 2
    %s80 = sadd.s32 1, %s75
    %p81 = scmp.ge.s32.totalorder %s80, 2
    %s82 = scalar_select %p81, 0, %s80
    %s83 = sadd.s32 1, %s74
    %s84 = scalar_select %p81, %s83, %s74
    %p85 = scmp.ge.s32.totalorder %s84, 2
    %s86 = scalar_select %p85, 0, %s84
    %s87 = ssub.s32 %s74, %s86
    %p88 = scmp.eq.s32.totalorder %s87, 0
    %s90 = sadd.s32 %s89, 1
    %s91 = scalar_select %p88, %s89, %s90
    %p94 = pneg %p88
    %p95 = scmp.eq.s32.totalorder %s67, 3
    %p96 = por %p94, %p95
    %p97 = scmp.ne.s32.totalorder %s89, %s92
    %p98 = scmp.eq.s32.totalorder %s67, 0
    %p99 = por %p97, %p98
    %p100 = scmp.ne.s32.totalorder %s89, %s92
    %p101 = scmp.eq.s32.totalorder %s72, 3
    %p102 = por %p100, %p101
    %p103 = scmp.ne.s32.totalorder %s92, %s93
    %p104 = scmp.eq.s32.totalorder %s72, 0
    %p105 = por %p103, %p104
    %p106 = scmp.ne.s32.totalorder %s92, %s93
    %p107 = scmp.eq.s32.totalorder %s73, 3
    %p108 = por %p106, %p107
    %p110 = scmp.ne.s32.totalorder %s93, %s109
    %p111 = scmp.eq.s32.totalorder %s73, 0
    %p112 = por %p110, %p111
    %s114 = sadd.s32 %s113, 1
    %p117 = scmp.eq.s32.totalorder %s67, 3
    %p118 = scmp.ne.s32.totalorder %s113, %s115
    %p119 = scmp.eq.s32.totalorder %s67, 0
    %p120 = por %p118, %p119
    %p121 = scmp.ne.s32.totalorder %s113, %s115
    %p122 = scmp.eq.s32.totalorder %s72, 3
    %p123 = por %p121, %p122
    %p124 = scmp.ne.s32.totalorder %s115, %s116
    %p125 = scmp.eq.s32.totalorder %s72, 0
    %p126 = por %p124, %p125
    %p127 = scmp.ne.s32.totalorder %s115, %s116
    %p128 = scmp.eq.s32.totalorder %s73, 3
    %p129 = por %p127, %p128
    %p131 = scmp.ne.s32.totalorder %s116, %s130
    %p132 = scmp.eq.s32.totalorder %s73, 0
    %p133 = por %p131, %p132
    %s135 = sadd.s32 %s134, 1
    %p138 = scmp.eq.s32.totalorder %s67, 3
    %p139 = scmp.ne.s32.totalorder %s134, %s136
    %p140 = scmp.eq.s32.totalorder %s67, 0
    %p141 = por %p139, %p140
    %p142 = scmp.ne.s32.totalorder %s134, %s136
    %p143 = scmp.eq.s32.totalorder %s72, 3
    %p144 = por %p142, %p143
    %p145 = scmp.ne.s32.totalorder %s136, %s137
    %p146 = scmp.eq.s32.totalorder %s72, 0
    %p147 = por %p145, %p146
    %p148 = scmp.ne.s32.totalorder %s136, %s137
    %p149 = scmp.eq.s32.totalorder %s73, 3
    %p150 = por %p148, %p149
    %p152 = scmp.ne.s32.totalorder %s137, %s151
    %p153 = scmp.eq.s32.totalorder %s73, 0
    %p154 = por %p152, %p153
    %s156 = sadd.s32 %s155, 1
    %p159 = scmp.eq.s32.totalorder %s67, 3
    %p160 = scmp.ne.s32.totalorder %s155, %s157
    %p161 = scmp.eq.s32.totalorder %s67, 0
    %p162 = por %p160, %p161
    %p163 = scmp.ne.s32.totalorder %s155, %s157
    %p164 = scmp.eq.s32.totalorder %s72, 3
    %p165 = por %p163, %p164
    %p166 = scmp.ne.s32.totalorder %s157, %s158
    %p167 = scmp.eq.s32.totalorder %s72, 0
    %p168 = por %p166, %p167
    %p169 = scmp.ne.s32.totalorder %s157, %s158
    %p170 = scmp.eq.s32.totalorder %s73, 3
    %p171 = por %p169, %p170
    %p173 = scmp.ne.s32.totalorder %s158, %s172
    %p174 = scmp.eq.s32.totalorder %s73, 0
    %p175 = por %p173, %p174
    %s177 = sadd.s32 %s176, 1
    %p180 = scmp.eq.s32.totalorder %s67, 3
    %p181 = scmp.ne.s32.totalorder %s176, %s178
    %p182 = scmp.eq.s32.totalorder %s67, 0
    %p183 = por %p181, %p182
    %p184 = scmp.ne.s32.totalorder %s176, %s178
    %p185 = scmp.eq.s32.totalorder %s72, 3
    %p186 = por %p184, %p185
    %p187 = scmp.ne.s32.totalorder %s178, %s179
    %p188 = scmp.eq.s32.totalorder %s72, 0
    %p189 = por %p187, %p188
    %p190 = scmp.ne.s32.totalorder %s178, %s179
    %p191 = scmp.eq.s32.totalorder %s73, 3
    %p192 = por %p190, %p191
    %p194 = scmp.ne.s32.totalorder %s179, %s193
    %p195 = scmp.eq.s32.totalorder %s73, 0
    %p196 = por %p194, %p195
    %s198 = sadd.s32 %s197, 1
    %p201 = scmp.eq.s32.totalorder %s67, 3
    %p202 = scmp.ne.s32.totalorder %s197, %s199
    %p203 = scmp.eq.s32.totalorder %s67, 0
    %p204 = por %p202, %p203
    %p205 = scmp.ne.s32.totalorder %s197, %s199
    %p206 = scmp.eq.s32.totalorder %s72, 3
    %p207 = por %p205, %p206
    %p208 = scmp.ne.s32.totalorder %s199, %s200
    %p209 = scmp.eq.s32.totalorder %s72, 0
    %p210 = por %p208, %p209
    %p211 = scmp.ne.s32.totalorder %s199, %s200
    %p212 = scmp.eq.s32.totalorder %s73, 3
    %p213 = por %p211, %p212
    %p215 = scmp.ne.s32.totalorder %s200, %s214
    %p216 = scmp.eq.s32.totalorder %s73, 0
    %p217 = por %p215, %p216
    %s219 = sadd.s32 %s218, 1
    %p222 = scmp.eq.s32.totalorder %s67, 3
    %p223 = scmp.ne.s32.totalorder %s218, %s220
    %p224 = scmp.eq.s32.totalorder %s67, 0
    %p225 = por %p223, %p224
    %p226 = scmp.ne.s32.totalorder %s218, %s220
    %p227 = scmp.eq.s32.totalorder %s72, 3
    %p228 = por %p226, %p227
    %p229 = scmp.ne.s32.totalorder %s220, %s221
    %p230 = scmp.eq.s32.totalorder %s72, 0
    %p231 = por %p229, %p230
    %p232 = scmp.ne.s32.totalorder %s220, %s221
    %p233 = scmp.eq.s32.totalorder %s73, 3
    %p234 = por %p232, %p233
    %p236 = scmp.ne.s32.totalorder %s221, %s235
    %p237 = scmp.eq.s32.totalorder %s73, 0
    %p238 = por %p236, %p237
    %s240 = sadd.s32 %s239, 1
    %p243 = scmp.eq.s32.totalorder %s67, 3
    %p244 = scmp.ne.s32.totalorder %s239, %s241
    %p245 = scmp.eq.s32.totalorder %s67, 0
    %p246 = por %p244, %p245
    %p247 = scmp.ne.s32.totalorder %s239, %s241
    %p248 = scmp.eq.s32.totalorder %s72, 3
    %p249 = por %p247, %p248
    %p250 = scmp.ne.s32.totalorder %s241, %s242
    %p251 = scmp.eq.s32.totalorder %s72, 0
    %p252 = por %p250, %p251
    %p253 = scmp.ne.s32.totalorder %s241, %s242
    %p254 = scmp.eq.s32.totalorder %s73, 3
    %p255 = por %p253, %p254
    %p257 = scmp.ne.s32.totalorder %s242, %s256
    %p258 = scmp.eq.s32.totalorder %s73, 0
    %p259 = por %p257, %p258
    %s261 = sadd.s32 %s260, 1
    %p264 = scmp.eq.s32.totalorder %s67, 3
    %p265 = scmp.ne.s32.totalorder %s260, %s262
    %p266 = scmp.eq.s32.totalorder %s67, 0
    %p267 = por %p265, %p266
    %p268 = scmp.ne.s32.totalorder %s260, %s262
    %p269 = scmp.eq.s32.totalorder %s72, 3
    %p270 = por %p268, %p269
    %p271 = scmp.ne.s32.totalorder %s262, %s263
    %p272 = scmp.eq.s32.totalorder %s72, 0
    %p273 = por %p271, %p272
    %p274 = scmp.ne.s32.totalorder %s262, %s263
    %p275 = scmp.eq.s32.totalorder %s73, 3
    %p276 = por %p274, %p275
    %p278 = scmp.ne.s32.totalorder %s263, %s277
    %p279 = scmp.eq.s32.totalorder %s73, 0
    %p280 = por %p278, %p279
    %s282 = sadd.s32 %s281, 1
    %p285 = scmp.eq.s32.totalorder %s67, 3
    %p286 = scmp.ne.s32.totalorder %s281, %s283
    %p287 = scmp.eq.s32.totalorder %s67, 0
    %p288 = por %p286, %p287
    %p289 = scmp.ne.s32.totalorder %s281, %s283
    %p290 = scmp.eq.s32.totalorder %s72, 3
    %p291 = por %p289, %p290
    %p292 = scmp.ne.s32.totalorder %s283, %s284
    %p293 = scmp.eq.s32.totalorder %s72, 0
    %p294 = por %p292, %p293
    %p295 = scmp.ne.s32.totalorder %s283, %s284
    %p296 = scmp.eq.s32.totalorder %s73, 3
    %p297 = por %p295, %p296
    %p299 = scmp.ne.s32.totalorder %s284, %s298
    %p300 = scmp.eq.s32.totalorder %s73, 0
    %p301 = por %p299, %p300
    %s302 = ssub.s32 %s75, %s82
    %p303 = scmp.eq.s32.totalorder %s302, 0
    %s305 = sadd.s32 %s304, 1
    %s306 = scalar_select %p303, %s304, %s305
    %p309 = pneg %p303
    %p310 = scmp.eq.s32.totalorder %s67, 3
    %p311 = por %p309, %p310
    %p312 = scmp.ne.s32.totalorder %s304, %s307
    %p313 = scmp.eq.s32.totalorder %s67, 0
    %p314 = por %p312, %p313
    %p315 = scmp.ne.s32.totalorder %s304, %s307
    %p316 = scmp.eq.s32.totalorder %s72, 3
    %p317 = por %p315, %p316
    %p318 = scmp.ne.s32.totalorder %s307, %s308
    %p319 = scmp.eq.s32.totalorder %s72, 0
    %p320 = por %p318, %p319
    %p321 = scmp.ne.s32.totalorder %s307, %s308
    %p322 = scmp.eq.s32.totalorder %s73, 3
    %p323 = por %p321, %p322
    %p325 = scmp.ne.s32.totalorder %s308, %s324
    %p326 = scmp.eq.s32.totalorder %s73, 0
    %p327 = por %p325, %p326
    %s328 = ssub.s32 %s75, %s82
    %p329 = scmp.eq.s32.totalorder %s328, 0
    %s331 = sadd.s32 %s330, 1
    %s332 = scalar_select %p329, %s330, %s331
    %p335 = pneg %p329
    %p336 = scmp.eq.s32.totalorder %s67, 3
    %p337 = por %p335, %p336
    %p338 = scmp.ne.s32.totalorder %s330, %s333
    %p339 = scmp.eq.s32.totalorder %s67, 0
    %p340 = por %p338, %p339
    %p341 = scmp.ne.s32.totalorder %s330, %s333
    %p342 = scmp.eq.s32.totalorder %s72, 3
    %p343 = por %p341, %p342
    %p344 = scmp.ne.s32.totalorder %s333, %s334
    %p345 = scmp.eq.s32.totalorder %s72, 0
    %p346 = por %p344, %p345
    %p347 = scmp.ne.s32.totalorder %s333, %s334
    %p348 = scmp.eq.s32.totalorder %s73, 3
    %p349 = por %p347, %p348
    %p351 = scmp.ne.s32.totalorder %s334, %s350
    %p352 = scmp.eq.s32.totalorder %s73, 0
    %p353 = por %p351, %p352
    %s354 = ssub.s32 %s75, %s82
    %p355 = scmp.eq.s32.totalorder %s354, 0
    %s357 = sadd.s32 %s356, 1
    %s358 = scalar_select %p355, %s356, %s357
    %p361 = pneg %p355
    %p362 = scmp.eq.s32.totalorder %s67, 3
    %p363 = por %p361, %p362
    %p364 = scmp.ne.s32.totalorder %s356, %s359
    %p365 = scmp.eq.s32.totalorder %s67, 0
    %p366 = por %p364, %p365
    %p367 = scmp.ne.s32.totalorder %s356, %s359
    %p368 = scmp.eq.s32.totalorder %s72, 3
    %p369 = por %p367, %p368
    %p370 = scmp.ne.s32.totalorder %s359, %s360
    %p371 = scmp.eq.s32.totalorder %s72, 0
    %p372 = por %p370, %p371
    %p373 = scmp.ne.s32.totalorder %s359, %s360
    %p374 = scmp.eq.s32.totalorder %s73, 3
    %p375 = por %p373, %p374
    %p377 = scmp.ne.s32.totalorder %s360, %s376
    %p378 = scmp.eq.s32.totalorder %s73, 0
    %p379 = por %p377, %p378
    %s380 = ssub.s32 %s75, %s82
    %p381 = scmp.eq.s32.totalorder %s380, 0
    %s383 = sadd.s32 %s382, 1
    %s384 = scalar_select %p381, %s382, %s383
    %p387 = pneg %p381
    %p388 = scmp.eq.s32.totalorder %s67, 3
    %p389 = por %p387, %p388
    %p390 = scmp.ne.s32.totalorder %s382, %s385
    %p391 = scmp.eq.s32.totalorder %s67, 0
    %p392 = por %p390, %p391
    %p393 = scmp.ne.s32.totalorder %s382, %s385
    %p394 = scmp.eq.s32.totalorder %s72, 3
    %p395 = por %p393, %p394
    %p396 = scmp.ne.s32.totalorder %s385, %s386
    %p397 = scmp.eq.s32.totalorder %s72, 0
    %p398 = por %p396, %p397
    %p399 = scmp.ne.s32.totalorder %s385, %s386
    %p400 = scmp.eq.s32.totalorder %s73, 3
    %p401 = por %p399, %p400
    %p403 = scmp.ne.s32.totalorder %s386, %s402
    %p404 = scmp.eq.s32.totalorder %s73, 0
    %p405 = por %p403, %p404
    %s406 = ssub.s32 %s75, %s82
    %p407 = scmp.eq.s32.totalorder %s406, 0
    %s409 = sadd.s32 %s408, 1
    %s410 = scalar_select %p407, %s408, %s409
    %p413 = pneg %p407
    %p414 = scmp.eq.s32.totalorder %s67, 3
    %p415 = por %p413, %p414
    %p416 = scmp.ne.s32.totalorder %s408, %s411
    %p417 = scmp.eq.s32.totalorder %s67, 0
    %p418 = por %p416, %p417
    %p419 = scmp.ne.s32.totalorder %s408, %s411
    %p420 = scmp.eq.s32.totalorder %s72, 3
    %p421 = por %p419, %p420
    %p422 = scmp.ne.s32.totalorder %s411, %s412
    %p423 = scmp.eq.s32.totalorder %s72, 0
    %p424 = por %p422, %p423
    %p425 = scmp.ne.s32.totalorder %s411, %s412
    %p426 = scmp.eq.s32.totalorder %s73, 3
    %p427 = por %p425, %p426
    %p429 = scmp.ne.s32.totalorder %s412, %s428
    %p430 = scmp.eq.s32.totalorder %s73, 0
    %p431 = por %p429, %p430
    %s432 = ssub.s32 %s75, %s82
    %p433 = scmp.eq.s32.totalorder %s432, 0
    %s435 = sadd.s32 %s434, 1
    %s436 = scalar_select %p433, %s434, %s435
    %p439 = pneg %p433
    %p440 = scmp.eq.s32.totalorder %s67, 3
    %p441 = por %p439, %p440
    %p442 = scmp.ne.s32.totalorder %s434, %s437
    %p443 = scmp.eq.s32.totalorder %s67, 0
    %p444 = por %p442, %p443
    %p445 = scmp.ne.s32.totalorder %s434, %s437
    %p446 = scmp.eq.s32.totalorder %s72, 3
    %p447 = por %p445, %p446
    %p448 = scmp.ne.s32.totalorder %s437, %s438
    %p449 = scmp.eq.s32.totalorder %s72, 0
    %p450 = por %p448, %p449
    %p451 = scmp.ne.s32.totalorder %s437, %s438
    %p452 = scmp.eq.s32.totalorder %s73, 3
    %p453 = por %p451, %p452
    %p455 = scmp.ne.s32.totalorder %s438, %s454
    %p456 = scmp.eq.s32.totalorder %s73, 0
    %p457 = por %p455, %p456
    %s458 = ssub.s32 %s75, %s82
    %p459 = scmp.eq.s32.totalorder %s458, 0
    %s461 = sadd.s32 %s460, 1
    %s462 = scalar_select %p459, %s460, %s461
    %p465 = pneg %p459
    %p466 = scmp.eq.s32.totalorder %s67, 3
    %p467 = por %p465, %p466
    %p468 = scmp.ne.s32.totalorder %s460, %s463
    %p469 = scmp.eq.s32.totalorder %s67, 0
    %p470 = por %p468, %p469
    %p471 = scmp.ne.s32.totalorder %s460, %s463
    %p472 = scmp.eq.s32.totalorder %s72, 3
    %p473 = por %p471, %p472
    %p474 = scmp.ne.s32.totalorder %s463, %s464
    %p475 = scmp.eq.s32.totalorder %s72, 0
    %p476 = por %p474, %p475
    %p477 = scmp.ne.s32.totalorder %s463, %s464
    %p478 = scmp.eq.s32.totalorder %s73, 3
    %p479 = por %p477, %p478
    %p481 = scmp.ne.s32.totalorder %s464, %s480
    %p482 = scmp.eq.s32.totalorder %s73, 0
    %p483 = por %p481, %p482
    %s484 = ssub.s32 %s75, %s82
    %p485 = scmp.eq.s32.totalorder %s484, 0
    %s487 = sadd.s32 %s486, 1
    %s488 = scalar_select %p485, %s486, %s487
    %p491 = pneg %p485
    %p492 = scmp.eq.s32.totalorder %s67, 3
    %p493 = por %p491, %p492
    %p494 = scmp.ne.s32.totalorder %s486, %s489
    %p495 = scmp.eq.s32.totalorder %s67, 0
    %p496 = por %p494, %p495
    %p497 = scmp.ne.s32.totalorder %s486, %s489
    %p498 = scmp.eq.s32.totalorder %s72, 3
    %p499 = por %p497, %p498
    %p500 = scmp.ne.s32.totalorder %s489, %s490
    %p501 = scmp.eq.s32.totalorder %s72, 0
    %p502 = por %p500, %p501
    %p503 = scmp.ne.s32.totalorder %s489, %s490
    %p504 = scmp.eq.s32.totalorder %s73, 3
    %p505 = por %p503, %p504
    %p507 = scmp.ne.s32.totalorder %s490, %s506
    %p508 = scmp.eq.s32.totalorder %s73, 0
    %p509 = por %p507, %p508
    %s510 = ssub.s32 %s75, %s82
    %p511 = scmp.eq.s32.totalorder %s510, 0
    %s513 = sadd.s32 %s512, 1
    %s514 = scalar_select %p511, %s512, %s513
    %p517 = pneg %p511
    %p518 = scmp.eq.s32.totalorder %s67, 3
    %p519 = por %p517, %p518
    %p520 = scmp.ne.s32.totalorder %s512, %s515
    %p521 = scmp.eq.s32.totalorder %s67, 0
    %p522 = por %p520, %p521
    %p523 = scmp.ne.s32.totalorder %s512, %s515
    %p524 = scmp.eq.s32.totalorder %s72, 3
    %p525 = por %p523, %p524
    %p526 = scmp.ne.s32.totalorder %s515, %s516
    %p527 = scmp.eq.s32.totalorder %s72, 0
    %p528 = por %p526, %p527
    %p529 = scmp.ne.s32.totalorder %s515, %s516
    %p530 = scmp.eq.s32.totalorder %s73, 3
    %p531 = por %p529, %p530
    %p533 = scmp.ne.s32.totalorder %s516, %s532
    %p534 = scmp.eq.s32.totalorder %s73, 0
    %p535 = por %p533, %p534
    %s536 = ssub.s32 %s75, %s82
    %p537 = scmp.eq.s32.totalorder %s536, 0
    %s539 = sadd.s32 %s538, 1
    %s540 = scalar_select %p537, %s538, %s539
    %p543 = pneg %p537
    %p544 = scmp.eq.s32.totalorder %s67, 3
    %p545 = por %p543, %p544
    %p546 = scmp.ne.s32.totalorder %s538, %s541
    %p547 = scmp.eq.s32.totalorder %s67, 0
    %p548 = por %p546, %p547
    %p549 = scmp.ne.s32.totalorder %s538, %s541
    %p550 = scmp.eq.s32.totalorder %s72, 3
    %p551 = por %p549, %p550
    %p552 = scmp.ne.s32.totalorder %s541, %s542
    %p553 = scmp.eq.s32.totalorder %s72, 0
    %p554 = por %p552, %p553
    %p555 = scmp.ne.s32.totalorder %s541, %s542
    %p556 = scmp.eq.s32.totalorder %s73, 3
    %p557 = por %p555, %p556
    %p559 = scmp.ne.s32.totalorder %s542, %s558
    %p560 = scmp.eq.s32.totalorder %s73, 0
    %p561 = por %p559, %p560
    %s562 = ssub.s32 %s75, %s82
    %p563 = scmp.eq.s32.totalorder %s562, 0
    %s565 = sadd.s32 %s564, 1
    %s566 = scalar_select %p563, %s564, %s565
    %p569 = pneg %p563
    %p570 = scmp.eq.s32.totalorder %s67, 3
    %p571 = por %p569, %p570
    %p572 = scmp.ne.s32.totalorder %s564, %s567
    %p573 = scmp.eq.s32.totalorder %s67, 0
    %p574 = por %p572, %p573
    %p575 = scmp.ne.s32.totalorder %s564, %s567
    %p576 = scmp.eq.s32.totalorder %s72, 3
    %p577 = por %p575, %p576
    %p578 = scmp.ne.s32.totalorder %s567, %s568
    %p579 = scmp.eq.s32.totalorder %s72, 0
    %p580 = por %p578, %p579
    %p581 = scmp.ne.s32.totalorder %s567, %s568
    %p582 = scmp.eq.s32.totalorder %s73, 3
    %p583 = por %p581, %p582
    %p585 = scmp.ne.s32.totalorder %s568, %s584
    %p586 = scmp.eq.s32.totalorder %s73, 0
    %p587 = por %p585, %p586
    %s588 = ssub.s32 %s75, %s82
    %p589 = scmp.eq.s32.totalorder %s588, 0
    %s591 = sadd.s32 %s590, 1
    %s592 = scalar_select %p589, %s590, %s591
    %p595 = pneg %p589
    %p596 = scmp.eq.s32.totalorder %s67, 3
    %p597 = por %p595, %p596
    %p598 = scmp.ne.s32.totalorder %s590, %s593
    %p599 = scmp.eq.s32.totalorder %s67, 0
    %p600 = por %p598, %p599
    %p601 = scmp.ne.s32.totalorder %s590, %s593
    %p602 = scmp.eq.s32.totalorder %s72, 3
    %p603 = por %p601, %p602
    %p604 = scmp.ne.s32.totalorder %s593, %s594
    %p605 = scmp.eq.s32.totalorder %s72, 0
    %p606 = por %p604, %p605
    %p607 = scmp.ne.s32.totalorder %s593, %s594
    %p608 = scmp.eq.s32.totalorder %s73, 3
    %p609 = por %p607, %p608
    %p611 = scmp.ne.s32.totalorder %s594, %s610
    %p612 = scmp.eq.s32.totalorder %s73, 0
    %p613 = por %p611, %p612
    %s614 = ssub.s32 %s75, %s82
    %p615 = scmp.eq.s32.totalorder %s614, 0
    %s617 = sadd.s32 %s616, 1
    %s618 = scalar_select %p615, %s616, %s617
    %p621 = pneg %p615
    %p622 = scmp.eq.s32.totalorder %s67, 3
    %p623 = por %p621, %p622
    %p624 = scmp.ne.s32.totalorder %s616, %s619
    %p625 = scmp.eq.s32.totalorder %s67, 0
    %p626 = por %p624, %p625
    %p627 = scmp.ne.s32.totalorder %s616, %s619
    %p628 = scmp.eq.s32.totalorder %s72, 3
    %p629 = por %p627, %p628
    %p630 = scmp.ne.s32.totalorder %s619, %s620
    %p631 = scmp.eq.s32.totalorder %s72, 0
    %p632 = por %p630, %p631
    %p633 = scmp.ne.s32.totalorder %s619, %s620
    %p634 = scmp.eq.s32.totalorder %s73, 3
    %p635 = por %p633, %p634
    %p637 = scmp.ne.s32.totalorder %s620, %s636
    %p638 = scmp.eq.s32.totalorder %s73, 0
    %p639 = por %p637, %p638
    %s640 = ssub.s32 %s75, %s82
    %p641 = scmp.eq.s32.totalorder %s640, 0
    %s643 = sadd.s32 %s642, 1
    %s644 = scalar_select %p641, %s642, %s643
    %p647 = pneg %p641
    %p648 = scmp.eq.s32.totalorder %s67, 3
    %p649 = por %p647, %p648
    %p650 = scmp.ne.s32.totalorder %s642, %s645
    %p651 = scmp.eq.s32.totalorder %s67, 0
    %p652 = por %p650, %p651
    %p653 = scmp.ne.s32.totalorder %s642, %s645
    %p654 = scmp.eq.s32.totalorder %s72, 3
    %p655 = por %p653, %p654
    %p656 = scmp.ne.s32.totalorder %s645, %s646
    %p657 = scmp.eq.s32.totalorder %s72, 0
    %p658 = por %p656, %p657
    %p659 = scmp.ne.s32.totalorder %s645, %s646
    %p660 = scmp.eq.s32.totalorder %s73, 3
    %p661 = por %p659, %p660
    %p663 = scmp.ne.s32.totalorder %s646, %s662
    %p664 = scmp.eq.s32.totalorder %s73, 0
    %p665 = por %p663, %p664
    %s667 = sadd.s32 %s666, 1
    %p670 = scmp.eq.s32.totalorder %s67, 3
    %p671 = scmp.ne.s32.totalorder %s666, %s668
    %p672 = scmp.eq.s32.totalorder %s67, 0
    %p673 = por %p671, %p672
    %p674 = scmp.ne.s32.totalorder %s666, %s668
    %p675 = scmp.eq.s32.totalorder %s72, 3
    %p676 = por %p674, %p675
    %p677 = scmp.ne.s32.totalorder %s668, %s669
    %p678 = scmp.eq.s32.totalorder %s72, 0
    %p679 = por %p677, %p678
    %p680 = scmp.ne.s32.totalorder %s668, %s669
    %p681 = scmp.eq.s32.totalorder %s73, 3
    %p682 = por %p680, %p681
    %p684 = scmp.ne.s32.totalorder %s669, %s683
    %p685 = scmp.eq.s32.totalorder %s73, 0
    %p686 = por %p684, %p685
    %s688 = sadd.s32 %s687, 1
    %p691 = scmp.eq.s32.totalorder %s67, 3
    %p692 = scmp.ne.s32.totalorder %s687, %s689
    %p693 = scmp.eq.s32.totalorder %s67, 0
    %p694 = por %p692, %p693
    %p695 = scmp.ne.s32.totalorder %s687, %s689
    %p696 = scmp.eq.s32.totalorder %s72, 3
    %p697 = por %p695, %p696
    %p698 = scmp.ne.s32.totalorder %s689, %s690
    %p699 = scmp.eq.s32.totalorder %s72, 0
    %p700 = por %p698, %p699
    %p701 = scmp.ne.s32.totalorder %s689, %s690
    %p702 = scmp.eq.s32.totalorder %s73, 3
    %p703 = por %p701, %p702
    %p705 = scmp.ne.s32.totalorder %s690, %s704
    %p706 = scmp.eq.s32.totalorder %s73, 0
    %p707 = por %p705, %p706
    %s709 = sadd.s32 %s708, 1
    %p712 = scmp.eq.s32.totalorder %s67, 3
    %p713 = scmp.ne.s32.totalorder %s708, %s710
    %p714 = scmp.eq.s32.totalorder %s67, 0
    %p715 = por %p713, %p714
    %p716 = scmp.ne.s32.totalorder %s708, %s710
    %p717 = scmp.eq.s32.totalorder %s72, 3
    %p718 = por %p716, %p717
    %p719 = scmp.ne.s32.totalorder %s710, %s711
    %p720 = scmp.eq.s32.totalorder %s72, 0
    %p721 = por %p719, %p720
    %p722 = scmp.ne.s32.totalorder %s710, %s711
    %p723 = scmp.eq.s32.totalorder %s73, 3
    %p724 = por %p722, %p723
    %p726 = scmp.ne.s32.totalorder %s711, %s725
    %p727 = scmp.eq.s32.totalorder %s73, 0
    %p728 = por %p726, %p727
    %s730 = sadd.s32 %s729, 1
    %p733 = scmp.eq.s32.totalorder %s67, 3
    %p734 = scmp.ne.s32.totalorder %s729, %s731
    %p735 = scmp.eq.s32.totalorder %s67, 0
    %p736 = por %p734, %p735
    %p737 = scmp.ne.s32.totalorder %s729, %s731
    %p738 = scmp.eq.s32.totalorder %s72, 3
    %p739 = por %p737, %p738
    %p740 = scmp.ne.s32.totalorder %s731, %s732
    %p741 = scmp.eq.s32.totalorder %s72, 0
    %p742 = por %p740, %p741
    %p743 = scmp.ne.s32.totalorder %s731, %s732
    %p744 = scmp.eq.s32.totalorder %s73, 3
    %p745 = por %p743, %p744
    %p747 = scmp.ne.s32.totalorder %s732, %s746
    %p748 = scmp.eq.s32.totalorder %s73, 0
    %p749 = por %p747, %p748
    %s751 = sadd.s32 %s750, 1
    %p754 = scmp.eq.s32.totalorder %s67, 3
    %p755 = scmp.ne.s32.totalorder %s750, %s752
    %p756 = scmp.eq.s32.totalorder %s67, 0
    %p757 = por %p755, %p756
    %p758 = scmp.ne.s32.totalorder %s750, %s752
    %p759 = scmp.eq.s32.totalorder %s72, 3
    %p760 = por %p758, %p759
    %p761 = scmp.ne.s32.totalorder %s752, %s753
    %p762 = scmp.eq.s32.totalorder %s72, 0
    %p763 = por %p761, %p762
    %p764 = scmp.ne.s32.totalorder %s752, %s753
    %p765 = scmp.eq.s32.totalorder %s73, 3
    %p766 = por %p764, %p765
    %p768 = scmp.ne.s32.totalorder %s753, %s767
    %p769 = scmp.eq.s32.totalorder %s73, 0
    %p770 = por %p768, %p769
    %s772 = sadd.s32 %s771, 1
    %p775 = scmp.eq.s32.totalorder %s67, 3
    %p776 = scmp.ne.s32.totalorder %s771, %s773
    %p777 = scmp.eq.s32.totalorder %s67, 0
    %p778 = por %p776, %p777
    %p779 = scmp.ne.s32.totalorder %s771, %s773
    %p780 = scmp.eq.s32.totalorder %s72, 3
    %p781 = por %p779, %p780
    %p782 = scmp.ne.s32.totalorder %s773, %s774
    %p783 = scmp.eq.s32.totalorder %s72, 0
    %p784 = por %p782, %p783
    %p785 = scmp.ne.s32.totalorder %s773, %s774
    %p786 = scmp.eq.s32.totalorder %s73, 3
    %p787 = por %p785, %p786
    %p789 = scmp.ne.s32.totalorder %s774, %s788
    %p790 = scmp.eq.s32.totalorder %s73, 0
    %p791 = por %p789, %p790
    %s792 = ssub.s32 %s74, %s86
    %p793 = scmp.eq.s32.totalorder %s792, 0
    %s795 = sadd.s32 %s794, 1
    %s796 = scalar_select %p793, %s794, %s795
    %p799 = pneg %p793
    %p800 = scmp.eq.s32.totalorder %s67, 3
    %p801 = por %p799, %p800
    %p802 = scmp.ne.s32.totalorder %s794, %s797
    %p803 = scmp.eq.s32.totalorder %s67, 0
    %p804 = por %p802, %p803
    %p805 = scmp.ne.s32.totalorder %s794, %s797
    %p806 = scmp.eq.s32.totalorder %s72, 3
    %p807 = por %p805, %p806
    %p808 = scmp.ne.s32.totalorder %s797, %s798
    %p809 = scmp.eq.s32.totalorder %s72, 0
    %p810 = por %p808, %p809
    %p811 = scmp.ne.s32.totalorder %s797, %s798
    %p812 = scmp.eq.s32.totalorder %s73, 3
    %p813 = por %p811, %p812
    %p815 = scmp.ne.s32.totalorder %s798, %s814
    %p816 = scmp.eq.s32.totalorder %s73, 0
    %p817 = por %p815, %p816
    %p818 = scmp.le.s32.totalorder 1, %s67
    %p819 = scmp.lt.s32.totalorder %s67, 5
    %p820 = pnand %p818, %p819
    %p821 = pneg %p820
    // Predicated region
    $region9: #{_lambda_.1} parent=5 // pred_check
      _
    $region10: #{_lambda_.1} parent=5 // pred_check_branch
      %823 = sbr.rel (%p820) target = $region12
    $region11: #{_lambda_.1} parent=5 // pred_region
      %s824 = ssub.s32 %s67, 1
      // Predicated region
      $region13: #{_lambda_.1} parent=11 // pred_check
        %p825 = pneg %p126
      $region14: #{_lambda_.1} parent=11 // pred_check_branch
        %827 = sbr.rel (%p825) target = $region16
      $region15: #{_lambda_.1} parent=11 // pred_region
        _
      $region16: #{_lambda_.1} parent=11 // pred_fallthru
        _
      // Predicated region
      $region17: #{_lambda_.1} parent=11 // pred_check
        %p828 = pneg %p147
      $region18: #{_lambda_.1} parent=11 // pred_check_branch
        %830 = sbr.rel (%p828) target = $region20
      $region19: #{_lambda_.1} parent=11 // pred_region
        _
      $region20: #{_lambda_.1} parent=11 // pred_fallthru
        _
      // Predicated region
      $region21: #{_lambda_.1} parent=11 // pred_check
        %p831 = pneg %p168
      $region22: #{_lambda_.1} parent=11 // pred_check_branch
        %833 = sbr.rel (%p831) target = $region24
      $region23: #{_lambda_.1} parent=11 // pred_region
        _
      $region24: #{_lambda_.1} parent=11 // pred_fallthru
        _
      // Predicated region
      $region25: #{_lambda_.1} parent=11 // pred_check
        %p834 = pneg %p189
      $region26: #{_lambda_.1} parent=11 // pred_check_branch
        %836 = sbr.rel (%p834) target = $region28
      $region27: #{_lambda_.1} parent=11 // pred_region
        _
      $region28: #{_lambda_.1} parent=11 // pred_fallthru
        _
      // Predicated region
      $region29: #{_lambda_.1} parent=11 // pred_check
        %p837 = pneg %p210
      $region30: #{_lambda_.1} parent=11 // pred_check_branch
        %839 = sbr.rel (%p837) target = $region32
      $region31: #{_lambda_.1} parent=11 // pred_region
        _
      $region32: #{_lambda_.1} parent=11 // pred_fallthru
        _
      // Predicated region
      $region33: #{_lambda_.1} parent=11 // pred_check
        %p840 = pneg %p231
      $region34: #{_lambda_.1} parent=11 // pred_check_branch
        %842 = sbr.rel (%p840) target = $region36
      $region35: #{_lambda_.1} parent=11 // pred_region
        _
      $region36: #{_lambda_.1} parent=11 // pred_fallthru
        _
      // Predicated region
      $region37: #{_lambda_.1} parent=11 // pred_check
        %p843 = pneg %p252
      $region38: #{_lambda_.1} parent=11 // pred_check_branch
        %845 = sbr.rel (%p843) target = $region40
      $region39: #{_lambda_.1} parent=11 // pred_region
        _
      $region40: #{_lambda_.1} parent=11 // pred_fallthru
        _
      // Predicated region
      $region41: #{_lambda_.1} parent=11 // pred_check
        %p846 = pneg %p273
      $region42: #{_lambda_.1} parent=11 // pred_check_branch
        %848 = sbr.rel (%p846) target = $region44
      $region43: #{_lambda_.1} parent=11 // pred_region
        _
      $region44: #{_lambda_.1} parent=11 // pred_fallthru
        _
      // Predicated region
      $region45: #{_lambda_.1} parent=11 // pred_check
        %p849 = pneg %p294
      $region46: #{_lambda_.1} parent=11 // pred_check_branch
        %851 = sbr.rel (%p849) target = $region48
      $region47: #{_lambda_.1} parent=11 // pred_region
        _
      $region48: #{_lambda_.1} parent=11 // pred_fallthru
        _
      // Predicated region
      $region49: #{_lambda_.1} parent=11 // pred_check
        %p852 = pneg %p679
      $region50: #{_lambda_.1} parent=11 // pred_check_branch
        %854 = sbr.rel (%p852) target = $region52
      $region51: #{_lambda_.1} parent=11 // pred_region
        _
      $region52: #{_lambda_.1} parent=11 // pred_fallthru
        _
      // Predicated region
      $region53: #{_lambda_.1} parent=11 // pred_check
        %p855 = pneg %p700
      $region54: #{_lambda_.1} parent=11 // pred_check_branch
        %857 = sbr.rel (%p855) target = $region56
      $region55: #{_lambda_.1} parent=11 // pred_region
        _
      $region56: #{_lambda_.1} parent=11 // pred_fallthru
        _
      // Predicated region
      $region57: #{_lambda_.1} parent=11 // pred_check
        %p858 = pneg %p721
      $region58: #{_lambda_.1} parent=11 // pred_check_branch
        %860 = sbr.rel (%p858) target = $region60
      $region59: #{_lambda_.1} parent=11 // pred_region
        _
      $region60: #{_lambda_.1} parent=11 // pred_fallthru
        _
      // Predicated region
      $region61: #{_lambda_.1} parent=11 // pred_check
        %p861 = pneg %p742
      $region62: #{_lambda_.1} parent=11 // pred_check_branch
        %863 = sbr.rel (%p861) target = $region64
      $region63: #{_lambda_.1} parent=11 // pred_region
        _
      $region64: #{_lambda_.1} parent=11 // pred_fallthru
        _
      // Predicated region
      $region65: #{_lambda_.1} parent=11 // pred_check
        %p864 = pneg %p763
      $region66: #{_lambda_.1} parent=11 // pred_check_branch
        %866 = sbr.rel (%p864) target = $region68
      $region67: #{_lambda_.1} parent=11 // pred_region
        _
      $region68: #{_lambda_.1} parent=11 // pred_fallthru
        _
      // Predicated region
      $region69: #{_lambda_.1} parent=11 // pred_check
        %p867 = pneg %p784
      $region70: #{_lambda_.1} parent=11 // pred_check_branch
        %869 = sbr.rel (%p867) target = $region72
      $region71: #{_lambda_.1} parent=11 // pred_region
        _
      $region72: #{_lambda_.1} parent=11 // pred_fallthru
        _
    $region12: #{_lambda_.1} parent=5 // pred_fallthru
      _
    %p870 = scmp.lt.s32.totalorder %s67, 4
    // Predicated region
    $region73: #{_lambda_.1} parent=5 // pred_check
      %p871 = pneg %p870
    $region74: #{_lambda_.1} parent=5 // pred_check_branch
      %873 = sbr.rel (%p871) target = $region76
    $region75: #{_lambda_.1} parent=5 // pred_region
      // Predicated region
      $region77: #{_lambda_.1} parent=75 // pred_check
        %p874 = pneg %p99
      $region78: #{_lambda_.1} parent=75 // pred_check_branch
        %876 = sbr.rel (%p874) target = $region80
      $region79: #{_lambda_.1} parent=75 // pred_region
        %p877 = scmp.lt.s32.totalorder %s74, 1
        %s878 = scalar_select %p877, %s74, 1
        %s879 = smul.addr %s878, 11
        %s880 = smul.addr %s879, 8
        %s881 = scalar_lea.vmem %s1, %s880
      $region80: #{_lambda_.1} parent=75 // pred_fallthru
        _
      // Predicated region
      $region81: #{_lambda_.1} parent=75 // pred_check
        %p882 = pneg %p314
      $region82: #{_lambda_.1} parent=75 // pred_check_branch
        %884 = sbr.rel (%p882) target = $region84
      $region83: #{_lambda_.1} parent=75 // pred_region
        %p885 = scmp.lt.s32.totalorder %s75, 1
        %s886 = scalar_select %p885, %s75, 1
        %s887 = scalar_lea.vmem %s21, %s886
      $region84: #{_lambda_.1} parent=75 // pred_fallthru
        _
      // Predicated region
      $region85: #{_lambda_.1} parent=75 // pred_check
        %p888 = pneg %p340
      $region86: #{_lambda_.1} parent=75 // pred_check_branch
        %890 = sbr.rel (%p888) target = $region88
      $region87: #{_lambda_.1} parent=75 // pred_region
        %p891 = scmp.lt.s32.totalorder %s75, 1
        %s892 = scalar_select %p891, %s75, 1
        %s893 = scalar_lea.vmem %s23, %s892
      $region88: #{_lambda_.1} parent=75 // pred_fallthru
        _
      // Predicated region
      $region89: #{_lambda_.1} parent=75 // pred_check
        %p894 = pneg %p366
      $region90: #{_lambda_.1} parent=75 // pred_check_branch
        %896 = sbr.rel (%p894) target = $region92
      $region91: #{_lambda_.1} parent=75 // pred_region
        %p897 = scmp.lt.s32.totalorder %s75, 1
        %s898 = scalar_select %p897, %s75, 1
        %s899 = smul.addr %s898, 4
        %s900 = smul.addr %s899, 8
        %s901 = scalar_lea.vmem %s25, %s900
      $region92: #{_lambda_.1} parent=75 // pred_fallthru
        _
      // Predicated region
      $region93: #{_lambda_.1} parent=75 // pred_check
        %p902 = pneg %p392
      $region94: #{_lambda_.1} parent=75 // pred_check_branch
        %904 = sbr.rel (%p902) target = $region96
      $region95: #{_lambda_.1} parent=75 // pred_region
        %p905 = scmp.lt.s32.totalorder %s75, 1
        %s906 = scalar_select %p905, %s75, 1
        %s907 = scalar_lea.vmem %s27, %s906
      $region96: #{_lambda_.1} parent=75 // pred_fallthru
        _
      // Predicated region
      $region97: #{_lambda_.1} parent=75 // pred_check
        %p908 = pneg %p418
      $region98: #{_lambda_.1} parent=75 // pred_check_branch
        %910 = sbr.rel (%p908) target = $region100
      $region99: #{_lambda_.1} parent=75 // pred_region
        %p911 = scmp.lt.s32.totalorder %s75, 1
        %s912 = scalar_select %p911, %s75, 1
        %s913 = smul.addr %s912, 4
        %s914 = smul.addr %s913, 8
        %s915 = scalar_lea.vmem %s29, %s914
      $region100: #{_lambda_.1} parent=75 // pred_fallthru
        _
      // Predicated region
      $region101: #{_lambda_.1} parent=75 // pred_check
        %p916 = pneg %p444
      $region102: #{_lambda_.1} parent=75 // pred_check_branch
        %918 = sbr.rel (%p916) target = $region104
      $region103: #{_lambda_.1} parent=75 // pred_region
        %p919 = scmp.lt.s32.totalorder %s75, 1
        %s920 = scalar_select %p919, %s75, 1
        %s921 = scalar_lea.vmem %s31, %s920
      $region104: #{_lambda_.1} parent=75 // pred_fallthru
        _
      // Predicated region
      $region105: #{_lambda_.1} parent=75 // pred_check
        %p922 = pneg %p470
      $region106: #{_lambda_.1} parent=75 // pred_check_branch
        %924 = sbr.rel (%p922) target = $region108
      $region107: #{_lambda_.1} parent=75 // pred_region
        %p925 = scmp.lt.s32.totalorder %s75, 1
        %s926 = scalar_select %p925, %s75, 1
        %s927 = smul.addr %s926, 4
        %s928 = smul.addr %s927, 8
        %s929 = scalar_lea.vmem %s33, %s928
      $region108: #{_lambda_.1} parent=75 // pred_fallthru
        _
      // Predicated region
      $region109: #{_lambda_.1} parent=75 // pred_check
        %p930 = pneg %p496
      $region110: #{_lambda_.1} parent=75 // pred_check_branch
        %932 = sbr.rel (%p930) target = $region112
      $region111: #{_lambda_.1} parent=75 // pred_region
        %p933 = scmp.lt.s32.totalorder %s75, 1
        %s934 = scalar_select %p933, %s75, 1
        %s935 = scalar_lea.vmem %s35, %s934
      $region112: #{_lambda_.1} parent=75 // pred_fallthru
        _
      // Predicated region
      $region113: #{_lambda_.1} parent=75 // pred_check
        %p936 = pneg %p522
      $region114: #{_lambda_.1} parent=75 // pred_check_branch
        %938 = sbr.rel (%p936) target = $region116
      $region115: #{_lambda_.1} parent=75 // pred_region
        %p939 = scmp.lt.s32.totalorder %s75, 1
        %s940 = scalar_select %p939, %s75, 1
        %s941 = scalar_lea.vmem %s37, %s940
      $region116: #{_lambda_.1} parent=75 // pred_fallthru
        _
      // Predicated region
      $region117: #{_lambda_.1} parent=75 // pred_check
        %p942 = pneg %p548
      $region118: #{_lambda_.1} parent=75 // pred_check_branch
        %944 = sbr.rel (%p942) target = $region120
      $region119: #{_lambda_.1} parent=75 // pred_region
        %p945 = scmp.lt.s32.totalorder %s75, 1
        %s946 = scalar_select %p945, %s75, 1
        %s947 = scalar_lea.vmem %s39, %s946
      $region120: #{_lambda_.1} parent=75 // pred_fallthru
        _
      // Predicated region
      $region121: #{_lambda_.1} parent=75 // pred_check
        %p948 = pneg %p574
      $region122: #{_lambda_.1} parent=75 // pred_check_branch
        %950 = sbr.rel (%p948) target = $region124
      $region123: #{_lambda_.1} parent=75 // pred_region
        %p951 = scmp.lt.s32.totalorder %s75, 1
        %s952 = scalar_select %p951, %s75, 1
        %s953 = smul.addr %s952, 4
        %s954 = smul.addr %s953, 8
        %s955 = scalar_lea.vmem %s41, %s954
      $region124: #{_lambda_.1} parent=75 // pred_fallthru
        _
      // Predicated region
      $region125: #{_lambda_.1} parent=75 // pred_check
        %p956 = pneg %p600
      $region126: #{_lambda_.1} parent=75 // pred_check_branch
        %958 = sbr.rel (%p956) target = $region128
      $region127: #{_lambda_.1} parent=75 // pred_region
        %p959 = scmp.lt.s32.totalorder %s75, 1
        %s960 = scalar_select %p959, %s75, 1
        %s961 = scalar_lea.vmem %s43, %s960
      $region128: #{_lambda_.1} parent=75 // pred_fallthru
        _
      // Predicated region
      $region129: #{_lambda_.1} parent=75 // pred_check
        %p962 = pneg %p626
      $region130: #{_lambda_.1} parent=75 // pred_check_branch
        %964 = sbr.rel (%p962) target = $region132
      $region131: #{_lambda_.1} parent=75 // pred_region
        %p965 = scmp.lt.s32.totalorder %s75, 1
        %s966 = scalar_select %p965, %s75, 1
        %s967 = smul.addr %s966, 8
        %s968 = smul.addr %s967, 8
        %s969 = scalar_lea.vmem %s45, %s968
      $region132: #{_lambda_.1} parent=75 // pred_fallthru
        _
      // Predicated region
      $region133: #{_lambda_.1} parent=75 // pred_check
        %p970 = pneg %p652
      $region134: #{_lambda_.1} parent=75 // pred_check_branch
        %972 = sbr.rel (%p970) target = $region136
      $region135: #{_lambda_.1} parent=75 // pred_region
        %p973 = scmp.lt.s32.totalorder %s75, 1
        %s974 = scalar_select %p973, %s75, 1
        %s975 = scalar_lea.vmem %s47, %s974
      $region136: #{_lambda_.1} parent=75 // pred_fallthru
        _
    $region76: #{_lambda_.1} parent=5 // pred_fallthru
      _
    %p976 = scmp.le.s32.totalorder 1, %s67
    %p977 = scmp.lt.s32.totalorder %s67, 5
    %p978 = pnand %p976, %p977
    %p979 = pneg %p978
    // Predicated region
    $region137: #{_lambda_.1} parent=5 // pred_check
      _
    $region138: #{_lambda_.1} parent=5 // pred_check_branch
      %981 = sbr.rel (%p978) target = $region140
    $region139: #{_lambda_.1} parent=5 // pred_region
      %s982 = ssub.s32 %s67, 1
      %p983 = scmp.lt.s32.totalorder %s76, 1
      %s984 = scalar_select %p983, %s76, 1
      %s985 = smul.addr %s984, 11
      %s986 = smul.addr %s985, 8
      %s987 = scalar_lea.vmem %s1, %s986
      %p988 = pneg %p105
      %p989 = pneg %p102
      %p990 = pneg %p126
      %p991 = pneg %p123
      %p992 = pneg %p147
      %p993 = pneg %p144
      %p994 = pneg %p168
      %p995 = pneg %p165
      %p996 = pneg %p189
      %p997 = pneg %p186
      %p998 = pneg %p210
      %p999 = pneg %p207
      %p1000 = pneg %p231
      %p1001 = pneg %p228
      %p1002 = pneg %p252
      %p1003 = pneg %p249
      %p1004 = pneg %p273
      %p1005 = pneg %p270
      %p1006 = pneg %p294
      %p1007 = pneg %p291
      %p1008 = scmp.lt.s32.totalorder %s77, 1
      %s1009 = scalar_select %p1008, %s77, 1
      %s1010 = scalar_lea.vmem %s21, %s1009
      %p1011 = pneg %p320
      %p1012 = pneg %p317
      %p1013 = scmp.lt.s32.totalorder %s77, 1
      %s1014 = scalar_select %p1013, %s77, 1
      %s1015 = scalar_lea.vmem %s23, %s1014
      %p1016 = pneg %p346
      %p1017 = pneg %p343
      %p1018 = scmp.lt.s32.totalorder %s77, 1
      %s1019 = scalar_select %p1018, %s77, 1
      %s1020 = smul.addr %s1019, 4
      %s1021 = smul.addr %s1020, 8
      %s1022 = scalar_lea.vmem %s25, %s1021
      %p1023 = pneg %p372
      %p1024 = pneg %p369
      %p1025 = scmp.lt.s32.totalorder %s77, 1
      %s1026 = scalar_select %p1025, %s77, 1
      %s1027 = scalar_lea.vmem %s27, %s1026
      %p1028 = pneg %p398
      %p1029 = pneg %p395
      %p1030 = scmp.lt.s32.totalorder %s77, 1
      %s1031 = scalar_select %p1030, %s77, 1
      %s1032 = smul.addr %s1031, 4
      %s1033 = smul.addr %s1032, 8
      %s1034 = scalar_lea.vmem %s29, %s1033
      %p1035 = pneg %p424
      %p1036 = pneg %p421
      %p1037 = scmp.lt.s32.totalorder %s77, 1
      %s1038 = scalar_select %p1037, %s77, 1
      %s1039 = scalar_lea.vmem %s31, %s1038
      %p1040 = pneg %p450
      %p1041 = pneg %p447
      %p1042 = scmp.lt.s32.totalorder %s77, 1
      %s1043 = scalar_select %p1042, %s77, 1
      %s1044 = smul.addr %s1043, 4
      %s1045 = smul.addr %s1044, 8
      %s1046 = scalar_lea.vmem %s33, %s1045
      %p1047 = pneg %p476
      %p1048 = pneg %p473
      %p1049 = scmp.lt.s32.totalorder %s77, 1
      %s1050 = scalar_select %p1049, %s77, 1
      %s1051 = scalar_lea.vmem %s35, %s1050
      %p1052 = pneg %p502
      %p1053 = pneg %p499
      %p1054 = scmp.lt.s32.totalorder %s77, 1
      %s1055 = scalar_select %p1054, %s77, 1
      %s1056 = scalar_lea.vmem %s37, %s1055
      %p1057 = pneg %p528
      %p1058 = pneg %p525
      %p1059 = scmp.lt.s32.totalorder %s77, 1
      %s1060 = scalar_select %p1059, %s77, 1
      %s1061 = scalar_lea.vmem %s39, %s1060
      %p1062 = pneg %p554
      %p1063 = pneg %p551
      %p1064 = scmp.lt.s32.totalorder %s77, 1
      %s1065 = scalar_select %p1064, %s77, 1
      %s1066 = smul.addr %s1065, 4
      %s1067 = smul.addr %s1066, 8
      %s1068 = scalar_lea.vmem %s41, %s1067
      %p1069 = pneg %p580
      %p1070 = pneg %p577
      %p1071 = scmp.lt.s32.totalorder %s77, 1
      %s1072 = scalar_select %p1071, %s77, 1
      %s1073 = scalar_lea.vmem %s43, %s1072
      %p1074 = pneg %p606
      %p1075 = pneg %p603
      %p1076 = scmp.lt.s32.totalorder %s77, 1
      %s1077 = scalar_select %p1076, %s77, 1
      %s1078 = smul.addr %s1077, 8
      %s1079 = smul.addr %s1078, 8
      %s1080 = scalar_lea.vmem %s45, %s1079
      %p1081 = pneg %p632
      %p1082 = pneg %p629
      %p1083 = scmp.lt.s32.totalorder %s77, 1
      %s1084 = scalar_select %p1083, %s77, 1
      %s1085 = scalar_lea.vmem %s47, %s1084
      %p1086 = pneg %p658
      %p1087 = pneg %p655
      %p1088 = pneg %p679
      %p1089 = pneg %p676
      %p1090 = pneg %p700
      %p1091 = pneg %p697
      %p1092 = pneg %p721
      %p1093 = pneg %p718
      %p1094 = pneg %p742
      %p1095 = pneg %p739
      %p1096 = pneg %p763
      %p1097 = pneg %p760
      %p1098 = pneg %p784
      %p1099 = pneg %p781
      %p1100 = pneg %p810
      %p1101 = pneg %p807
      %p1102 = scmp.lt.s32.totalorder %s76, 1
      %s1103 = scalar_select %p1102, %s76, 1
      %s1104 = scalar_lea.vmem %s61, %s1103
      %p1105 = scmp.lt.s32.totalorder %s76, 1
      %s1106 = scalar_select %p1105, %s76, 1
      %s1107 = smul.addr %s1106, 11
      %s1108 = smul.addr %s1107, 8
      %s1109 = scalar_lea.vmem %s1, %s1108
      %p1110 = scmp.lt.s32.totalorder %s77, 1
      %s1111 = scalar_select %p1110, %s77, 1
      %s1112 = scalar_lea.vmem %s21, %s1111
      %p1113 = scmp.lt.s32.totalorder %s77, 1
      %s1114 = scalar_select %p1113, %s77, 1
      %s1115 = scalar_lea.vmem %s23, %s1114
      %p1116 = scmp.lt.s32.totalorder %s77, 1
      %s1117 = scalar_select %p1116, %s77, 1
      %s1118 = smul.addr %s1117, 4
      %s1119 = smul.addr %s1118, 8
      %s1120 = scalar_lea.vmem %s25, %s1119
      %p1121 = scmp.lt.s32.totalorder %s77, 1
      %s1122 = scalar_select %p1121, %s77, 1
      %s1123 = scalar_lea.vmem %s27, %s1122
      %p1124 = scmp.lt.s32.totalorder %s77, 1
      %s1125 = scalar_select %p1124, %s77, 1
      %s1126 = smul.addr %s1125, 4
      %s1127 = smul.addr %s1126, 8
      %s1128 = scalar_lea.vmem %s29, %s1127
      %p1129 = scmp.lt.s32.totalorder %s77, 1
      %s1130 = scalar_select %p1129, %s77, 1
      %s1131 = scalar_lea.vmem %s31, %s1130
      %p1132 = scmp.lt.s32.totalorder %s77, 1
      %s1133 = scalar_select %p1132, %s77, 1
      %s1134 = smul.addr %s1133, 4
      %s1135 = smul.addr %s1134, 8
      %s1136 = scalar_lea.vmem %s33, %s1135
      %p1137 = scmp.lt.s32.totalorder %s77, 1
      %s1138 = scalar_select %p1137, %s77, 1
      %s1139 = scalar_lea.vmem %s35, %s1138
      %p1140 = scmp.lt.s32.totalorder %s77, 1
      %s1141 = scalar_select %p1140, %s77, 1
      %s1142 = scalar_lea.vmem %s37, %s1141
      %p1143 = scmp.lt.s32.totalorder %s77, 1
      %s1144 = scalar_select %p1143, %s77, 1
      %s1145 = scalar_lea.vmem %s39, %s1144
      %p1146 = scmp.lt.s32.totalorder %s77, 1
      %s1147 = scalar_select %p1146, %s77, 1
      %s1148 = smul.addr %s1147, 4
      %s1149 = smul.addr %s1148, 8
      %s1150 = scalar_lea.vmem %s41, %s1149
      %p1151 = scmp.lt.s32.totalorder %s77, 1
      %s1152 = scalar_select %p1151, %s77, 1
      %s1153 = scalar_lea.vmem %s43, %s1152
      %p1154 = scmp.lt.s32.totalorder %s77, 1
      %s1155 = scalar_select %p1154, %s77, 1
      %s1156 = smul.addr %s1155, 8
      %s1157 = smul.addr %s1156, 8
      %s1158 = scalar_lea.vmem %s45, %s1157
      %p1159 = scmp.lt.s32.totalorder %s77, 1
      %s1160 = scalar_select %p1159, %s77, 1
      %s1161 = scalar_lea.vmem %s47, %s1160
      %p1162 = scmp.lt.s32.totalorder %s76, 1
      %s1163 = scalar_select %p1162, %s76, 1
      %s1164 = scalar_lea.vmem %s61, %s1163
      %p1165 = scmp.eq.s32.totalorder %s77, 0
      // Predicated region
      $region141: #{_lambda_.1} parent=139 // pred_check
        %p1166 = pneg %p1165
      $region142: #{_lambda_.1} parent=139 // pred_check_branch
        %1168 = sbr.rel (%p1166) target = $region144
      $region143: #{_lambda_.1} parent=139 // pred_region
        %v1169 = vld [vmem:[%s1109] sm:$0xff]
        %v1170 = vld [vmem:[%s1109 + $0x8] sm:$0xff]
        %v1171 = vld [vmem:[%s1109 + $0x10] sm:$0xff]
        %v1172 = vld [vmem:[%s1109 + $0x18] sm:$0xff]
        %v1173 = vld [vmem:[%s1109 + $0x20] sm:$0xff]
        %v1174 = vld [vmem:[%s1109 + $0x28] sm:$0xff]
        %v1175 = vld [vmem:[%s1109 + $0x30] sm:$0xff]
        %v1176 = vld [vmem:[%s1109 + $0x38] sm:$0xff]
        %v1177 = vld [vmem:[%s1109 + $0x40] sm:$0xff]
        %v1178 = vld [vmem:[%s1109 + $0x48] sm:$0xff]
        %v1179 = vld [vmem:[%s1109 + $0x50] sm:$0xff]
        %v1180 = vld [vmem:[%s3] sm:$0xff]
        %v1181 = vld [vmem:[%s5] sm:$0xff]
        %1183 = vset.pattern.permute.xlu0 0
        %1184 = vperm.xlu0 %1183, %v1181
        %v1185 = vpop.permute.xlu0 %1184
        %vm1187 = vcmask 719872
        %v1189 = vsel %vm1187, %v1180, 0
        %1191 = vmatprep.subr.mxu0 0.0
        %1192 = vmatpush1.msra.mxu0 %v1169
        %1193 = vmatprep.subr.mxu0 0.0
        %1194 = vmatpush1.msra.mxu0 %v1170
        %1195 = vmatprep.subr.mxu0 0.0
        %1196 = vmatpush1.msra.mxu0 %v1171
        %1197 = vmatprep.subr.mxu0 0.0
        %1198 = vmatpush1.msra.mxu0 %v1172
        %1199 = vmatprep.subr.mxu0 0.0
        %1200 = vmatpush1.msra.mxu0 %v1173
        %1201 = vmatprep.subr.mxu0 0.0
        %1202 = vmatpush1.msra.mxu0 %v1174
        %1203 = vmatprep.subr.mxu0 0.0
        %1204 = vmatpush1.msra.mxu0 %v1175
        %1205 = vmatprep.subr.mxu0 0.0
        %1206 = vmatpush1.msra.mxu0 %v1176
        %1207 = vmatprep.subr.mxu0 0.0
        %1208 = vmatpush1.msra.mxu0 %v1177
        %1209 = vmatprep.subr.mxu0 0.0
        %1210 = vmatpush1.msra.mxu0 %v1178
        %1211 = vmatprep.subr.mxu0 0.0
        %1212 = vmatpush1.msra.mxu0 %v1179
        %1213 = vmatprep.subr.mxu0 0.0
        %1214 = vmatpush1.msra.mxu0 0.0
        %1215 = vmatprep.subr.mxu0 0.0
        %1216 = vmatpush1.msra.mxu0 0.0
        %1217 = vmatprep.subr.mxu0 0.0
        %1218 = vmatpush1.msra.mxu0 0.0
        %1219 = vmatprep.subr.mxu0 0.0
        %1220 = vmatpush1.msra.mxu0 0.0
        %1221 = vmatprep.subr.mxu0 0.0
        %1222 = vmatpush1.msra.mxu0 0.0
        %1223 = vmatprep.subr.mxu0 0.0
        %1224 = vmatpush1.msra.mxu0 0.0
        %1225 = vmatprep.subr.mxu0 0.0
        %1226 = vmatpush1.msra.mxu0 0.0
        %1227 = vmatprep.subr.mxu0 0.0
        %1228 = vmatpush1.msra.mxu0 0.0
        %1229 = vmatprep.subr.mxu0 0.0
        %1230 = vmatpush1.msra.mxu0 0.0
        %1231 = vmatprep.subr.mxu0 0.0
        %1232 = vmatpush1.msra.mxu0 0.0
        %1233 = vmatprep.subr.mxu0 0.0
        %1234 = vmatpush1.msra.mxu0 0.0
        %1235 = vmatprep.subr.mxu0 0.0
        %1236 = vmatpush1.msra.mxu0 0.0
        %1237 = vmatprep.subr.mxu0 0.0
        %1238 = vmatpush1.msra.mxu0 0.0
        %1239 = vmatprep.subr.mxu0 0.0
        %1240 = vmatpush1.msra.mxu0 0.0
        %1241 = vmatprep.subr.mxu0 0.0
        %1242 = vmatpush1.msra.mxu0 0.0
        %1243 = vmatprep.subr.mxu0 0.0
        %1244 = vmatpush1.msra.mxu0 0.0
        %1245 = vmatprep.subr.mxu0 0.0
        %1246 = vmatpush1.msra.mxu0 0.0
        %1247 = vmatprep.subr.mxu0 0.0
        %1248 = vmatpush1.msra.mxu0 0.0
        %1249 = vmatprep.subr.mxu0 0.0
        %1250 = vmatpush1.msra.mxu0 0.0
        %1251 = vmatprep.subr.mxu0 0.0
        %1252 = vmatpush1.msra.mxu0 0.0
        %1253 = vmatprep.subr.mxu0 0.0
        %1254 = vmatpush1.msra.mxu0 0.0
        %1255 = vmatprep.mubr.f32.mxu0 0.0
        %1256 = vmatmul.mubr.f32.gmra.mrb[0].mxu0 %v1189
        %v1257 = vpop.f32.mrb[0].mxu0
        %v1258 = vadd.f32 %v1185, %v1257
        %v1259 = vpop.f32.mrb[0].mxu0
        %1260 = vdwg.mxu0
        %v1261 = vmax.f32 %v1258, 0.0
        %v1262 = vld [vmem:[%s7] sm:$0xff]
        %v1263 = vld [vmem:[%s7 + $0x8] sm:$0xff]
        %v1264 = vld [vmem:[%s7 + $0x10] sm:$0xff]
        %v1265 = vld [vmem:[%s7 + $0x18] sm:$0xff]
        %v1266 = vld [vmem:[%s7 + $0x20] sm:$0xff]
        %v1267 = vld [vmem:[%s7 + $0x28] sm:$0xff]
        %v1268 = vld [vmem:[%s7 + $0x30] sm:$0xff]
        %v1269 = vld [vmem:[%s7 + $0x38] sm:$0xff]
        %v1270 = vld [vmem:[%s7 + $0x40] sm:$0x3f]
        %vm1271 = vcmask 572416
        %v1273 = vsel %vm1271, %v1261, 0
        %vm1275 = vcmask 1045504
        %v1277 = vsel %vm1275, %v1270, 0
        %1279 = vmatprep.subr.mxu0 0.0
        %1280 = vmatpush1.msra.mxu0 %v1262
        %1281 = vmatprep.subr.mxu0 0.0
        %1282 = vmatpush1.msra.mxu0 %v1263
        %1283 = vmatprep.subr.mxu0 0.0
        %1284 = vmatpush1.msra.mxu0 %v1264
        %1285 = vmatprep.subr.mxu0 0.0
        %1286 = vmatpush1.msra.mxu0 %v1265
        %1287 = vmatprep.subr.mxu0 0.0
        %1288 = vmatpush1.msra.mxu0 %v1266
        %1289 = vmatprep.subr.mxu0 0.0
        %1290 = vmatpush1.msra.mxu0 %v1267
        %1291 = vmatprep.subr.mxu0 0.0
        %1292 = vmatpush1.msra.mxu0 %v1268
        %1293 = vmatprep.subr.mxu0 0.0
        %1294 = vmatpush1.msra.mxu0 %v1269
        %1295 = vmatprep.subr.mxu0 0.0
        %1296 = vmatpush1.msra.mxu0 %v1277
        %1297 = vmatprep.subr.mxu0 0.0
        %1298 = vmatpush1.msra.mxu0 0.0
        %1299 = vmatprep.subr.mxu0 0.0
        %1300 = vmatpush1.msra.mxu0 0.0
        %1301 = vmatprep.subr.mxu0 0.0
        %1302 = vmatpush1.msra.mxu0 0.0
        %1303 = vmatprep.subr.mxu0 0.0
        %1304 = vmatpush1.msra.mxu0 0.0
        %1305 = vmatprep.subr.mxu0 0.0
        %1306 = vmatpush1.msra.mxu0 0.0
        %1307 = vmatprep.subr.mxu0 0.0
        %1308 = vmatpush1.msra.mxu0 0.0
        %1309 = vmatprep.subr.mxu0 0.0
        %1310 = vmatpush1.msra.mxu0 0.0
        %1311 = vmatprep.subr.mxu0 0.0
        %1312 = vmatpush1.msra.mxu0 0.0
        %1313 = vmatprep.subr.mxu0 0.0
        %1314 = vmatpush1.msra.mxu0 0.0
        %1315 = vmatprep.subr.mxu0 0.0
        %1316 = vmatpush1.msra.mxu0 0.0
        %1317 = vmatprep.subr.mxu0 0.0
        %1318 = vmatpush1.msra.mxu0 0.0
        %1319 = vmatprep.subr.mxu0 0.0
        %1320 = vmatpush1.msra.mxu0 0.0
        %1321 = vmatprep.subr.mxu0 0.0
        %1322 = vmatpush1.msra.mxu0 0.0
        %1323 = vmatprep.subr.mxu0 0.0
        %1324 = vmatpush1.msra.mxu0 0.0
        %1325 = vmatprep.subr.mxu0 0.0
        %1326 = vmatpush1.msra.mxu0 0.0
        %1327 = vmatprep.subr.mxu0 0.0
        %1328 = vmatpush1.msra.mxu0 0.0
        %1329 = vmatprep.subr.mxu0 0.0
        %1330 = vmatpush1.msra.mxu0 0.0
        %1331 = vmatprep.subr.mxu0 0.0
        %1332 = vmatpush1.msra.mxu0 0.0
        %1333 = vmatprep.subr.mxu0 0.0
        %1334 = vmatpush1.msra.mxu0 0.0
        %1335 = vmatprep.subr.mxu0 0.0
        %1336 = vmatpush1.msra.mxu0 0.0
        %1337 = vmatprep.subr.mxu0 0.0
        %1338 = vmatpush1.msra.mxu0 0.0
        %1339 = vmatprep.subr.mxu0 0.0
        %1340 = vmatpush1.msra.mxu0 0.0
        %1341 = vmatprep.subr.mxu0 0.0
        %1342 = vmatpush1.msra.mxu0 0.0
        %1343 = vmatprep.mubr.f32.mxu0 0.0
        %1344 = vmatmul.mubr.f32.gmra.mrb[0].mxu0 %v1273
        %v1345 = vpop.f32.mrb[0].mxu0
        %v1346 = vadd.f32 0.0, %v1345
        %v1347 = vpop.f32.mrb[0].mxu0
        %1348 = vdwg.mxu0
        %v1349 = vld [vmem:[%s9] sm:$0xff]
        %v1350 = vld [vmem:[%s9 + $0x8] sm:$0xff]
        %v1351 = vld [vmem:[%s9 + $0x10] sm:$0xff]
        %v1352 = vld [vmem:[%s9 + $0x18] sm:$0xff]
        %v1353 = vld [vmem:[%s9 + $0x20] sm:$0xff]
        %v1354 = vld [vmem:[%s9 + $0x28] sm:$0xff]
        %v1355 = vld [vmem:[%s9 + $0x30] sm:$0xff]
        %v1356 = vld [vmem:[%s9 + $0x38] sm:$0xff]
        %v1357 = vld [vmem:[%s9 + $0x40] sm:$0x3f]
        %v1359 = vsel %vm1275, %v1357, 0
        %1361 = vmatprep.subr.mxu0 0.0
        %1362 = vmatpush1.msra.mxu0 %v1349
        %1363 = vmatprep.subr.mxu0 0.0
        %1364 = vmatpush1.msra.mxu0 %v1350
        %1365 = vmatprep.subr.mxu0 0.0
        %1366 = vmatpush1.msra.mxu0 %v1351
        %1367 = vmatprep.subr.mxu0 0.0
        %1368 = vmatpush1.msra.mxu0 %v1352
        %1369 = vmatprep.subr.mxu0 0.0
        %1370 = vmatpush1.msra.mxu0 %v1353
        %1371 = vmatprep.subr.mxu0 0.0
        %1372 = vmatpush1.msra.mxu0 %v1354
        %1373 = vmatprep.subr.mxu0 0.0
        %1374 = vmatpush1.msra.mxu0 %v1355
        %1375 = vmatprep.subr.mxu0 0.0
        %1376 = vmatpush1.msra.mxu0 %v1356
        %1377 = vmatprep.subr.mxu0 0.0
        %1378 = vmatpush1.msra.mxu0 %v1359
        %1379 = vmatprep.subr.mxu0 0.0
        %1380 = vmatpush1.msra.mxu0 0.0
        %1381 = vmatprep.subr.mxu0 0.0
        %1382 = vmatpush1.msra.mxu0 0.0
        %1383 = vmatprep.subr.mxu0 0.0
        %1384 = vmatpush1.msra.mxu0 0.0
        %1385 = vmatprep.subr.mxu0 0.0
        %1386 = vmatpush1.msra.mxu0 0.0
        %1387 = vmatprep.subr.mxu0 0.0
        %1388 = vmatpush1.msra.mxu0 0.0
        %1389 = vmatprep.subr.mxu0 0.0
        %1390 = vmatpush1.msra.mxu0 0.0
        %1391 = vmatprep.subr.mxu0 0.0
        %1392 = vmatpush1.msra.mxu0 0.0
        %1393 = vmatprep.subr.mxu0 0.0
        %1394 = vmatpush1.msra.mxu0 0.0
        %1395 = vmatprep.subr.mxu0 0.0
        %1396 = vmatpush1.msra.mxu0 0.0
        %1397 = vmatprep.subr.mxu0 0.0
        %1398 = vmatpush1.msra.mxu0 0.0
        %1399 = vmatprep.subr.mxu0 0.0
        %1400 = vmatpush1.msra.mxu0 0.0
        %1401 = vmatprep.subr.mxu0 0.0
        %1402 = vmatpush1.msra.mxu0 0.0
        %1403 = vmatprep.subr.mxu0 0.0
        %1404 = vmatpush1.msra.mxu0 0.0
        %1405 = vmatprep.subr.mxu0 0.0
        %1406 = vmatpush1.msra.mxu0 0.0
        %1407 = vmatprep.subr.mxu0 0.0
        %1408 = vmatpush1.msra.mxu0 0.0
        %1409 = vmatprep.subr.mxu0 0.0
        %1410 = vmatpush1.msra.mxu0 0.0
        %1411 = vmatprep.subr.mxu0 0.0
        %1412 = vmatpush1.msra.mxu0 0.0
        %1413 = vmatprep.subr.mxu0 0.0
        %1414 = vmatpush1.msra.mxu0 0.0
        %1415 = vmatprep.subr.mxu0 0.0
        %1416 = vmatpush1.msra.mxu0 0.0
        %1417 = vmatprep.subr.mxu0 0.0
        %1418 = vmatpush1.msra.mxu0 0.0
        %1419 = vmatprep.subr.mxu0 0.0
        %1420 = vmatpush1.msra.mxu0 0.0
        %1421 = vmatprep.subr.mxu0 0.0
        %1422 = vmatpush1.msra.mxu0 0.0
        %1423 = vmatprep.subr.mxu0 0.0
        %1424 = vmatpush1.msra.mxu0 0.0
        %1425 = vmatprep.mubr.f32.mxu0 0.0
        %1426 = vmatmul.mubr.f32.gmra.mrb[0].mxu0 %v1273
        %v1427 = vpop.f32.mrb[0].mxu0
        %v1428 = vadd.f32 0.0, %v1427
        %v1429 = vpop.f32.mrb[0].mxu0
        %1430 = vdwg.mxu0
        %v1431 = vmax.f32 %v1346, %v1428
        %1433 = vrot.lane.b32.xlu0 %v1431, 127
        %v1434 = vpop.permute.xlu0 %1433
        %1436 = vrot.lane.b32.xlu0 %v1431, 126
        %v1437 = vpop.permute.xlu0 %1436
        %1439 = vrot.lane.b32.xlu0 %v1431, 125
        %v1440 = vpop.permute.xlu0 %1439
        %v1442 = vld [vmem:[%s11] sm:$0xff]
        %v1443 = vld [vmem:[%s13] sm:$0xff]
        %1445 = vset.pattern.permute.xlu0 0
        %1446 = vperm.xlu0 %1445, %v1443
        %v1447 = vpop.permute.xlu0 %1446
        %vm1449 = vcmask 261120
        %v1451 = vsel %vm1449, %v1442, 0
        %1453 = vmatprep.subr.mxu0 0.0
        %1454 = vmatpush1.msra.mxu0 %v1431
        %1455 = vmatprep.subr.mxu0 0.0
        %1456 = vmatpush1.msra.mxu0 %v1434
        %1457 = vmatprep.subr.mxu0 0.0
        %1458 = vmatpush1.msra.mxu0 %v1437
        %1459 = vmatprep.subr.mxu0 0.0
        %1460 = vmatpush1.msra.mxu0 %v1440
        %1461 = vmatprep.subr.mxu0 0.0
        %1462 = vmatpush1.msra.mxu0 0.0
        %1463 = vmatprep.subr.mxu0 0.0
        %1464 = vmatpush1.msra.mxu0 0.0
        %1465 = vmatprep.subr.mxu0 0.0
        %1466 = vmatpush1.msra.mxu0 0.0
        %1467 = vmatprep.subr.mxu0 0.0
        %1468 = vmatpush1.msra.mxu0 0.0
        %1469 = vmatprep.subr.mxu0 0.0
        %1470 = vmatpush1.msra.mxu0 0.0
        %1471 = vmatprep.subr.mxu0 0.0
        %1472 = vmatpush1.msra.mxu0 0.0
        %1473 = vmatprep.subr.mxu0 0.0
        %1474 = vmatpush1.msra.mxu0 0.0
        %1475 = vmatprep.subr.mxu0 0.0
        %1476 = vmatpush1.msra.mxu0 0.0
        %1477 = vmatprep.subr.mxu0 0.0
        %1478 = vmatpush1.msra.mxu0 0.0
        %1479 = vmatprep.subr.mxu0 0.0
        %1480 = vmatpush1.msra.mxu0 0.0
        %1481 = vmatprep.subr.mxu0 0.0
        %1482 = vmatpush1.msra.mxu0 0.0
        %1483 = vmatprep.subr.mxu0 0.0
        %1484 = vmatpush1.msra.mxu0 0.0
        %1485 = vmatprep.subr.mxu0 0.0
        %1486 = vmatpush1.msra.mxu0 0.0
        %1487 = vmatprep.subr.mxu0 0.0
        %1488 = vmatpush1.msra.mxu0 0.0
        %1489 = vmatprep.subr.mxu0 0.0
        %1490 = vmatpush1.msra.mxu0 0.0
        %1491 = vmatprep.subr.mxu0 0.0
        %1492 = vmatpush1.msra.mxu0 0.0
        %1493 = vmatprep.subr.mxu0 0.0
        %1494 = vmatpush1.msra.mxu0 0.0
        %1495 = vmatprep.subr.mxu0 0.0
        %1496 = vmatpush1.msra.mxu0 0.0
        %1497 = vmatprep.subr.mxu0 0.0
        %1498 = vmatpush1.msra.mxu0 0.0
        %1499 = vmatprep.subr.mxu0 0.0
        %1500 = vmatpush1.msra.mxu0 0.0
        %1501 = vmatprep.subr.mxu0 0.0
        %1502 = vmatpush1.msra.mxu0 0.0
        %1503 = vmatprep.subr.mxu0 0.0
        %1504 = vmatpush1.msra.mxu0 0.0
        %1505 = vmatprep.subr.mxu0 0.0
        %1506 = vmatpush1.msra.mxu0 0.0
        %1507 = vmatprep.subr.mxu0 0.0
        %1508 = vmatpush1.msra.mxu0 0.0
        %1509 = vmatprep.subr.mxu0 0.0
        %1510 = vmatpush1.msra.mxu0 0.0
        %1511 = vmatprep.subr.mxu0 0.0
        %1512 = vmatpush1.msra.mxu0 0.0
        %1513 = vmatprep.subr.mxu0 0.0
        %1514 = vmatpush1.msra.mxu0 0.0
        %1515 = vmatprep.subr.mxu0 0.0
        %1516 = vmatpush1.msra.mxu0 0.0
        %1517 = vmatprep.mubr.f32.mxu0 0.0
        %1518 = vmatmul.mubr.f32.gmra.mrb[0].mxu0 %v1451
        %v1519 = vpop.f32.mrb[0].mxu0
        %v1520 = vadd.f32 %v1447, %v1519
        %v1521 = vpop.f32.mrb[0].mxu0
        %1522 = vdwg.mxu0
        %v1523 = vld [vmem:[%s15] sm:$0xff]
        %v1524 = vld [vmem:[%s15 + $0x8] sm:$0xff]
        %v1525 = vld [vmem:[%s15 + $0x10] sm:$0xff]
        %v1526 = vld [vmem:[%s15 + $0x18] sm:$0xff]
        %v1528 = vsel %vm1449, %v1520, 0
        %1530 = vmatprep.subr.mxu0 0.0
        %1531 = vmatpush1.msra.mxu0 %v1523
        %1532 = vmatprep.subr.mxu0 0.0
        %1533 = vmatpush1.msra.mxu0 %v1524
        %1534 = vmatprep.subr.mxu0 0.0
        %1535 = vmatpush1.msra.mxu0 %v1525
        %1536 = vmatprep.subr.mxu0 0.0
        %1537 = vmatpush1.msra.mxu0 %v1526
        %1538 = vmatprep.subr.mxu0 0.0
        %1539 = vmatpush1.msra.mxu0 0.0
        %1540 = vmatprep.subr.mxu0 0.0
        %1541 = vmatpush1.msra.mxu0 0.0
        %1542 = vmatprep.subr.mxu0 0.0
        %1543 = vmatpush1.msra.mxu0 0.0
        %1544 = vmatprep.subr.mxu0 0.0
        %1545 = vmatpush1.msra.mxu0 0.0
        %1546 = vmatprep.subr.mxu0 0.0
        %1547 = vmatpush1.msra.mxu0 0.0
        %1548 = vmatprep.subr.mxu0 0.0
        %1549 = vmatpush1.msra.mxu0 0.0
        %1550 = vmatprep.subr.mxu0 0.0
        %1551 = vmatpush1.msra.mxu0 0.0
        %1552 = vmatprep.subr.mxu0 0.0
        %1553 = vmatpush1.msra.mxu0 0.0
        %1554 = vmatprep.subr.mxu0 0.0
        %1555 = vmatpush1.msra.mxu0 0.0
        %1556 = vmatprep.subr.mxu0 0.0
        %1557 = vmatpush1.msra.mxu0 0.0
        %1558 = vmatprep.subr.mxu0 0.0
        %1559 = vmatpush1.msra.mxu0 0.0
        %1560 = vmatprep.subr.mxu0 0.0
        %1561 = vmatpush1.msra.mxu0 0.0
        %1562 = vmatprep.subr.mxu0 0.0
        %1563 = vmatpush1.msra.mxu0 0.0
        %1564 = vmatprep.subr.mxu0 0.0
        %1565 = vmatpush1.msra.mxu0 0.0
        %1566 = vmatprep.subr.mxu0 0.0
        %1567 = vmatpush1.msra.mxu0 0.0
        %1568 = vmatprep.subr.mxu0 0.0
        %1569 = vmatpush1.msra.mxu0 0.0
        %1570 = vmatprep.subr.mxu0 0.0
        %1571 = vmatpush1.msra.mxu0 0.0
        %1572 = vmatprep.subr.mxu0 0.0
        %1573 = vmatpush1.msra.mxu0 0.0
        %1574 = vmatprep.subr.mxu0 0.0
        %1575 = vmatpush1.msra.mxu0 0.0
        %1576 = vmatprep.subr.mxu0 0.0
        %1577 = vmatpush1.msra.mxu0 0.0
        %1578 = vmatprep.subr.mxu0 0.0
        %1579 = vmatpush1.msra.mxu0 0.0
        %1580 = vmatprep.subr.mxu0 0.0
        %1581 = vmatpush1.msra.mxu0 0.0
        %1582 = vmatprep.subr.mxu0 0.0
        %1583 = vmatpush1.msra.mxu0 0.0
        %1584 = vmatprep.subr.mxu0 0.0
        %1585 = vmatpush1.msra.mxu0 0.0
        %1586 = vmatprep.subr.mxu0 0.0
        %1587 = vmatpush1.msra.mxu0 0.0
        %1588 = vmatprep.subr.mxu0 0.0
        %1589 = vmatpush1.msra.mxu0 0.0
        %1590 = vmatprep.subr.mxu0 0.0
        %1591 = vmatpush1.msra.mxu0 0.0
        %1592 = vmatprep.subr.mxu0 0.0
        %1593 = vmatpush1.msra.mxu0 0.0
        %1594 = vmatprep.mubr.f32.mxu0 0.0
        %1595 = vmatmul.mubr.f32.gmra.mrb[0].mxu0 %v1528
        %v1596 = vpop.f32.mrb[0].mxu0
        %v1597 = vadd.f32 0.0, %v1596
        %v1598 = vpop.f32.mrb[0].mxu0
        %1599 = vdwg.mxu0
        %v1600 = vmax.f32 %v1597, 0.0
        %v1601 = vld [vmem:[%s17] sm:$0xff]
        %vm1602 = vcmask 64512
        %v1604 = vsel %vm1602, %v1601, 0
        %1606 = vmatprep.subr.mxu0 0.0
        %1607 = vmatpush1.msra.mxu0 %v1600
        %1608 = vmatprep.subr.mxu0 0.0
        %1609 = vmatpush1.msra.mxu0 0.0
        %1610 = vmatprep.subr.mxu0 0.0
        %1611 = vmatpush1.msra.mxu0 0.0
        %1612 = vmatprep.subr.mxu0 0.0
        %1613 = vmatpush1.msra.mxu0 0.0
        %1614 = vmatprep.subr.mxu0 0.0
        %1615 = vmatpush1.msra.mxu0 0.0
        %1616 = vmatprep.subr.mxu0 0.0
        %1617 = vmatpush1.msra.mxu0 0.0
        %1618 = vmatprep.subr.mxu0 0.0
        %1619 = vmatpush1.msra.mxu0 0.0
        %1620 = vmatprep.subr.mxu0 0.0
        %1621 = vmatpush1.msra.mxu0 0.0
        %1622 = vmatprep.subr.mxu0 0.0
        %1623 = vmatpush1.msra.mxu0 0.0
        %1624 = vmatprep.subr.mxu0 0.0
        %1625 = vmatpush1.msra.mxu0 0.0
        %1626 = vmatprep.subr.mxu0 0.0
        %1627 = vmatpush1.msra.mxu0 0.0
        %1628 = vmatprep.subr.mxu0 0.0
        %1629 = vmatpush1.msra.mxu0 0.0
        %1630 = vmatprep.subr.mxu0 0.0
        %1631 = vmatpush1.msra.mxu0 0.0
        %1632 = vmatprep.subr.mxu0 0.0
        %1633 = vmatpush1.msra.mxu0 0.0
        %1634 = vmatprep.subr.mxu0 0.0
        %1635 = vmatpush1.msra.mxu0 0.0
        %1636 = vmatprep.subr.mxu0 0.0
        %1637 = vmatpush1.msra.mxu0 0.0
        %1638 = vmatprep.subr.mxu0 0.0
        %1639 = vmatpush1.msra.mxu0 0.0
        %1640 = vmatprep.subr.mxu0 0.0
        %1641 = vmatpush1.msra.mxu0 0.0
        %1642 = vmatprep.subr.mxu0 0.0
        %1643 = vmatpush1.msra.mxu0 0.0
        %1644 = vmatprep.subr.mxu0 0.0
        %1645 = vmatpush1.msra.mxu0 0.0
        %1646 = vmatprep.subr.mxu0 0.0
        %1647 = vmatpush1.msra.mxu0 0.0
        %1648 = vmatprep.subr.mxu0 0.0
        %1649 = vmatpush1.msra.mxu0 0.0
        %1650 = vmatprep.subr.mxu0 0.0
        %1651 = vmatpush1.msra.mxu0 0.0
        %1652 = vmatprep.subr.mxu0 0.0
        %1653 = vmatpush1.msra.mxu0 0.0
        %1654 = vmatprep.subr.mxu0 0.0
        %1655 = vmatpush1.msra.mxu0 0.0
        %1656 = vmatprep.subr.mxu0 0.0
        %1657 = vmatpush1.msra.mxu0 0.0
        %1658 = vmatprep.subr.mxu0 0.0
        %1659 = vmatpush1.msra.mxu0 0.0
        %1660 = vmatprep.subr.mxu0 0.0
        %1661 = vmatpush1.msra.mxu0 0.0
        %1662 = vmatprep.subr.mxu0 0.0
        %1663 = vmatpush1.msra.mxu0 0.0
        %1664 = vmatprep.subr.mxu0 0.0
        %1665 = vmatpush1.msra.mxu0 0.0
        %1666 = vmatprep.subr.mxu0 0.0
        %1667 = vmatpush1.msra.mxu0 0.0
        %1668 = vmatprep.subr.mxu0 0.0
        %1669 = vmatpush1.msra.mxu0 0.0
        %1670 = vmatprep.mubr.f32.mxu0 0.0
        %1671 = vmatmul.mubr.f32.gmra.mrb[0].mxu0 %v1604
        %v1672 = vpop.f32.mrb[0].mxu0
        %v1673 = vadd.f32 0.0, %v1672
        %v1674 = vpop.f32.mrb[0].mxu0
        %1675 = vdwg.mxu0
        %1676 = vst.msk [vmem:[#allocation2] sm:$0xff] %vm1449, %v1673
        %vm1677 = vcmp.eq.f32.partialorder %v1673, 0.0
        %v1678 = vsel %vm1677, 1, 0
        %v1679 = vcvt.s32.f32 %v1678
        %vm1680 = vcmask 7168
        %v1682 = vsel %vm1680, 1.0, 0
        %v1685 = vsel %vm1680, %v1679, 0
        %1687 = vmatprep.subr.mxu0 0.0
        %1688 = vmatpush1.xpose.msra.mxu0 %v1685
        %1689 = vmatprep.subr.mxu0 0.0
        %1690 = vmatpush1.xpose.msra.mxu0 0.0
        %1691 = vmatprep.subr.mxu0 0.0
        %1692 = vmatpush1.xpose.msra.mxu0 0.0
        %1693 = vmatprep.subr.mxu0 0.0
        %1694 = vmatpush1.xpose.msra.mxu0 0.0
        %1695 = vmatprep.subr.mxu0 0.0
        %1696 = vmatpush1.xpose.msra.mxu0 0.0
        %1697 = vmatprep.subr.mxu0 0.0
        %1698 = vmatpush1.xpose.msra.mxu0 0.0
        %1699 = vmatprep.subr.mxu0 0.0
        %1700 = vmatpush1.xpose.msra.mxu0 0.0
        %1701 = vmatprep.subr.mxu0 0.0
        %1702 = vmatpush1.xpose.msra.mxu0 0.0
        %1703 = vmatprep.subr.mxu0 0.0
        %1704 = vmatpush1.xpose.msra.mxu0 0.0
        %1705 = vmatprep.subr.mxu0 0.0
        %1706 = vmatpush1.xpose.msra.mxu0 0.0
        %1707 = vmatprep.subr.mxu0 0.0
        %1708 = vmatpush1.xpose.msra.mxu0 0.0
        %1709 = vmatprep.subr.mxu0 0.0
        %1710 = vmatpush1.xpose.msra.mxu0 0.0
        %1711 = vmatprep.subr.mxu0 0.0
        %1712 = vmatpush1.xpose.msra.mxu0 0.0
        %1713 = vmatprep.subr.mxu0 0.0
        %1714 = vmatpush1.xpose.msra.mxu0 0.0
        %1715 = vmatprep.subr.mxu0 0.0
        %1716 = vmatpush1.xpose.msra.mxu0 0.0
        %1717 = vmatprep.subr.mxu0 0.0
        %1718 = vmatpush1.xpose.msra.mxu0 0.0
        %1719 = vmatprep.subr.mxu0 0.0
        %1720 = vmatpush1.xpose.msra.mxu0 0.0
        %1721 = vmatprep.subr.mxu0 0.0
        %1722 = vmatpush1.xpose.msra.mxu0 0.0
        %1723 = vmatprep.subr.mxu0 0.0
        %1724 = vmatpush1.xpose.msra.mxu0 0.0
        %1725 = vmatprep.subr.mxu0 0.0
        %1726 = vmatpush1.xpose.msra.mxu0 0.0
        %1727 = vmatprep.subr.mxu0 0.0
        %1728 = vmatpush1.xpose.msra.mxu0 0.0
        %1729 = vmatprep.subr.mxu0 0.0
        %1730 = vmatpush1.xpose.msra.mxu0 0.0
        %1731 = vmatprep.subr.mxu0 0.0
        %1732 = vmatpush1.xpose.msra.mxu0 0.0
        %1733 = vmatprep.subr.mxu0 0.0
        %1734 = vmatpush1.xpose.msra.mxu0 0.0
        %1735 = vmatprep.subr.mxu0 0.0
        %1736 = vmatpush1.xpose.msra.mxu0 0.0
        %1737 = vmatprep.subr.mxu0 0.0
        %1738 = vmatpush1.xpose.msra.mxu0 0.0
        %1739 = vmatprep.subr.mxu0 0.0
        %1740 = vmatpush1.xpose.msra.mxu0 0.0
        %1741 = vmatprep.subr.mxu0 0.0
        %1742 = vmatpush1.xpose.msra.mxu0 0.0
        %1743 = vmatprep.subr.mxu0 0.0
        %1744 = vmatpush1.xpose.msra.mxu0 0.0
        %1745 = vmatprep.subr.mxu0 0.0
        %1746 = vmatpush1.xpose.msra.mxu0 0.0
        %1747 = vmatprep.subr.mxu0 0.0
        %1748 = vmatpush1.xpose.msra.mxu0 0.0
        %1749 = vmatprep.subr.mxu0 0.0
        %1750 = vmatpush1.xpose.msra.mxu0 0.0
        %1751 = vmatprep.mubr.f32.mxu0 0.0
        %1752 = vmatmul.mubr.f32.gmra.mrb[0].mxu0 %v1682
        %v1753 = vpop.f32.mrb[0].mxu0
        %v1754 = vadd.f32 0.0, %v1753
        %v1755 = vpop.f32.mrb[0].mxu0
        %1756 = vdwg.mxu0
        %1757 = vst.msk [vmem:[#allocation3] sm:$0xff] %vm1602, %v1754
      $region144: #{_lambda_.1} parent=139 // pred_fallthru
        _
      %v1758 = vld [vmem:[#allocation2] sm:$0xff]
      %v1759 = vld [vmem:[#allocation3] sm:$0xff]
      %v1760 = vld [vmem:[%s19] sm:$0xf]
      %v1761 = vld [vmem:[%s1112] sm:$0x1]
      %v1762 = vld [vmem:[%s1115] sm:$0x1]
      %vm1763 = vcmask 261120
      %v1764 = vsel %vm1763, %v1758, 0.0
      %1765 = vadd.xlane.f32.xlu0 %v1764
      %v1766 = vpop.xlane.xlu0 %1765
      %v1767 = vrcp.pop 32.0
      %v1768 = vmul.f32 %v1766, %v1767
      %v1769 = vsub.f32 %v1758, %v1768
      %v1770 = vmul.f32 %v1769, %v1769
      %v1771 = vsel %vm1763, %v1770, 0.0
      %1772 = vadd.xlane.f32.xlu0 %v1771
      %v1773 = vpop.xlane.xlu0 %1772
      %v1774 = vmul.f32 %v1773, %v1767
      %v1775 = vadd.f32 %v1774, 1e-05
      %v1776 = vrsqrt.pop %v1775
      %v1777 = vmul.f32 %v1769, %v1776
      %v1779 = vlaneseq
      %v1780 = vshrl.u32 %v1779, 7
      %v1781 = vsub.s32 0, %v1780
      %v1782 = vrot.slane %v1761, %v1781
      %v1784 = vmul.f32 %v1777, %v1782
      %v1786 = vlaneseq
      %v1787 = vshrl.u32 %v1786, 7
      %v1788 = vsub.s32 0, %v1787
      %v1789 = vrot.slane %v1762, %v1788
      %v1791 = vadd.f32 %v1784, %v1789
      %v1792 = vld [vmem:[%s1120] sm:$0xff]
      %v1793 = vld [vmem:[%s1120 + $0x8] sm:$0xff]
      %v1794 = vld [vmem:[%s1120 + $0x10] sm:$0xff]
      %v1795 = vld [vmem:[%s1120 + $0x18] sm:$0xff]
      %v1796 = vld [vmem:[%s1123] sm:$0x1]
      %v1798 = vlaneseq
      %v1799 = vshrl.u32 %v1798, 7
      %v1800 = vsub.s32 0, %v1799
      %v1801 = vrot.slane %v1796, %v1800
      %v1804 = vsel %vm1763, %v1791, 0
      %1806 = vmatprep.subr.mxu0 0.0
      %1807 = vmatpush1.msra.mxu0 %v1792
      %1808 = vmatprep.subr.mxu0 0.0
      %1809 = vmatpush1.msra.mxu0 %v1793
      %1810 = vmatprep.subr.mxu0 0.0
      %1811 = vmatpush1.msra.mxu0 %v1794
      %1812 = vmatprep.subr.mxu0 0.0
      %1813 = vmatpush1.msra.mxu0 %v1795
      %1814 = vmatprep.subr.mxu0 0.0
      %1815 = vmatpush1.msra.mxu0 0.0
      %1816 = vmatprep.subr.mxu0 0.0
      %1817 = vmatpush1.msra.mxu0 0.0
      %1818 = vmatprep.subr.mxu0 0.0
      %1819 = vmatpush1.msra.mxu0 0.0
      %1820 = vmatprep.subr.mxu0 0.0
      %1821 = vmatpush1.msra.mxu0 0.0
      %1822 = vmatprep.subr.mxu0 0.0
      %1823 = vmatpush1.msra.mxu0 0.0
      %1824 = vmatprep.subr.mxu0 0.0
      %1825 = vmatpush1.msra.mxu0 0.0
      %1826 = vmatprep.subr.mxu0 0.0
      %1827 = vmatpush1.msra.mxu0 0.0
      %1828 = vmatprep.subr.mxu0 0.0
      %1829 = vmatpush1.msra.mxu0 0.0
      %1830 = vmatprep.subr.mxu0 0.0
      %1831 = vmatpush1.msra.mxu0 0.0
      %1832 = vmatprep.subr.mxu0 0.0
      %1833 = vmatpush1.msra.mxu0 0.0
      %1834 = vmatprep.subr.mxu0 0.0
      %1835 = vmatpush1.msra.mxu0 0.0
      %1836 = vmatprep.subr.mxu0 0.0
      %1837 = vmatpush1.msra.mxu0 0.0
      %1838 = vmatprep.subr.mxu0 0.0
      %1839 = vmatpush1.msra.mxu0 0.0
      %1840 = vmatprep.subr.mxu0 0.0
      %1841 = vmatpush1.msra.mxu0 0.0
      %1842 = vmatprep.subr.mxu0 0.0
      %1843 = vmatpush1.msra.mxu0 0.0
      %1844 = vmatprep.subr.mxu0 0.0
      %1845 = vmatpush1.msra.mxu0 0.0
      %1846 = vmatprep.subr.mxu0 0.0
      %1847 = vmatpush1.msra.mxu0 0.0
      %1848 = vmatprep.subr.mxu0 0.0
      %1849 = vmatpush1.msra.mxu0 0.0
      %1850 = vmatprep.subr.mxu0 0.0
      %1851 = vmatpush1.msra.mxu0 0.0
      %1852 = vmatprep.subr.mxu0 0.0
      %1853 = vmatpush1.msra.mxu0 0.0
      %1854 = vmatprep.subr.mxu0 0.0
      %1855 = vmatpush1.msra.mxu0 0.0
      %1856 = vmatprep.subr.mxu0 0.0
      %1857 = vmatpush1.msra.mxu0 0.0
      %1858 = vmatprep.subr.mxu0 0.0
      %1859 = vmatpush1.msra.mxu0 0.0
      %1860 = vmatprep.subr.mxu0 0.0
      %1861 = vmatpush1.msra.mxu0 0.0
      %1862 = vmatprep.subr.mxu0 0.0
      %1863 = vmatpush1.msra.mxu0 0.0
      %1864 = vmatprep.subr.mxu0 0.0
      %1865 = vmatpush1.msra.mxu0 0.0
      %1866 = vmatprep.subr.mxu0 0.0
      %1867 = vmatpush1.msra.mxu0 0.0
      %1868 = vmatprep.subr.mxu0 0.0
      %1869 = vmatpush1.msra.mxu0 0.0
      %1870 = vmatprep.mubr.f32.mxu0 0.0
      %1871 = vmatmul.mubr.f32.gmra.mrb[0].mxu0 %v1804
      %v1872 = vpop.f32.mrb[0].mxu0
      %v1873 = vadd.f32 %v1801, %v1872
      %v1874 = vpop.f32.mrb[0].mxu0
      %1875 = vdwg.mxu0
      %v1876 = vld [vmem:[%s1128] sm:$0xff]
      %v1877 = vld [vmem:[%s1128 + $0x8] sm:$0xff]
      %v1878 = vld [vmem:[%s1128 + $0x10] sm:$0xff]
      %v1879 = vld [vmem:[%s1128 + $0x18] sm:$0xff]
      %v1880 = vld [vmem:[%s1131] sm:$0x1]
      %v1882 = vlaneseq
      %v1883 = vshrl.u32 %v1882, 7
      %v1884 = vsub.s32 0, %v1883
      %v1885 = vrot.slane %v1880, %v1884
      %1887 = vmatprep.subr.mxu0 0.0
      %1888 = vmatpush1.msra.mxu0 %v1876
      %1889 = vmatprep.subr.mxu0 0.0
      %1890 = vmatpush1.msra.mxu0 %v1877
      %1891 = vmatprep.subr.mxu0 0.0
      %1892 = vmatpush1.msra.mxu0 %v1878
      %1893 = vmatprep.subr.mxu0 0.0
      %1894 = vmatpush1.msra.mxu0 %v1879
      %1895 = vmatprep.subr.mxu0 0.0
      %1896 = vmatpush1.msra.mxu0 0.0
      %1897 = vmatprep.subr.mxu0 0.0
      %1898 = vmatpush1.msra.mxu0 0.0
      %1899 = vmatprep.subr.mxu0 0.0
      %1900 = vmatpush1.msra.mxu0 0.0
      %1901 = vmatprep.subr.mxu0 0.0
      %1902 = vmatpush1.msra.mxu0 0.0
      %1903 = vmatprep.subr.mxu0 0.0
      %1904 = vmatpush1.msra.mxu0 0.0
      %1905 = vmatprep.subr.mxu0 0.0
      %1906 = vmatpush1.msra.mxu0 0.0
      %1907 = vmatprep.subr.mxu0 0.0
      %1908 = vmatpush1.msra.mxu0 0.0
      %1909 = vmatprep.subr.mxu0 0.0
      %1910 = vmatpush1.msra.mxu0 0.0
      %1911 = vmatprep.subr.mxu0 0.0
      %1912 = vmatpush1.msra.mxu0 0.0
      %1913 = vmatprep.subr.mxu0 0.0
      %1914 = vmatpush1.msra.mxu0 0.0
      %1915 = vmatprep.subr.mxu0 0.0
      %1916 = vmatpush1.msra.mxu0 0.0
      %1917 = vmatprep.subr.mxu0 0.0
      %1918 = vmatpush1.msra.mxu0 0.0
      %1919 = vmatprep.subr.mxu0 0.0
      %1920 = vmatpush1.msra.mxu0 0.0
      %1921 = vmatprep.subr.mxu0 0.0
      %1922 = vmatpush1.msra.mxu0 0.0
      %1923 = vmatprep.subr.mxu0 0.0
      %1924 = vmatpush1.msra.mxu0 0.0
      %1925 = vmatprep.subr.mxu0 0.0
      %1926 = vmatpush1.msra.mxu0 0.0
      %1927 = vmatprep.subr.mxu0 0.0
      %1928 = vmatpush1.msra.mxu0 0.0
      %1929 = vmatprep.subr.mxu0 0.0
      %1930 = vmatpush1.msra.mxu0 0.0
      %1931 = vmatprep.subr.mxu0 0.0
      %1932 = vmatpush1.msra.mxu0 0.0
      %1933 = vmatprep.subr.mxu0 0.0
      %1934 = vmatpush1.msra.mxu0 0.0
      %1935 = vmatprep.subr.mxu0 0.0
      %1936 = vmatpush1.msra.mxu0 0.0
      %1937 = vmatprep.subr.mxu0 0.0
      %1938 = vmatpush1.msra.mxu0 0.0
      %1939 = vmatprep.subr.mxu0 0.0
      %1940 = vmatpush1.msra.mxu0 0.0
      %1941 = vmatprep.subr.mxu0 0.0
      %1942 = vmatpush1.msra.mxu0 0.0
      %1943 = vmatprep.subr.mxu0 0.0
      %1944 = vmatpush1.msra.mxu0 0.0
      %1945 = vmatprep.subr.mxu0 0.0
      %1946 = vmatpush1.msra.mxu0 0.0
      %1947 = vmatprep.subr.mxu0 0.0
      %1948 = vmatpush1.msra.mxu0 0.0
      %1949 = vmatprep.subr.mxu0 0.0
      %1950 = vmatpush1.msra.mxu0 0.0
      %1951 = vmatprep.mubr.f32.mxu0 0.0
      %1952 = vmatmul.mubr.f32.gmra.mrb[0].mxu0 %v1804
      %v1953 = vpop.f32.mrb[0].mxu0
      %v1954 = vadd.f32 %v1885, %v1953
      %v1955 = vpop.f32.mrb[0].mxu0
      %1956 = vdwg.mxu0
      %v1957 = vld [vmem:[%s1136] sm:$0xff]
      %v1958 = vld [vmem:[%s1136 + $0x8] sm:$0xff]
      %v1959 = vld [vmem:[%s1136 + $0x10] sm:$0xff]
      %v1960 = vld [vmem:[%s1136 + $0x18] sm:$0xff]
      %v1961 = vld [vmem:[%s1139] sm:$0x1]
      %v1963 = vlaneseq
      %v1964 = vshrl.u32 %v1963, 7
      %v1965 = vsub.s32 0, %v1964
      %v1966 = vrot.slane %v1961, %v1965
      %1968 = vmatprep.subr.mxu0 0.0
      %1969 = vmatpush1.msra.mxu0 %v1957
      %1970 = vmatprep.subr.mxu0 0.0
      %1971 = vmatpush1.msra.mxu0 %v1958
      %1972 = vmatprep.subr.mxu0 0.0
      %1973 = vmatpush1.msra.mxu0 %v1959
      %1974 = vmatprep.subr.mxu0 0.0
      %1975 = vmatpush1.msra.mxu0 %v1960
      %1976 = vmatprep.subr.mxu0 0.0
      %1977 = vmatpush1.msra.mxu0 0.0
      %1978 = vmatprep.subr.mxu0 0.0
      %1979 = vmatpush1.msra.mxu0 0.0
      %1980 = vmatprep.subr.mxu0 0.0
      %1981 = vmatpush1.msra.mxu0 0.0
      %1982 = vmatprep.subr.mxu0 0.0
      %1983 = vmatpush1.msra.mxu0 0.0
      %1984 = vmatprep.subr.mxu0 0.0
      %1985 = vmatpush1.msra.mxu0 0.0
      %1986 = vmatprep.subr.mxu0 0.0
      %1987 = vmatpush1.msra.mxu0 0.0
      %1988 = vmatprep.subr.mxu0 0.0
      %1989 = vmatpush1.msra.mxu0 0.0
      %1990 = vmatprep.subr.mxu0 0.0
      %1991 = vmatpush1.msra.mxu0 0.0
      %1992 = vmatprep.subr.mxu0 0.0
      %1993 = vmatpush1.msra.mxu0 0.0
      %1994 = vmatprep.subr.mxu0 0.0
      %1995 = vmatpush1.msra.mxu0 0.0
      %1996 = vmatprep.subr.mxu0 0.0
      %1997 = vmatpush1.msra.mxu0 0.0
      %1998 = vmatprep.subr.mxu0 0.0
      %1999 = vmatpush1.msra.mxu0 0.0
      %2000 = vmatprep.subr.mxu0 0.0
      %2001 = vmatpush1.msra.mxu0 0.0
      %2002 = vmatprep.subr.mxu0 0.0
      %2003 = vmatpush1.msra.mxu0 0.0
      %2004 = vmatprep.subr.mxu0 0.0
      %2005 = vmatpush1.msra.mxu0 0.0
      %2006 = vmatprep.subr.mxu0 0.0
      %2007 = vmatpush1.msra.mxu0 0.0
      %2008 = vmatprep.subr.mxu0 0.0
      %2009 = vmatpush1.msra.mxu0 0.0
      %2010 = vmatprep.subr.mxu0 0.0
      %2011 = vmatpush1.msra.mxu0 0.0
      %2012 = vmatprep.subr.mxu0 0.0
      %2013 = vmatpush1.msra.mxu0 0.0
      %2014 = vmatprep.subr.mxu0 0.0
      %2015 = vmatpush1.msra.mxu0 0.0
      %2016 = vmatprep.subr.mxu0 0.0
      %2017 = vmatpush1.msra.mxu0 0.0
      %2018 = vmatprep.subr.mxu0 0.0
      %2019 = vmatpush1.msra.mxu0 0.0
      %2020 = vmatprep.subr.mxu0 0.0
      %2021 = vmatpush1.msra.mxu0 0.0
      %2022 = vmatprep.subr.mxu0 0.0
      %2023 = vmatpush1.msra.mxu0 0.0
      %2024 = vmatprep.subr.mxu0 0.0
      %2025 = vmatpush1.msra.mxu0 0.0
      %2026 = vmatprep.subr.mxu0 0.0
      %2027 = vmatpush1.msra.mxu0 0.0
      %2028 = vmatprep.subr.mxu0 0.0
      %2029 = vmatpush1.msra.mxu0 0.0
      %2030 = vmatprep.subr.mxu0 0.0
      %2031 = vmatpush1.msra.mxu0 0.0
      %2032 = vmatprep.mubr.f32.mxu0 0.0
      %2033 = vmatmul.mubr.f32.gmra.mrb[0].mxu0 %v1804
      %v2034 = vpop.f32.mrb[0].mxu0
      %v2035 = vadd.f32 %v1966, %v2034
      %v2036 = vpop.f32.mrb[0].mxu0
      %2037 = vdwg.mxu0
      %v2038 = vlaneseq
      %v2039 = vshrl.u32 %v2038, 7
      %v2040 = vsub.s32 0, %v2039
      %v2041 = vrot.slane %v1760, %v2040
      %v2042 = vmul.f32 %v1873, %v2041
      %v2044 = vsel %vm1763, %v2042, 0
      %v2047 = vsel %vm1763, %v1954, 0
      %2049 = vmatprep.subr.mxu0 0.0
      %2050 = vmatpush1.xpose.msra.mxu0 %v2047
      %2051 = vmatprep.subr.mxu0 0.0
      %2052 = vmatpush1.xpose.msra.mxu0 0.0
      %2053 = vmatprep.subr.mxu0 0.0
      %2054 = vmatpush1.xpose.msra.mxu0 0.0
      %2055 = vmatprep.subr.mxu0 0.0
      %2056 = vmatpush1.xpose.msra.mxu0 0.0
      %2057 = vmatprep.subr.mxu0 0.0
      %2058 = vmatpush1.xpose.msra.mxu0 0.0
      %2059 = vmatprep.subr.mxu0 0.0
      %2060 = vmatpush1.xpose.msra.mxu0 0.0
      %2061 = vmatprep.subr.mxu0 0.0
      %2062 = vmatpush1.xpose.msra.mxu0 0.0
      %2063 = vmatprep.subr.mxu0 0.0
      %2064 = vmatpush1.xpose.msra.mxu0 0.0
      %2065 = vmatprep.subr.mxu0 0.0
      %2066 = vmatpush1.xpose.msra.mxu0 0.0
      %2067 = vmatprep.subr.mxu0 0.0
      %2068 = vmatpush1.xpose.msra.mxu0 0.0
      %2069 = vmatprep.subr.mxu0 0.0
      %2070 = vmatpush1.xpose.msra.mxu0 0.0
      %2071 = vmatprep.subr.mxu0 0.0
      %2072 = vmatpush1.xpose.msra.mxu0 0.0
      %2073 = vmatprep.subr.mxu0 0.0
      %2074 = vmatpush1.xpose.msra.mxu0 0.0
      %2075 = vmatprep.subr.mxu0 0.0
      %2076 = vmatpush1.xpose.msra.mxu0 0.0
      %2077 = vmatprep.subr.mxu0 0.0
      %2078 = vmatpush1.xpose.msra.mxu0 0.0
      %2079 = vmatprep.subr.mxu0 0.0
      %2080 = vmatpush1.xpose.msra.mxu0 0.0
      %2081 = vmatprep.subr.mxu0 0.0
      %2082 = vmatpush1.xpose.msra.mxu0 0.0
      %2083 = vmatprep.subr.mxu0 0.0
      %2084 = vmatpush1.xpose.msra.mxu0 0.0
      %2085 = vmatprep.subr.mxu0 0.0
      %2086 = vmatpush1.xpose.msra.mxu0 0.0
      %2087 = vmatprep.subr.mxu0 0.0
      %2088 = vmatpush1.xpose.msra.mxu0 0.0
      %2089 = vmatprep.subr.mxu0 0.0
      %2090 = vmatpush1.xpose.msra.mxu0 0.0
      %2091 = vmatprep.subr.mxu0 0.0
      %2092 = vmatpush1.xpose.msra.mxu0 0.0
      %2093 = vmatprep.subr.mxu0 0.0
      %2094 = vmatpush1.xpose.msra.mxu0 0.0
      %2095 = vmatprep.subr.mxu0 0.0
      %2096 = vmatpush1.xpose.msra.mxu0 0.0
      %2097 = vmatprep.subr.mxu0 0.0
      %2098 = vmatpush1.xpose.msra.mxu0 0.0
      %2099 = vmatprep.subr.mxu0 0.0
      %2100 = vmatpush1.xpose.msra.mxu0 0.0
      %2101 = vmatprep.subr.mxu0 0.0
      %2102 = vmatpush1.xpose.msra.mxu0 0.0
      %2103 = vmatprep.subr.mxu0 0.0
      %2104 = vmatpush1.xpose.msra.mxu0 0.0
      %2105 = vmatprep.subr.mxu0 0.0
      %2106 = vmatpush1.xpose.msra.mxu0 0.0
      %2107 = vmatprep.subr.mxu0 0.0
      %2108 = vmatpush1.xpose.msra.mxu0 0.0
      %2109 = vmatprep.subr.mxu0 0.0
      %2110 = vmatpush1.xpose.msra.mxu0 0.0
      %2111 = vmatprep.subr.mxu0 0.0
      %2112 = vmatpush1.xpose.msra.mxu0 0.0
      %2113 = vmatprep.mubr.f32.mxu0 0.0
      %2114 = vmatmul.mubr.f32.gmra.mrb[0].mxu0 %v2044
      %v2115 = vpop.f32.mrb[0].mxu0
      %v2116 = vadd.f32 0.0, %v2115
      %v2117 = vpop.f32.mrb[0].mxu0
      %2118 = vdwg.mxu0
      %v2119 = vmul.f32 %v2116, 0.35355338
      %vm2120 = vcmp.gt.f32.partialorder %v1759, 0.5
      %v2121 = vsel %vm2120, -1e+10, %v2119
      %vm2122 = vcmask 64512
      %v2123 = vsel %vm2122, %v2121, -inf
      %2124 = vmax.xlane.f32.xlu0 %v2123
      %v2125 = vpop.xlane.xlu0 %2124
      %v2126 = vsub.f32 %v2121, %v2125
      %v2127 = vmul.f32 %v2126, 1.442695
      %v2128 = vpow.pop %v2127
      %v2129 = vsel %vm2122, %v2128, 0.0
      %2130 = vadd.xlane.f32.xlu0 %v2129
      %v2131 = vpop.xlane.xlu0 %2130
      %v2132 = vrcp.pop %v2131
      %v2133 = vmul.f32 %v2128, %v2132
      %v2134 = vmul.f32 %v2035, %v2041
      %v2135 = vlaneseq
      %v2136 = vshrl.u32 %v2135, 7
      %v2137 = vsub.s32 1, %v2136
      %v2138 = vrot.slane %v1760, %v2137
      %v2139 = vmul.f32 %v1873, %v2138
      %v2141 = vsel %vm1763, %v2139, 0
      %2143 = vmatprep.subr.mxu0 0.0
      %2144 = vmatpush1.xpose.msra.mxu0 %v2047
      %2145 = vmatprep.subr.mxu0 0.0
      %2146 = vmatpush1.xpose.msra.mxu0 0.0
      %2147 = vmatprep.subr.mxu0 0.0
      %2148 = vmatpush1.xpose.msra.mxu0 0.0
      %2149 = vmatprep.subr.mxu0 0.0
      %2150 = vmatpush1.xpose.msra.mxu0 0.0
      %2151 = vmatprep.subr.mxu0 0.0
      %2152 = vmatpush1.xpose.msra.mxu0 0.0
      %2153 = vmatprep.subr.mxu0 0.0
      %2154 = vmatpush1.xpose.msra.mxu0 0.0
      %2155 = vmatprep.subr.mxu0 0.0
      %2156 = vmatpush1.xpose.msra.mxu0 0.0
      %2157 = vmatprep.subr.mxu0 0.0
      %2158 = vmatpush1.xpose.msra.mxu0 0.0
      %2159 = vmatprep.subr.mxu0 0.0
      %2160 = vmatpush1.xpose.msra.mxu0 0.0
      %2161 = vmatprep.subr.mxu0 0.0
      %2162 = vmatpush1.xpose.msra.mxu0 0.0
      %2163 = vmatprep.subr.mxu0 0.0
      %2164 = vmatpush1.xpose.msra.mxu0 0.0
      %2165 = vmatprep.subr.mxu0 0.0
      %2166 = vmatpush1.xpose.msra.mxu0 0.0
      %2167 = vmatprep.subr.mxu0 0.0
      %2168 = vmatpush1.xpose.msra.mxu0 0.0
      %2169 = vmatprep.subr.mxu0 0.0
      %2170 = vmatpush1.xpose.msra.mxu0 0.0
      %2171 = vmatprep.subr.mxu0 0.0
      %2172 = vmatpush1.xpose.msra.mxu0 0.0
      %2173 = vmatprep.subr.mxu0 0.0
      %2174 = vmatpush1.xpose.msra.mxu0 0.0
      %2175 = vmatprep.subr.mxu0 0.0
      %2176 = vmatpush1.xpose.msra.mxu0 0.0
      %2177 = vmatprep.subr.mxu0 0.0
      %2178 = vmatpush1.xpose.msra.mxu0 0.0
      %2179 = vmatprep.subr.mxu0 0.0
      %2180 = vmatpush1.xpose.msra.mxu0 0.0
      %2181 = vmatprep.subr.mxu0 0.0
      %2182 = vmatpush1.xpose.msra.mxu0 0.0
      %2183 = vmatprep.subr.mxu0 0.0
      %2184 = vmatpush1.xpose.msra.mxu0 0.0
      %2185 = vmatprep.subr.mxu0 0.0
      %2186 = vmatpush1.xpose.msra.mxu0 0.0
      %2187 = vmatprep.subr.mxu0 0.0
      %2188 = vmatpush1.xpose.msra.mxu0 0.0
      %2189 = vmatprep.subr.mxu0 0.0
      %2190 = vmatpush1.xpose.msra.mxu0 0.0
      %2191 = vmatprep.subr.mxu0 0.0
      %2192 = vmatpush1.xpose.msra.mxu0 0.0
      %2193 = vmatprep.subr.mxu0 0.0
      %2194 = vmatpush1.xpose.msra.mxu0 0.0
      %2195 = vmatprep.subr.mxu0 0.0
      %2196 = vmatpush1.xpose.msra.mxu0 0.0
      %2197 = vmatprep.subr.mxu0 0.0
      %2198 = vmatpush1.xpose.msra.mxu0 0.0
      %2199 = vmatprep.subr.mxu0 0.0
      %2200 = vmatpush1.xpose.msra.mxu0 0.0
      %2201 = vmatprep.subr.mxu0 0.0
      %2202 = vmatpush1.xpose.msra.mxu0 0.0
      %2203 = vmatprep.subr.mxu0 0.0
      %2204 = vmatpush1.xpose.msra.mxu0 0.0
      %2205 = vmatprep.subr.mxu0 0.0
      %2206 = vmatpush1.xpose.msra.mxu0 0.0
      %2207 = vmatprep.mubr.f32.mxu0 0.0
      %2208 = vmatmul.mubr.f32.gmra.mrb[0].mxu0 %v2141
      %v2209 = vpop.f32.mrb[0].mxu0
      %v2210 = vadd.f32 0.0, %v2209
      %v2211 = vpop.f32.mrb[0].mxu0
      %2212 = vdwg.mxu0
      %v2213 = vmul.f32 %v2210, 0.35355338
      %v2214 = vsel %vm2120, -1e+10, %v2213
      %v2215 = vsel %vm2122, %v2214, -inf
      %2216 = vmax.xlane.f32.xlu0 %v2215
      %v2217 = vpop.xlane.xlu0 %2216
      %v2218 = vsub.f32 %v2214, %v2217
      %v2219 = vmul.f32 %v2218, 1.442695
      %v2220 = vpow.pop %v2219
      %v2221 = vsel %vm2122, %v2220, 0.0
      %2222 = vadd.xlane.f32.xlu0 %v2221
      %v2223 = vpop.xlane.xlu0 %2222
      %v2224 = vrcp.pop %v2223
      %v2225 = vmul.f32 %v2220, %v2224
      %v2226 = vmul.f32 %v2035, %v2138
      %v2228 = vsel %vm2122, %v2225, 0
      %2230 = vmatprep.subr.mxu0 0.0
      %2231 = vmatpush1.msra.mxu0 %v2226
      %2232 = vmatprep.subr.mxu0 0.0
      %2233 = vmatpush1.msra.mxu0 0.0
      %2234 = vmatprep.subr.mxu0 0.0
      %2235 = vmatpush1.msra.mxu0 0.0
      %2236 = vmatprep.subr.mxu0 0.0
      %2237 = vmatpush1.msra.mxu0 0.0
      %2238 = vmatprep.subr.mxu0 0.0
      %2239 = vmatpush1.msra.mxu0 0.0
      %2240 = vmatprep.subr.mxu0 0.0
      %2241 = vmatpush1.msra.mxu0 0.0
      %2242 = vmatprep.subr.mxu0 0.0
      %2243 = vmatpush1.msra.mxu0 0.0
      %2244 = vmatprep.subr.mxu0 0.0
      %2245 = vmatpush1.msra.mxu0 0.0
      %2246 = vmatprep.subr.mxu0 0.0
      %2247 = vmatpush1.msra.mxu0 0.0
      %2248 = vmatprep.subr.mxu0 0.0
      %2249 = vmatpush1.msra.mxu0 0.0
      %2250 = vmatprep.subr.mxu0 0.0
      %2251 = vmatpush1.msra.mxu0 0.0
      %2252 = vmatprep.subr.mxu0 0.0
      %2253 = vmatpush1.msra.mxu0 0.0
      %2254 = vmatprep.subr.mxu0 0.0
      %2255 = vmatpush1.msra.mxu0 0.0
      %2256 = vmatprep.subr.mxu0 0.0
      %2257 = vmatpush1.msra.mxu0 0.0
      %2258 = vmatprep.subr.mxu0 0.0
      %2259 = vmatpush1.msra.mxu0 0.0
      %2260 = vmatprep.subr.mxu0 0.0
      %2261 = vmatpush1.msra.mxu0 0.0
      %2262 = vmatprep.subr.mxu0 0.0
      %2263 = vmatpush1.msra.mxu0 0.0
      %2264 = vmatprep.subr.mxu0 0.0
      %2265 = vmatpush1.msra.mxu0 0.0
      %2266 = vmatprep.subr.mxu0 0.0
      %2267 = vmatpush1.msra.mxu0 0.0
      %2268 = vmatprep.subr.mxu0 0.0
      %2269 = vmatpush1.msra.mxu0 0.0
      %2270 = vmatprep.subr.mxu0 0.0
      %2271 = vmatpush1.msra.mxu0 0.0
      %2272 = vmatprep.subr.mxu0 0.0
      %2273 = vmatpush1.msra.mxu0 0.0
      %2274 = vmatprep.subr.mxu0 0.0
      %2275 = vmatpush1.msra.mxu0 0.0
      %2276 = vmatprep.subr.mxu0 0.0
      %2277 = vmatpush1.msra.mxu0 0.0
      %2278 = vmatprep.subr.mxu0 0.0
      %2279 = vmatpush1.msra.mxu0 0.0
      %2280 = vmatprep.subr.mxu0 0.0
      %2281 = vmatpush1.msra.mxu0 0.0
      %2282 = vmatprep.subr.mxu0 0.0
      %2283 = vmatpush1.msra.mxu0 0.0
      %2284 = vmatprep.subr.mxu0 0.0
      %2285 = vmatpush1.msra.mxu0 0.0
      %2286 = vmatprep.subr.mxu0 0.0
      %2287 = vmatpush1.msra.mxu0 0.0
      %2288 = vmatprep.subr.mxu0 0.0
      %2289 = vmatpush1.msra.mxu0 0.0
      %2290 = vmatprep.subr.mxu0 0.0
      %2291 = vmatpush1.msra.mxu0 0.0
      %2292 = vmatprep.subr.mxu0 0.0
      %2293 = vmatpush1.msra.mxu0 0.0
      %2294 = vmatprep.mubr.f32.mxu0 0.0
      %2295 = vmatmul.mubr.f32.gmra.mrb[0].mxu0 %v2228
      %v2296 = vpop.f32.mrb[0].mxu0
      %v2297 = vadd.f32 0.0, %v2296
      %v2298 = vpop.f32.mrb[0].mxu0
      %2299 = vdwg.mxu0
      %v2301 = vsel %vm2122, %v2133, 0
      %2303 = vmatprep.subr.mxu0 0.0
      %2304 = vmatpush1.msra.mxu0 %v2134
      %2305 = vmatprep.subr.mxu0 0.0
      %2306 = vmatpush1.msra.mxu0 0.0
      %2307 = vmatprep.subr.mxu0 0.0
      %2308 = vmatpush1.msra.mxu0 0.0
      %2309 = vmatprep.subr.mxu0 0.0
      %2310 = vmatpush1.msra.mxu0 0.0
      %2311 = vmatprep.subr.mxu0 0.0
      %2312 = vmatpush1.msra.mxu0 0.0
      %2313 = vmatprep.subr.mxu0 0.0
      %2314 = vmatpush1.msra.mxu0 0.0
      %2315 = vmatprep.subr.mxu0 0.0
      %2316 = vmatpush1.msra.mxu0 0.0
      %2317 = vmatprep.subr.mxu0 0.0
      %2318 = vmatpush1.msra.mxu0 0.0
      %2319 = vmatprep.subr.mxu0 0.0
      %2320 = vmatpush1.msra.mxu0 0.0
      %2321 = vmatprep.subr.mxu0 0.0
      %2322 = vmatpush1.msra.mxu0 0.0
      %2323 = vmatprep.subr.mxu0 0.0
      %2324 = vmatpush1.msra.mxu0 0.0
      %2325 = vmatprep.subr.mxu0 0.0
      %2326 = vmatpush1.msra.mxu0 0.0
      %2327 = vmatprep.subr.mxu0 0.0
      %2328 = vmatpush1.msra.mxu0 0.0
      %2329 = vmatprep.subr.mxu0 0.0
      %2330 = vmatpush1.msra.mxu0 0.0
      %2331 = vmatprep.subr.mxu0 0.0
      %2332 = vmatpush1.msra.mxu0 0.0
      %2333 = vmatprep.subr.mxu0 0.0
      %2334 = vmatpush1.msra.mxu0 0.0
      %2335 = vmatprep.subr.mxu0 0.0
      %2336 = vmatpush1.msra.mxu0 0.0
      %2337 = vmatprep.subr.mxu0 0.0
      %2338 = vmatpush1.msra.mxu0 0.0
      %2339 = vmatprep.subr.mxu0 0.0
      %2340 = vmatpush1.msra.mxu0 0.0
      %2341 = vmatprep.subr.mxu0 0.0
      %2342 = vmatpush1.msra.mxu0 0.0
      %2343 = vmatprep.subr.mxu0 0.0
      %2344 = vmatpush1.msra.mxu0 0.0
      %2345 = vmatprep.subr.mxu0 0.0
      %2346 = vmatpush1.msra.mxu0 0.0
      %2347 = vmatprep.subr.mxu0 0.0
      %2348 = vmatpush1.msra.mxu0 0.0
      %2349 = vmatprep.subr.mxu0 0.0
      %2350 = vmatpush1.msra.mxu0 0.0
      %2351 = vmatprep.subr.mxu0 0.0
      %2352 = vmatpush1.msra.mxu0 0.0
      %2353 = vmatprep.subr.mxu0 0.0
      %2354 = vmatpush1.msra.mxu0 0.0
      %2355 = vmatprep.subr.mxu0 0.0
      %2356 = vmatpush1.msra.mxu0 0.0
      %2357 = vmatprep.subr.mxu0 0.0
      %2358 = vmatpush1.msra.mxu0 0.0
      %2359 = vmatprep.subr.mxu0 0.0
      %2360 = vmatpush1.msra.mxu0 0.0
      %2361 = vmatprep.subr.mxu0 0.0
      %2362 = vmatpush1.msra.mxu0 0.0
      %2363 = vmatprep.subr.mxu0 0.0
      %2364 = vmatpush1.msra.mxu0 0.0
      %2365 = vmatprep.subr.mxu0 0.0
      %2366 = vmatpush1.msra.mxu0 0.0
      %2367 = vmatprep.mubr.f32.mxu0 0.0
      %2368 = vmatmul.mubr.f32.gmra.mrb[0].mxu0 %v2301
      %v2369 = vpop.f32.mrb[0].mxu0
      %v2370 = vadd.f32 %v2297, %v2369
      %v2371 = vpop.f32.mrb[0].mxu0
      %2372 = vdwg.mxu0
      %v2373 = vlaneseq
      %v2374 = vshrl.u32 %v2373, 7
      %v2375 = vsub.s32 2, %v2374
      %v2376 = vrot.slane %v1760, %v2375
      %v2377 = vmul.f32 %v1873, %v2376
      %v2379 = vsel %vm1763, %v2377, 0
      %2381 = vmatprep.subr.mxu0 0.0
      %2382 = vmatpush1.xpose.msra.mxu0 %v2047
      %2383 = vmatprep.subr.mxu0 0.0
      %2384 = vmatpush1.xpose.msra.mxu0 0.0
      %2385 = vmatprep.subr.mxu0 0.0
      %2386 = vmatpush1.xpose.msra.mxu0 0.0
      %2387 = vmatprep.subr.mxu0 0.0
      %2388 = vmatpush1.xpose.msra.mxu0 0.0
      %2389 = vmatprep.subr.mxu0 0.0
      %2390 = vmatpush1.xpose.msra.mxu0 0.0
      %2391 = vmatprep.subr.mxu0 0.0
      %2392 = vmatpush1.xpose.msra.mxu0 0.0
      %2393 = vmatprep.subr.mxu0 0.0
      %2394 = vmatpush1.xpose.msra.mxu0 0.0
      %2395 = vmatprep.subr.mxu0 0.0
      %2396 = vmatpush1.xpose.msra.mxu0 0.0
      %2397 = vmatprep.subr.mxu0 0.0
      %2398 = vmatpush1.xpose.msra.mxu0 0.0
      %2399 = vmatprep.subr.mxu0 0.0
      %2400 = vmatpush1.xpose.msra.mxu0 0.0
      %2401 = vmatprep.subr.mxu0 0.0
      %2402 = vmatpush1.xpose.msra.mxu0 0.0
      %2403 = vmatprep.subr.mxu0 0.0
      %2404 = vmatpush1.xpose.msra.mxu0 0.0
      %2405 = vmatprep.subr.mxu0 0.0
      %2406 = vmatpush1.xpose.msra.mxu0 0.0
      %2407 = vmatprep.subr.mxu0 0.0
      %2408 = vmatpush1.xpose.msra.mxu0 0.0
      %2409 = vmatprep.subr.mxu0 0.0
      %2410 = vmatpush1.xpose.msra.mxu0 0.0
      %2411 = vmatprep.subr.mxu0 0.0
      %2412 = vmatpush1.xpose.msra.mxu0 0.0
      %2413 = vmatprep.subr.mxu0 0.0
      %2414 = vmatpush1.xpose.msra.mxu0 0.0
      %2415 = vmatprep.subr.mxu0 0.0
      %2416 = vmatpush1.xpose.msra.mxu0 0.0
      %2417 = vmatprep.subr.mxu0 0.0
      %2418 = vmatpush1.xpose.msra.mxu0 0.0
      %2419 = vmatprep.subr.mxu0 0.0
      %2420 = vmatpush1.xpose.msra.mxu0 0.0
      %2421 = vmatprep.subr.mxu0 0.0
      %2422 = vmatpush1.xpose.msra.mxu0 0.0
      %2423 = vmatprep.subr.mxu0 0.0
      %2424 = vmatpush1.xpose.msra.mxu0 0.0
      %2425 = vmatprep.subr.mxu0 0.0
      %2426 = vmatpush1.xpose.msra.mxu0 0.0
      %2427 = vmatprep.subr.mxu0 0.0
      %2428 = vmatpush1.xpose.msra.mxu0 0.0
      %2429 = vmatprep.subr.mxu0 0.0
      %2430 = vmatpush1.xpose.msra.mxu0 0.0
      %2431 = vmatprep.subr.mxu0 0.0
      %2432 = vmatpush1.xpose.msra.mxu0 0.0
      %2433 = vmatprep.subr.mxu0 0.0
      %2434 = vmatpush1.xpose.msra.mxu0 0.0
      %2435 = vmatprep.subr.mxu0 0.0
      %2436 = vmatpush1.xpose.msra.mxu0 0.0
      %2437 = vmatprep.subr.mxu0 0.0
      %2438 = vmatpush1.xpose.msra.mxu0 0.0
      %2439 = vmatprep.subr.mxu0 0.0
      %2440 = vmatpush1.xpose.msra.mxu0 0.0
      %2441 = vmatprep.subr.mxu0 0.0
      %2442 = vmatpush1.xpose.msra.mxu0 0.0
      %2443 = vmatprep.subr.mxu0 0.0
      %2444 = vmatpush1.xpose.msra.mxu0 0.0
      %2445 = vmatprep.mubr.f32.mxu0 0.0
      %2446 = vmatmul.mubr.f32.gmra.mrb[0].mxu0 %v2379
      %v2447 = vpop.f32.mrb[0].mxu0
      %v2448 = vadd.f32 0.0, %v2447
      %v2449 = vpop.f32.mrb[0].mxu0
      %2450 = vdwg.mxu0
      %v2451 = vmul.f32 %v2448, 0.35355338
      %v2452 = vsel %vm2120, -1e+10, %v2451
      %v2453 = vsel %vm2122, %v2452, -inf
      %2454 = vmax.xlane.f32.xlu0 %v2453
      %v2455 = vpop.xlane.xlu0 %2454
      %v2456 = vsub.f32 %v2452, %v2455
      %v2457 = vmul.f32 %v2456, 1.442695
      %v2458 = vpow.pop %v2457
      %v2459 = vsel %vm2122, %v2458, 0.0
      %2460 = vadd.xlane.f32.xlu0 %v2459
      %v2461 = vpop.xlane.xlu0 %2460
      %v2462 = vrcp.pop %v2461
      %v2463 = vmul.f32 %v2458, %v2462
      %v2464 = vmul.f32 %v2035, %v2376
      %v2466 = vsel %vm2122, %v2463, 0
      %2468 = vmatprep.subr.mxu0 0.0
      %2469 = vmatpush1.msra.mxu0 %v2464
      %2470 = vmatprep.subr.mxu0 0.0
      %2471 = vmatpush1.msra.mxu0 0.0
      %2472 = vmatprep.subr.mxu0 0.0
      %2473 = vmatpush1.msra.mxu0 0.0
      %2474 = vmatprep.subr.mxu0 0.0
      %2475 = vmatpush1.msra.mxu0 0.0
      %2476 = vmatprep.subr.mxu0 0.0
      %2477 = vmatpush1.msra.mxu0 0.0
      %2478 = vmatprep.subr.mxu0 0.0
      %2479 = vmatpush1.msra.mxu0 0.0
      %2480 = vmatprep.subr.mxu0 0.0
      %2481 = vmatpush1.msra.mxu0 0.0
      %2482 = vmatprep.subr.mxu0 0.0
      %2483 = vmatpush1.msra.mxu0 0.0
      %2484 = vmatprep.subr.mxu0 0.0
      %2485 = vmatpush1.msra.mxu0 0.0
      %2486 = vmatprep.subr.mxu0 0.0
      %2487 = vmatpush1.msra.mxu0 0.0
      %2488 = vmatprep.subr.mxu0 0.0
      %2489 = vmatpush1.msra.mxu0 0.0
      %2490 = vmatprep.subr.mxu0 0.0
      %2491 = vmatpush1.msra.mxu0 0.0
      %2492 = vmatprep.subr.mxu0 0.0
      %2493 = vmatpush1.msra.mxu0 0.0
      %2494 = vmatprep.subr.mxu0 0.0
      %2495 = vmatpush1.msra.mxu0 0.0
      %2496 = vmatprep.subr.mxu0 0.0
      %2497 = vmatpush1.msra.mxu0 0.0
      %2498 = vmatprep.subr.mxu0 0.0
      %2499 = vmatpush1.msra.mxu0 0.0
      %2500 = vmatprep.subr.mxu0 0.0
      %2501 = vmatpush1.msra.mxu0 0.0
      %2502 = vmatprep.subr.mxu0 0.0
      %2503 = vmatpush1.msra.mxu0 0.0
      %2504 = vmatprep.subr.mxu0 0.0
      %2505 = vmatpush1.msra.mxu0 0.0
      %2506 = vmatprep.subr.mxu0 0.0
      %2507 = vmatpush1.msra.mxu0 0.0
      %2508 = vmatprep.subr.mxu0 0.0
      %2509 = vmatpush1.msra.mxu0 0.0
      %2510 = vmatprep.subr.mxu0 0.0
      %2511 = vmatpush1.msra.mxu0 0.0
      %2512 = vmatprep.subr.mxu0 0.0
      %2513 = vmatpush1.msra.mxu0 0.0
      %2514 = vmatprep.subr.mxu0 0.0
      %2515 = vmatpush1.msra.mxu0 0.0
      %2516 = vmatprep.subr.mxu0 0.0
      %2517 = vmatpush1.msra.mxu0 0.0
      %2518 = vmatprep.subr.mxu0 0.0
      %2519 = vmatpush1.msra.mxu0 0.0
      %2520 = vmatprep.subr.mxu0 0.0
      %2521 = vmatpush1.msra.mxu0 0.0
      %2522 = vmatprep.subr.mxu0 0.0
      %2523 = vmatpush1.msra.mxu0 0.0
      %2524 = vmatprep.subr.mxu0 0.0
      %2525 = vmatpush1.msra.mxu0 0.0
      %2526 = vmatprep.subr.mxu0 0.0
      %2527 = vmatpush1.msra.mxu0 0.0
      %2528 = vmatprep.subr.mxu0 0.0
      %2529 = vmatpush1.msra.mxu0 0.0
      %2530 = vmatprep.subr.mxu0 0.0
      %2531 = vmatpush1.msra.mxu0 0.0
      %2532 = vmatprep.mubr.f32.mxu0 0.0
      %2533 = vmatmul.mubr.f32.gmra.mrb[0].mxu0 %v2466
      %v2534 = vpop.f32.mrb[0].mxu0
      %v2535 = vadd.f32 0.0, %v2534
      %v2536 = vpop.f32.mrb[0].mxu0
      %2537 = vdwg.mxu0
      %v2538 = vadd.f32 %v2370, %v2535
      %v2539 = vlaneseq
      %v2540 = vshrl.u32 %v2539, 7
      %v2541 = vsub.s32 3, %v2540
      %v2542 = vrot.slane %v1760, %v2541
      %v2543 = vmul.f32 %v1873, %v2542
      %v2545 = vsel %vm1763, %v2543, 0
      %2547 = vmatprep.subr.mxu0 0.0
      %2548 = vmatpush1.xpose.msra.mxu0 %v2047
      %2549 = vmatprep.subr.mxu0 0.0
      %2550 = vmatpush1.xpose.msra.mxu0 0.0
      %2551 = vmatprep.subr.mxu0 0.0
      %2552 = vmatpush1.xpose.msra.mxu0 0.0
      %2553 = vmatprep.subr.mxu0 0.0
      %2554 = vmatpush1.xpose.msra.mxu0 0.0
      %2555 = vmatprep.subr.mxu0 0.0
      %2556 = vmatpush1.xpose.msra.mxu0 0.0
      %2557 = vmatprep.subr.mxu0 0.0
      %2558 = vmatpush1.xpose.msra.mxu0 0.0
      %2559 = vmatprep.subr.mxu0 0.0
      %2560 = vmatpush1.xpose.msra.mxu0 0.0
      %2561 = vmatprep.subr.mxu0 0.0
      %2562 = vmatpush1.xpose.msra.mxu0 0.0
      %2563 = vmatprep.subr.mxu0 0.0
      %2564 = vmatpush1.xpose.msra.mxu0 0.0
      %2565 = vmatprep.subr.mxu0 0.0
      %2566 = vmatpush1.xpose.msra.mxu0 0.0
      %2567 = vmatprep.subr.mxu0 0.0
      %2568 = vmatpush1.xpose.msra.mxu0 0.0
      %2569 = vmatprep.subr.mxu0 0.0
      %2570 = vmatpush1.xpose.msra.mxu0 0.0
      %2571 = vmatprep.subr.mxu0 0.0
      %2572 = vmatpush1.xpose.msra.mxu0 0.0
      %2573 = vmatprep.subr.mxu0 0.0
      %2574 = vmatpush1.xpose.msra.mxu0 0.0
      %2575 = vmatprep.subr.mxu0 0.0
      %2576 = vmatpush1.xpose.msra.mxu0 0.0
      %2577 = vmatprep.subr.mxu0 0.0
      %2578 = vmatpush1.xpose.msra.mxu0 0.0
      %2579 = vmatprep.subr.mxu0 0.0
      %2580 = vmatpush1.xpose.msra.mxu0 0.0
      %2581 = vmatprep.subr.mxu0 0.0
      %2582 = vmatpush1.xpose.msra.mxu0 0.0
      %2583 = vmatprep.subr.mxu0 0.0
      %2584 = vmatpush1.xpose.msra.mxu0 0.0
      %2585 = vmatprep.subr.mxu0 0.0
      %2586 = vmatpush1.xpose.msra.mxu0 0.0
      %2587 = vmatprep.subr.mxu0 0.0
      %2588 = vmatpush1.xpose.msra.mxu0 0.0
      %2589 = vmatprep.subr.mxu0 0.0
      %2590 = vmatpush1.xpose.msra.mxu0 0.0
      %2591 = vmatprep.subr.mxu0 0.0
      %2592 = vmatpush1.xpose.msra.mxu0 0.0
      %2593 = vmatprep.subr.mxu0 0.0
      %2594 = vmatpush1.xpose.msra.mxu0 0.0
      %2595 = vmatprep.subr.mxu0 0.0
      %2596 = vmatpush1.xpose.msra.mxu0 0.0
      %2597 = vmatprep.subr.mxu0 0.0
      %2598 = vmatpush1.xpose.msra.mxu0 0.0
      %2599 = vmatprep.subr.mxu0 0.0
      %2600 = vmatpush1.xpose.msra.mxu0 0.0
      %2601 = vmatprep.subr.mxu0 0.0
      %2602 = vmatpush1.xpose.msra.mxu0 0.0
      %2603 = vmatprep.subr.mxu0 0.0
      %2604 = vmatpush1.xpose.msra.mxu0 0.0
      %2605 = vmatprep.subr.mxu0 0.0
      %2606 = vmatpush1.xpose.msra.mxu0 0.0
      %2607 = vmatprep.subr.mxu0 0.0
      %2608 = vmatpush1.xpose.msra.mxu0 0.0
      %2609 = vmatprep.subr.mxu0 0.0
      %2610 = vmatpush1.xpose.msra.mxu0 0.0
      %2611 = vmatprep.mubr.f32.mxu0 0.0
      %2612 = vmatmul.mubr.f32.gmra.mrb[0].mxu0 %v2545
      %v2613 = vpop.f32.mrb[0].mxu0
      %v2614 = vadd.f32 0.0, %v2613
      %v2615 = vpop.f32.mrb[0].mxu0
      %2616 = vdwg.mxu0
      %v2617 = vmul.f32 %v2614, 0.35355338
      %v2618 = vsel %vm2120, -1e+10, %v2617
      %v2619 = vsel %vm2122, %v2618, -inf
      %2620 = vmax.xlane.f32.xlu0 %v2619
      %v2621 = vpop.xlane.xlu0 %2620
      %v2622 = vsub.f32 %v2618, %v2621
      %v2623 = vmul.f32 %v2622, 1.442695
      %v2624 = vpow.pop %v2623
      %v2625 = vsel %vm2122, %v2624, 0.0
      %2626 = vadd.xlane.f32.xlu0 %v2625
      %v2627 = vpop.xlane.xlu0 %2626
      %v2628 = vrcp.pop %v2627
      %v2629 = vmul.f32 %v2624, %v2628
      %v2630 = vmul.f32 %v2035, %v2542
      %v2632 = vsel %vm2122, %v2629, 0
      %2634 = vmatprep.subr.mxu0 0.0
      %2635 = vmatpush1.msra.mxu0 %v2630
      %2636 = vmatprep.subr.mxu0 0.0
      %2637 = vmatpush1.msra.mxu0 0.0
      %2638 = vmatprep.subr.mxu0 0.0
      %2639 = vmatpush1.msra.mxu0 0.0
      %2640 = vmatprep.subr.mxu0 0.0
      %2641 = vmatpush1.msra.mxu0 0.0
      %2642 = vmatprep.subr.mxu0 0.0
      %2643 = vmatpush1.msra.mxu0 0.0
      %2644 = vmatprep.subr.mxu0 0.0
      %2645 = vmatpush1.msra.mxu0 0.0
      %2646 = vmatprep.subr.mxu0 0.0
      %2647 = vmatpush1.msra.mxu0 0.0
      %2648 = vmatprep.subr.mxu0 0.0
      %2649 = vmatpush1.msra.mxu0 0.0
      %2650 = vmatprep.subr.mxu0 0.0
      %2651 = vmatpush1.msra.mxu0 0.0
      %2652 = vmatprep.subr.mxu0 0.0
      %2653 = vmatpush1.msra.mxu0 0.0
      %2654 = vmatprep.subr.mxu0 0.0
      %2655 = vmatpush1.msra.mxu0 0.0
      %2656 = vmatprep.subr.mxu0 0.0
      %2657 = vmatpush1.msra.mxu0 0.0
      %2658 = vmatprep.subr.mxu0 0.0
      %2659 = vmatpush1.msra.mxu0 0.0
      %2660 = vmatprep.subr.mxu0 0.0
      %2661 = vmatpush1.msra.mxu0 0.0
      %2662 = vmatprep.subr.mxu0 0.0
      %2663 = vmatpush1.msra.mxu0 0.0
      %2664 = vmatprep.subr.mxu0 0.0
      %2665 = vmatpush1.msra.mxu0 0.0
      %2666 = vmatprep.subr.mxu0 0.0
      %2667 = vmatpush1.msra.mxu0 0.0
      %2668 = vmatprep.subr.mxu0 0.0
      %2669 = vmatpush1.msra.mxu0 0.0
      %2670 = vmatprep.subr.mxu0 0.0
      %2671 = vmatpush1.msra.mxu0 0.0
      %2672 = vmatprep.subr.mxu0 0.0
      %2673 = vmatpush1.msra.mxu0 0.0
      %2674 = vmatprep.subr.mxu0 0.0
      %2675 = vmatpush1.msra.mxu0 0.0
      %2676 = vmatprep.subr.mxu0 0.0
      %2677 = vmatpush1.msra.mxu0 0.0
      %2678 = vmatprep.subr.mxu0 0.0
      %2679 = vmatpush1.msra.mxu0 0.0
      %2680 = vmatprep.subr.mxu0 0.0
      %2681 = vmatpush1.msra.mxu0 0.0
      %2682 = vmatprep.subr.mxu0 0.0
      %2683 = vmatpush1.msra.mxu0 0.0
      %2684 = vmatprep.subr.mxu0 0.0
      %2685 = vmatpush1.msra.mxu0 0.0
      %2686 = vmatprep.subr.mxu0 0.0
      %2687 = vmatpush1.msra.mxu0 0.0
      %2688 = vmatprep.subr.mxu0 0.0
      %2689 = vmatpush1.msra.mxu0 0.0
      %2690 = vmatprep.subr.mxu0 0.0
      %2691 = vmatpush1.msra.mxu0 0.0
      %2692 = vmatprep.subr.mxu0 0.0
      %2693 = vmatpush1.msra.mxu0 0.0
      %2694 = vmatprep.subr.mxu0 0.0
      %2695 = vmatpush1.msra.mxu0 0.0
      %2696 = vmatprep.subr.mxu0 0.0
      %2697 = vmatpush1.msra.mxu0 0.0
      %2698 = vmatprep.mubr.f32.mxu0 0.0
      %2699 = vmatmul.mubr.f32.gmra.mrb[0].mxu0 %v2632
      %v2700 = vpop.f32.mrb[0].mxu0
      %v2701 = vadd.f32 0.0, %v2700
      %v2702 = vpop.f32.mrb[0].mxu0
      %2703 = vdwg.mxu0
      %v2704 = vadd.f32 %v2538, %v2701
      %v2705 = vadd.f32 %v1758, %v2704
      %v2706 = vld [vmem:[%s1142] sm:$0x1]
      %v2707 = vld [vmem:[%s1145] sm:$0x1]
      %v2708 = vsel %vm1763, %v2705, 0.0
      %2709 = vadd.xlane.f32.xlu0 %v2708
      %v2710 = vpop.xlane.xlu0 %2709
      %v2711 = vmul.f32 %v2710, %v1767
      %v2712 = vsub.f32 %v2705, %v2711
      %v2713 = vmul.f32 %v2712, %v2712
      %v2714 = vsel %vm1763, %v2713, 0.0
      %2715 = vadd.xlane.f32.xlu0 %v2714
      %v2716 = vpop.xlane.xlu0 %2715
      %v2717 = vmul.f32 %v2716, %v1767
      %v2718 = vadd.f32 %v2717, 1e-05
      %v2719 = vrsqrt.pop %v2718
      %v2720 = vmul.f32 %v2712, %v2719
      %v2722 = vlaneseq
      %v2723 = vshrl.u32 %v2722, 7
      %v2724 = vsub.s32 0, %v2723
      %v2725 = vrot.slane %v2706, %v2724
      %v2727 = vmul.f32 %v2720, %v2725
      %v2729 = vlaneseq
      %v2730 = vshrl.u32 %v2729, 7
      %v2731 = vsub.s32 0, %v2730
      %v2732 = vrot.slane %v2707, %v2731
      %v2734 = vadd.f32 %v2727, %v2732
      %v2735 = vld [vmem:[%s1150] sm:$0xff]
      %v2736 = vld [vmem:[%s1150 + $0x8] sm:$0xff]
      %v2737 = vld [vmem:[%s1150 + $0x10] sm:$0xff]
      %v2738 = vld [vmem:[%s1150 + $0x18] sm:$0xff]
      %v2739 = vld [vmem:[%s1153] sm:$0x1]
      %v2741 = vlaneseq
      %v2742 = vshrl.u32 %v2741, 7
      %v2743 = vsub.s32 0, %v2742
      %v2744 = vrot.slane %v2739, %v2743
      %v2747 = vsel %vm1763, %v2734, 0
      %2749 = vmatprep.subr.mxu0 0.0
      %2750 = vmatpush1.msra.mxu0 %v2735
      %2751 = vmatprep.subr.mxu0 0.0
      %2752 = vmatpush1.msra.mxu0 %v2736
      %2753 = vmatprep.subr.mxu0 0.0
      %2754 = vmatpush1.msra.mxu0 %v2737
      %2755 = vmatprep.subr.mxu0 0.0
      %2756 = vmatpush1.msra.mxu0 %v2738
      %2757 = vmatprep.subr.mxu0 0.0
      %2758 = vmatpush1.msra.mxu0 0.0
      %2759 = vmatprep.subr.mxu0 0.0
      %2760 = vmatpush1.msra.mxu0 0.0
      %2761 = vmatprep.subr.mxu0 0.0
      %2762 = vmatpush1.msra.mxu0 0.0
      %2763 = vmatprep.subr.mxu0 0.0
      %2764 = vmatpush1.msra.mxu0 0.0
      %2765 = vmatprep.subr.mxu0 0.0
      %2766 = vmatpush1.msra.mxu0 0.0
      %2767 = vmatprep.subr.mxu0 0.0
      %2768 = vmatpush1.msra.mxu0 0.0
      %2769 = vmatprep.subr.mxu0 0.0
      %2770 = vmatpush1.msra.mxu0 0.0
      %2771 = vmatprep.subr.mxu0 0.0
      %2772 = vmatpush1.msra.mxu0 0.0
      %2773 = vmatprep.subr.mxu0 0.0
      %2774 = vmatpush1.msra.mxu0 0.0
      %2775 = vmatprep.subr.mxu0 0.0
      %2776 = vmatpush1.msra.mxu0 0.0
      %2777 = vmatprep.subr.mxu0 0.0
      %2778 = vmatpush1.msra.mxu0 0.0
      %2779 = vmatprep.subr.mxu0 0.0
      %2780 = vmatpush1.msra.mxu0 0.0
      %2781 = vmatprep.subr.mxu0 0.0
      %2782 = vmatpush1.msra.mxu0 0.0
      %2783 = vmatprep.subr.mxu0 0.0
      %2784 = vmatpush1.msra.mxu0 0.0
      %2785 = vmatprep.subr.mxu0 0.0
      %2786 = vmatpush1.msra.mxu0 0.0
      %2787 = vmatprep.subr.mxu0 0.0
      %2788 = vmatpush1.msra.mxu0 0.0
      %2789 = vmatprep.subr.mxu0 0.0
      %2790 = vmatpush1.msra.mxu0 0.0
      %2791 = vmatprep.subr.mxu0 0.0
      %2792 = vmatpush1.msra.mxu0 0.0
      %2793 = vmatprep.subr.mxu0 0.0
      %2794 = vmatpush1.msra.mxu0 0.0
      %2795 = vmatprep.subr.mxu0 0.0
      %2796 = vmatpush1.msra.mxu0 0.0
      %2797 = vmatprep.subr.mxu0 0.0
      %2798 = vmatpush1.msra.mxu0 0.0
      %2799 = vmatprep.subr.mxu0 0.0
      %2800 = vmatpush1.msra.mxu0 0.0
      %2801 = vmatprep.subr.mxu0 0.0
      %2802 = vmatpush1.msra.mxu0 0.0
      %2803 = vmatprep.subr.mxu0 0.0
      %2804 = vmatpush1.msra.mxu0 0.0
      %2805 = vmatprep.subr.mxu0 0.0
      %2806 = vmatpush1.msra.mxu0 0.0
      %2807 = vmatprep.subr.mxu0 0.0
      %2808 = vmatpush1.msra.mxu0 0.0
      %2809 = vmatprep.subr.mxu0 0.0
      %2810 = vmatpush1.msra.mxu0 0.0
      %2811 = vmatprep.subr.mxu0 0.0
      %2812 = vmatpush1.msra.mxu0 0.0
      %2813 = vmatprep.mubr.f32.mxu0 0.0
      %2814 = vmatmul.mubr.f32.gmra.mrb[0].mxu0 %v2747
      %v2815 = vpop.f32.mrb[0].mxu0
      %v2816 = vadd.f32 %v2744, %v2815
      %v2817 = vpop.f32.mrb[0].mxu0
      %2818 = vdwg.mxu0
      %v2819 = vmax.f32 %v2816, 0.0
      %v2820 = vld [vmem:[%s1158] sm:$0xff]
      %v2821 = vld [vmem:[%s1158 + $0x8] sm:$0xff]
      %v2822 = vld [vmem:[%s1158 + $0x10] sm:$0xff]
      %v2823 = vld [vmem:[%s1158 + $0x18] sm:$0xff]
      %v2824 = vld [vmem:[%s1158 + $0x20] sm:$0xff]
      %v2825 = vld [vmem:[%s1158 + $0x28] sm:$0xff]
      %v2826 = vld [vmem:[%s1158 + $0x30] sm:$0xff]
      %v2827 = vld [vmem:[%s1158 + $0x38] sm:$0xff]
      %v2828 = vld [vmem:[%s1161] sm:$0x1]
      %v2830 = vlaneseq
      %v2831 = vshrl.u32 %v2830, 7
      %v2832 = vsub.s32 0, %v2831
      %v2833 = vrot.slane %v2828, %v2832
      %vm2835 = vcmask 523264
      %v2837 = vsel %vm2835, %v2819, 0
      %2839 = vmatprep.subr.mxu0 0.0
      %2840 = vmatpush1.msra.mxu0 %v2820
      %2841 = vmatprep.subr.mxu0 0.0
      %2842 = vmatpush1.msra.mxu0 %v2821
      %2843 = vmatprep.subr.mxu0 0.0
      %2844 = vmatpush1.msra.mxu0 %v2822
      %2845 = vmatprep.subr.mxu0 0.0
      %2846 = vmatpush1.msra.mxu0 %v2823
      %2847 = vmatprep.subr.mxu0 0.0
      %2848 = vmatpush1.msra.mxu0 %v2824
      %2849 = vmatprep.subr.mxu0 0.0
      %2850 = vmatpush1.msra.mxu0 %v2825
      %2851 = vmatprep.subr.mxu0 0.0
      %2852 = vmatpush1.msra.mxu0 %v2826
      %2853 = vmatprep.subr.mxu0 0.0
      %2854 = vmatpush1.msra.mxu0 %v2827
      %2855 = vmatprep.subr.mxu0 0.0
      %2856 = vmatpush1.msra.mxu0 0.0
      %2857 = vmatprep.subr.mxu0 0.0
      %2858 = vmatpush1.msra.mxu0 0.0
      %2859 = vmatprep.subr.mxu0 0.0
      %2860 = vmatpush1.msra.mxu0 0.0
      %2861 = vmatprep.subr.mxu0 0.0
      %2862 = vmatpush1.msra.mxu0 0.0
      %2863 = vmatprep.subr.mxu0 0.0
      %2864 = vmatpush1.msra.mxu0 0.0
      %2865 = vmatprep.subr.mxu0 0.0
      %2866 = vmatpush1.msra.mxu0 0.0
      %2867 = vmatprep.subr.mxu0 0.0
      %2868 = vmatpush1.msra.mxu0 0.0
      %2869 = vmatprep.subr.mxu0 0.0
      %2870 = vmatpush1.msra.mxu0 0.0
      %2871 = vmatprep.subr.mxu0 0.0
      %2872 = vmatpush1.msra.mxu0 0.0
      %2873 = vmatprep.subr.mxu0 0.0
      %2874 = vmatpush1.msra.mxu0 0.0
      %2875 = vmatprep.subr.mxu0 0.0
      %2876 = vmatpush1.msra.mxu0 0.0
      %2877 = vmatprep.subr.mxu0 0.0
      %2878 = vmatpush1.msra.mxu0 0.0
      %2879 = vmatprep.subr.mxu0 0.0
      %2880 = vmatpush1.msra.mxu0 0.0
      %2881 = vmatprep.subr.mxu0 0.0
      %2882 = vmatpush1.msra.mxu0 0.0
      %2883 = vmatprep.subr.mxu0 0.0
      %2884 = vmatpush1.msra.mxu0 0.0
      %2885 = vmatprep.subr.mxu0 0.0
      %2886 = vmatpush1.msra.mxu0 0.0
      %2887 = vmatprep.subr.mxu0 0.0
      %2888 = vmatpush1.msra.mxu0 0.0
      %2889 = vmatprep.subr.mxu0 0.0
      %2890 = vmatpush1.msra.mxu0 0.0
      %2891 = vmatprep.subr.mxu0 0.0
      %2892 = vmatpush1.msra.mxu0 0.0
      %2893 = vmatprep.subr.mxu0 0.0
      %2894 = vmatpush1.msra.mxu0 0.0
      %2895 = vmatprep.subr.mxu0 0.0
      %2896 = vmatpush1.msra.mxu0 0.0
      %2897 = vmatprep.subr.mxu0 0.0
      %2898 = vmatpush1.msra.mxu0 0.0
      %2899 = vmatprep.subr.mxu0 0.0
      %2900 = vmatpush1.msra.mxu0 0.0
      %2901 = vmatprep.subr.mxu0 0.0
      %2902 = vmatpush1.msra.mxu0 0.0
      %2903 = vmatprep.mubr.f32.mxu0 0.0
      %2904 = vmatmul.mubr.f32.gmra.mrb[0].mxu0 %v2837
      %v2905 = vpop.f32.mrb[0].mxu0
      %v2906 = vadd.f32 %v2833, %v2905
      %v2907 = vpop.f32.mrb[0].mxu0
      %2908 = vdwg.mxu0
      %v2909 = vadd.f32 %v2705, %v2906
      %2910 = vst.msk [vmem:[#allocation2] sm:$0xff] %vm1763, %v2909
      %p2911 = scmp.eq.s32.totalorder %s77, 1
      // Predicated region
      $region145: #{_lambda_.1} parent=139 // pred_check
        %p2912 = pneg %p2911
      $region146: #{_lambda_.1} parent=139 // pred_check_branch
        %2914 = sbr.rel (%p2912) target = $region148
      $region147: #{_lambda_.1} parent=139 // pred_region
        %v2915 = vld [vmem:[#allocation2] sm:$0xff]
        %2917 = vrot.lane.b32.xlu0 %v2915, 127
        %v2918 = vpop.permute.xlu0 %2917
        %2920 = vrot.lane.b32.xlu0 %v2915, 126
        %v2921 = vpop.permute.xlu0 %2920
        %2923 = vrot.lane.b32.xlu0 %v2915, 125
        %v2924 = vpop.permute.xlu0 %2923
        %2926 = vrot.lane.b32.xlu0 %v2915, 124
        %v2927 = vpop.permute.xlu0 %2926
        %2929 = vrot.lane.b32.xlu0 %v2915, 123
        %v2930 = vpop.permute.xlu0 %2929
        %2932 = vrot.lane.b32.xlu0 %v2915, 122
        %v2933 = vpop.permute.xlu0 %2932
        %2935 = vrot.lane.b32.xlu0 %v2915, 121
        %v2936 = vpop.permute.xlu0 %2935
        %2938 = vrot.lane.b32.xlu0 %v2915, 120
        %v2939 = vpop.permute.xlu0 %2938
        %2941 = vrot.lane.b32.xlu0 %v2915, 119
        %v2942 = vpop.permute.xlu0 %2941
        %2944 = vrot.lane.b32.xlu0 %v2915, 118
        %v2945 = vpop.permute.xlu0 %2944
        %v2947 = vld [vmem:[%s49] sm:$0xff]
        %v2948 = vld [vmem:[%s51] sm:$0xff]
        %2950 = vset.pattern.permute.xlu0 0
        %2951 = vperm.xlu0 %2950, %v2948
        %v2952 = vpop.permute.xlu0 %2951
        %vm2954 = vcmask 719872
        %v2956 = vsel %vm2954, %v2947, 0
        %2958 = vmatprep.subr.mxu0 0.0
        %2959 = vmatpush1.msra.mxu0 %v2915
        %2960 = vmatprep.subr.mxu0 0.0
        %2961 = vmatpush1.msra.mxu0 %v2918
        %2962 = vmatprep.subr.mxu0 0.0
        %2963 = vmatpush1.msra.mxu0 %v2921
        %2964 = vmatprep.subr.mxu0 0.0
        %2965 = vmatpush1.msra.mxu0 %v2924
        %2966 = vmatprep.subr.mxu0 0.0
        %2967 = vmatpush1.msra.mxu0 %v2927
        %2968 = vmatprep.subr.mxu0 0.0
        %2969 = vmatpush1.msra.mxu0 %v2930
        %2970 = vmatprep.subr.mxu0 0.0
        %2971 = vmatpush1.msra.mxu0 %v2933
        %2972 = vmatprep.subr.mxu0 0.0
        %2973 = vmatpush1.msra.mxu0 %v2936
        %2974 = vmatprep.subr.mxu0 0.0
        %2975 = vmatpush1.msra.mxu0 %v2939
        %2976 = vmatprep.subr.mxu0 0.0
        %2977 = vmatpush1.msra.mxu0 %v2942
        %2978 = vmatprep.subr.mxu0 0.0
        %2979 = vmatpush1.msra.mxu0 %v2945
        %2980 = vmatprep.subr.mxu0 0.0
        %2981 = vmatpush1.msra.mxu0 0.0
        %2982 = vmatprep.subr.mxu0 0.0
        %2983 = vmatpush1.msra.mxu0 0.0
        %2984 = vmatprep.subr.mxu0 0.0
        %2985 = vmatpush1.msra.mxu0 0.0
        %2986 = vmatprep.subr.mxu0 0.0
        %2987 = vmatpush1.msra.mxu0 0.0
        %2988 = vmatprep.subr.mxu0 0.0
        %2989 = vmatpush1.msra.mxu0 0.0
        %2990 = vmatprep.subr.mxu0 0.0
        %2991 = vmatpush1.msra.mxu0 0.0
        %2992 = vmatprep.subr.mxu0 0.0
        %2993 = vmatpush1.msra.mxu0 0.0
        %2994 = vmatprep.subr.mxu0 0.0
        %2995 = vmatpush1.msra.mxu0 0.0
        %2996 = vmatprep.subr.mxu0 0.0
        %2997 = vmatpush1.msra.mxu0 0.0
        %2998 = vmatprep.subr.mxu0 0.0
        %2999 = vmatpush1.msra.mxu0 0.0
        %3000 = vmatprep.subr.mxu0 0.0
        %3001 = vmatpush1.msra.mxu0 0.0
        %3002 = vmatprep.subr.mxu0 0.0
        %3003 = vmatpush1.msra.mxu0 0.0
        %3004 = vmatprep.subr.mxu0 0.0
        %3005 = vmatpush1.msra.mxu0 0.0
        %3006 = vmatprep.subr.mxu0 0.0
        %3007 = vmatpush1.msra.mxu0 0.0
        %3008 = vmatprep.subr.mxu0 0.0
        %3009 = vmatpush1.msra.mxu0 0.0
        %3010 = vmatprep.subr.mxu0 0.0
        %3011 = vmatpush1.msra.mxu0 0.0
        %3012 = vmatprep.subr.mxu0 0.0
        %3013 = vmatpush1.msra.mxu0 0.0
        %3014 = vmatprep.subr.mxu0 0.0
        %3015 = vmatpush1.msra.mxu0 0.0
        %3016 = vmatprep.subr.mxu0 0.0
        %3017 = vmatpush1.msra.mxu0 0.0
        %3018 = vmatprep.subr.mxu0 0.0
        %3019 = vmatpush1.msra.mxu0 0.0
        %3020 = vmatprep.subr.mxu0 0.0
        %3021 = vmatpush1.msra.mxu0 0.0
        %3022 = vmatprep.mubr.f32.mxu0 0.0
        %3023 = vmatmul.mubr.f32.gmra.mrb[0].mxu0 %v2956
        %v3024 = vpop.f32.mrb[0].mxu0
        %v3025 = vadd.f32 %v2952, %v3024
        %v3026 = vpop.f32.mrb[0].mxu0
        %3027 = vdwg.mxu0
        %v3028 = vmax.f32 %v3025, 0.0
        %v3029 = vld [vmem:[%s53] sm:$0xff]
        %v3030 = vld [vmem:[%s53 + $0x8] sm:$0xff]
        %v3031 = vld [vmem:[%s53 + $0x10] sm:$0x3f]
        %vm3032 = vcmask 179200
        %v3034 = vsel %vm3032, %v3028, 0
        %vm3036 = vcmask 1045504
        %v3038 = vsel %vm3036, %v3031, 0
        %3040 = vmatprep.subr.mxu0 0.0
        %3041 = vmatpush1.msra.mxu0 %v3029
        %3042 = vmatprep.subr.mxu0 0.0
        %3043 = vmatpush1.msra.mxu0 %v3030
        %3044 = vmatprep.subr.mxu0 0.0
        %3045 = vmatpush1.msra.mxu0 %v3038
        %3046 = vmatprep.subr.mxu0 0.0
        %3047 = vmatpush1.msra.mxu0 0.0
        %3048 = vmatprep.subr.mxu0 0.0
        %3049 = vmatpush1.msra.mxu0 0.0
        %3050 = vmatprep.subr.mxu0 0.0
        %3051 = vmatpush1.msra.mxu0 0.0
        %3052 = vmatprep.subr.mxu0 0.0
        %3053 = vmatpush1.msra.mxu0 0.0
        %3054 = vmatprep.subr.mxu0 0.0
        %3055 = vmatpush1.msra.mxu0 0.0
        %3056 = vmatprep.subr.mxu0 0.0
        %3057 = vmatpush1.msra.mxu0 0.0
        %3058 = vmatprep.subr.mxu0 0.0
        %3059 = vmatpush1.msra.mxu0 0.0
        %3060 = vmatprep.subr.mxu0 0.0
        %3061 = vmatpush1.msra.mxu0 0.0
        %3062 = vmatprep.subr.mxu0 0.0
        %3063 = vmatpush1.msra.mxu0 0.0
        %3064 = vmatprep.subr.mxu0 0.0
        %3065 = vmatpush1.msra.mxu0 0.0
        %3066 = vmatprep.subr.mxu0 0.0
        %3067 = vmatpush1.msra.mxu0 0.0
        %3068 = vmatprep.subr.mxu0 0.0
        %3069 = vmatpush1.msra.mxu0 0.0
        %3070 = vmatprep.subr.mxu0 0.0
        %3071 = vmatpush1.msra.mxu0 0.0
        %3072 = vmatprep.subr.mxu0 0.0
        %3073 = vmatpush1.msra.mxu0 0.0
        %3074 = vmatprep.subr.mxu0 0.0
        %3075 = vmatpush1.msra.mxu0 0.0
        %3076 = vmatprep.subr.mxu0 0.0
        %3077 = vmatpush1.msra.mxu0 0.0
        %3078 = vmatprep.subr.mxu0 0.0
        %3079 = vmatpush1.msra.mxu0 0.0
        %3080 = vmatprep.subr.mxu0 0.0
        %3081 = vmatpush1.msra.mxu0 0.0
        %3082 = vmatprep.subr.mxu0 0.0
        %3083 = vmatpush1.msra.mxu0 0.0
        %3084 = vmatprep.subr.mxu0 0.0
        %3085 = vmatpush1.msra.mxu0 0.0
        %3086 = vmatprep.subr.mxu0 0.0
        %3087 = vmatpush1.msra.mxu0 0.0
        %3088 = vmatprep.subr.mxu0 0.0
        %3089 = vmatpush1.msra.mxu0 0.0
        %3090 = vmatprep.subr.mxu0 0.0
        %3091 = vmatpush1.msra.mxu0 0.0
        %3092 = vmatprep.subr.mxu0 0.0
        %3093 = vmatpush1.msra.mxu0 0.0
        %3094 = vmatprep.subr.mxu0 0.0
        %3095 = vmatpush1.msra.mxu0 0.0
        %3096 = vmatprep.subr.mxu0 0.0
        %3097 = vmatpush1.msra.mxu0 0.0
        %3098 = vmatprep.subr.mxu0 0.0
        %3099 = vmatpush1.msra.mxu0 0.0
        %3100 = vmatprep.subr.mxu0 0.0
        %3101 = vmatpush1.msra.mxu0 0.0
        %3102 = vmatprep.subr.mxu0 0.0
        %3103 = vmatpush1.msra.mxu0 0.0
        %3104 = vmatprep.mubr.f32.mxu0 0.0
        %3105 = vmatmul.mubr.f32.gmra.mrb[0].mxu0 %v3034
        %v3106 = vpop.f32.mrb[0].mxu0
        %v3107 = vadd.f32 0.0, %v3106
        %v3108 = vpop.f32.mrb[0].mxu0
        %3109 = vdwg.mxu0
        %v3110 = vld [vmem:[%s55] sm:$0xff]
        %v3111 = vld [vmem:[%s55 + $0x8] sm:$0xff]
        %v3112 = vld [vmem:[%s55 + $0x10] sm:$0x3f]
        %v3114 = vsel %vm3036, %v3112, 0
        %3116 = vmatprep.subr.mxu0 0.0
        %3117 = vmatpush1.msra.mxu0 %v3110
        %3118 = vmatprep.subr.mxu0 0.0
        %3119 = vmatpush1.msra.mxu0 %v3111
        %3120 = vmatprep.subr.mxu0 0.0
        %3121 = vmatpush1.msra.mxu0 %v3114
        %3122 = vmatprep.subr.mxu0 0.0
        %3123 = vmatpush1.msra.mxu0 0.0
        %3124 = vmatprep.subr.mxu0 0.0
        %3125 = vmatpush1.msra.mxu0 0.0
        %3126 = vmatprep.subr.mxu0 0.0
        %3127 = vmatpush1.msra.mxu0 0.0
        %3128 = vmatprep.subr.mxu0 0.0
        %3129 = vmatpush1.msra.mxu0 0.0
        %3130 = vmatprep.subr.mxu0 0.0
        %3131 = vmatpush1.msra.mxu0 0.0
        %3132 = vmatprep.subr.mxu0 0.0
        %3133 = vmatpush1.msra.mxu0 0.0
        %3134 = vmatprep.subr.mxu0 0.0
        %3135 = vmatpush1.msra.mxu0 0.0
        %3136 = vmatprep.subr.mxu0 0.0
        %3137 = vmatpush1.msra.mxu0 0.0
        %3138 = vmatprep.subr.mxu0 0.0
        %3139 = vmatpush1.msra.mxu0 0.0
        %3140 = vmatprep.subr.mxu0 0.0
        %3141 = vmatpush1.msra.mxu0 0.0
        %3142 = vmatprep.subr.mxu0 0.0
        %3143 = vmatpush1.msra.mxu0 0.0
        %3144 = vmatprep.subr.mxu0 0.0
        %3145 = vmatpush1.msra.mxu0 0.0
        %3146 = vmatprep.subr.mxu0 0.0
        %3147 = vmatpush1.msra.mxu0 0.0
        %3148 = vmatprep.subr.mxu0 0.0
        %3149 = vmatpush1.msra.mxu0 0.0
        %3150 = vmatprep.subr.mxu0 0.0
        %3151 = vmatpush1.msra.mxu0 0.0
        %3152 = vmatprep.subr.mxu0 0.0
        %3153 = vmatpush1.msra.mxu0 0.0
        %3154 = vmatprep.subr.mxu0 0.0
        %3155 = vmatpush1.msra.mxu0 0.0
        %3156 = vmatprep.subr.mxu0 0.0
        %3157 = vmatpush1.msra.mxu0 0.0
        %3158 = vmatprep.subr.mxu0 0.0
        %3159 = vmatpush1.msra.mxu0 0.0
        %3160 = vmatprep.subr.mxu0 0.0
        %3161 = vmatpush1.msra.mxu0 0.0
        %3162 = vmatprep.subr.mxu0 0.0
        %3163 = vmatpush1.msra.mxu0 0.0
        %3164 = vmatprep.subr.mxu0 0.0
        %3165 = vmatpush1.msra.mxu0 0.0
        %3166 = vmatprep.subr.mxu0 0.0
        %3167 = vmatpush1.msra.mxu0 0.0
        %3168 = vmatprep.subr.mxu0 0.0
        %3169 = vmatpush1.msra.mxu0 0.0
        %3170 = vmatprep.subr.mxu0 0.0
        %3171 = vmatpush1.msra.mxu0 0.0
        %3172 = vmatprep.subr.mxu0 0.0
        %3173 = vmatpush1.msra.mxu0 0.0
        %3174 = vmatprep.subr.mxu0 0.0
        %3175 = vmatpush1.msra.mxu0 0.0
        %3176 = vmatprep.subr.mxu0 0.0
        %3177 = vmatpush1.msra.mxu0 0.0
        %3178 = vmatprep.subr.mxu0 0.0
        %3179 = vmatpush1.msra.mxu0 0.0
        %3180 = vmatprep.mubr.f32.mxu0 0.0
        %3181 = vmatmul.mubr.f32.gmra.mrb[0].mxu0 %v3034
        %v3182 = vpop.f32.mrb[0].mxu0
        %v3183 = vadd.f32 0.0, %v3182
        %v3184 = vpop.f32.mrb[0].mxu0
        %3185 = vdwg.mxu0
        %v3186 = vmax.f32 %v3107, %v3183
        %3188 = vrot.lane.b32.xlu0 %v3186, 127
        %v3189 = vpop.permute.xlu0 %3188
        %3191 = vrot.lane.b32.xlu0 %v3186, 126
        %v3192 = vpop.permute.xlu0 %3191
        %3194 = vrot.lane.b32.xlu0 %v3186, 125
        %v3195 = vpop.permute.xlu0 %3194
        %3197 = vrot.lane.b32.xlu0 %v3186, 124
        %v3198 = vpop.permute.xlu0 %3197
        %3200 = vrot.lane.b32.xlu0 %v3186, 123
        %v3201 = vpop.permute.xlu0 %3200
        %3203 = vrot.lane.b32.xlu0 %v3186, 122
        %v3204 = vpop.permute.xlu0 %3203
        %3206 = vrot.lane.b32.xlu0 %v3186, 121
        %v3207 = vpop.permute.xlu0 %3206
        %3209 = vrot.lane.b32.xlu0 %v3186, 120
        %v3210 = vpop.permute.xlu0 %3209
        %3212 = vrot.lane.b32.xlu0 %v3186, 119
        %v3213 = vpop.permute.xlu0 %3212
        %3215 = vrot.lane.b32.xlu0 %v3186, 118
        %v3216 = vpop.permute.xlu0 %3215
        %v3218 = vld [vmem:[%s57] sm:$0xff]
        %v3219 = vld [vmem:[%s59] sm:$0xff]
        %v3221 = vsel %vm2954, %v3218, 0
        %3223 = vmatprep.subr.mxu0 0.0
        %3224 = vmatpush1.msra.mxu0 %v3186
        %3225 = vmatprep.subr.mxu0 0.0
        %3226 = vmatpush1.msra.mxu0 %v3189
        %3227 = vmatprep.subr.mxu0 0.0
        %3228 = vmatpush1.msra.mxu0 %v3192
        %3229 = vmatprep.subr.mxu0 0.0
        %3230 = vmatpush1.msra.mxu0 %v3195
        %3231 = vmatprep.subr.mxu0 0.0
        %3232 = vmatpush1.msra.mxu0 %v3198
        %3233 = vmatprep.subr.mxu0 0.0
        %3234 = vmatpush1.msra.mxu0 %v3201
        %3235 = vmatprep.subr.mxu0 0.0
        %3236 = vmatpush1.msra.mxu0 %v3204
        %3237 = vmatprep.subr.mxu0 0.0
        %3238 = vmatpush1.msra.mxu0 %v3207
        %3239 = vmatprep.subr.mxu0 0.0
        %3240 = vmatpush1.msra.mxu0 %v3210
        %3241 = vmatprep.subr.mxu0 0.0
        %3242 = vmatpush1.msra.mxu0 %v3213
        %3243 = vmatprep.subr.mxu0 0.0
        %3244 = vmatpush1.msra.mxu0 %v3216
        %3245 = vmatprep.subr.mxu0 0.0
        %3246 = vmatpush1.msra.mxu0 0.0
        %3247 = vmatprep.subr.mxu0 0.0
        %3248 = vmatpush1.msra.mxu0 0.0
        %3249 = vmatprep.subr.mxu0 0.0
        %3250 = vmatpush1.msra.mxu0 0.0
        %3251 = vmatprep.subr.mxu0 0.0
        %3252 = vmatpush1.msra.mxu0 0.0
        %3253 = vmatprep.subr.mxu0 0.0
        %3254 = vmatpush1.msra.mxu0 0.0
        %3255 = vmatprep.subr.mxu0 0.0
        %3256 = vmatpush1.msra.mxu0 0.0
        %3257 = vmatprep.subr.mxu0 0.0
        %3258 = vmatpush1.msra.mxu0 0.0
        %3259 = vmatprep.subr.mxu0 0.0
        %3260 = vmatpush1.msra.mxu0 0.0
        %3261 = vmatprep.subr.mxu0 0.0
        %3262 = vmatpush1.msra.mxu0 0.0
        %3263 = vmatprep.subr.mxu0 0.0
        %3264 = vmatpush1.msra.mxu0 0.0
        %3265 = vmatprep.subr.mxu0 0.0
        %3266 = vmatpush1.msra.mxu0 0.0
        %3267 = vmatprep.subr.mxu0 0.0
        %3268 = vmatpush1.msra.mxu0 0.0
        %3269 = vmatprep.subr.mxu0 0.0
        %3270 = vmatpush1.msra.mxu0 0.0
        %3271 = vmatprep.subr.mxu0 0.0
        %3272 = vmatpush1.msra.mxu0 0.0
        %3273 = vmatprep.subr.mxu0 0.0
        %3274 = vmatpush1.msra.mxu0 0.0
        %3275 = vmatprep.subr.mxu0 0.0
        %3276 = vmatpush1.msra.mxu0 0.0
        %3277 = vmatprep.subr.mxu0 0.0
        %3278 = vmatpush1.msra.mxu0 0.0
        %3279 = vmatprep.subr.mxu0 0.0
        %3280 = vmatpush1.msra.mxu0 0.0
        %3281 = vmatprep.subr.mxu0 0.0
        %3282 = vmatpush1.msra.mxu0 0.0
        %3283 = vmatprep.subr.mxu0 0.0
        %3284 = vmatpush1.msra.mxu0 0.0
        %3285 = vmatprep.subr.mxu0 0.0
        %3286 = vmatpush1.msra.mxu0 0.0
        %3287 = vmatprep.mubr.f32.mxu0 0.0
        %3288 = vmatmul.mubr.f32.gmra.mrb[0].mxu0 %v3221
        %v3289 = vpop.f32.mrb[0].mxu0
        %v3290 = vadd.f32 %v3219, %v3289
        %v3291 = vpop.f32.mrb[0].mxu0
        %3292 = vdwg.mxu0
        %vm3293 = vcmask 7168
        %v3295 = vsel %vm3293, 1.0, 0
        %v3298 = vsel %vm3293, %v3290, 0
        %3300 = vmatprep.subr.mxu0 0.0
        %3301 = vmatpush1.xpose.msra.mxu0 %v3298
        %3302 = vmatprep.subr.mxu0 0.0
        %3303 = vmatpush1.xpose.msra.mxu0 0.0
        %3304 = vmatprep.subr.mxu0 0.0
        %3305 = vmatpush1.xpose.msra.mxu0 0.0
        %3306 = vmatprep.subr.mxu0 0.0
        %3307 = vmatpush1.xpose.msra.mxu0 0.0
        %3308 = vmatprep.subr.mxu0 0.0
        %3309 = vmatpush1.xpose.msra.mxu0 0.0
        %3310 = vmatprep.subr.mxu0 0.0
        %3311 = vmatpush1.xpose.msra.mxu0 0.0
        %3312 = vmatprep.subr.mxu0 0.0
        %3313 = vmatpush1.xpose.msra.mxu0 0.0
        %3314 = vmatprep.subr.mxu0 0.0
        %3315 = vmatpush1.xpose.msra.mxu0 0.0
        %3316 = vmatprep.subr.mxu0 0.0
        %3317 = vmatpush1.xpose.msra.mxu0 0.0
        %3318 = vmatprep.subr.mxu0 0.0
        %3319 = vmatpush1.xpose.msra.mxu0 0.0
        %3320 = vmatprep.subr.mxu0 0.0
        %3321 = vmatpush1.xpose.msra.mxu0 0.0
        %3322 = vmatprep.subr.mxu0 0.0
        %3323 = vmatpush1.xpose.msra.mxu0 0.0
        %3324 = vmatprep.subr.mxu0 0.0
        %3325 = vmatpush1.xpose.msra.mxu0 0.0
        %3326 = vmatprep.subr.mxu0 0.0
        %3327 = vmatpush1.xpose.msra.mxu0 0.0
        %3328 = vmatprep.subr.mxu0 0.0
        %3329 = vmatpush1.xpose.msra.mxu0 0.0
        %3330 = vmatprep.subr.mxu0 0.0
        %3331 = vmatpush1.xpose.msra.mxu0 0.0
        %3332 = vmatprep.subr.mxu0 0.0
        %3333 = vmatpush1.xpose.msra.mxu0 0.0
        %3334 = vmatprep.subr.mxu0 0.0
        %3335 = vmatpush1.xpose.msra.mxu0 0.0
        %3336 = vmatprep.subr.mxu0 0.0
        %3337 = vmatpush1.xpose.msra.mxu0 0.0
        %3338 = vmatprep.subr.mxu0 0.0
        %3339 = vmatpush1.xpose.msra.mxu0 0.0
        %3340 = vmatprep.subr.mxu0 0.0
        %3341 = vmatpush1.xpose.msra.mxu0 0.0
        %3342 = vmatprep.subr.mxu0 0.0
        %3343 = vmatpush1.xpose.msra.mxu0 0.0
        %3344 = vmatprep.subr.mxu0 0.0
        %3345 = vmatpush1.xpose.msra.mxu0 0.0
        %3346 = vmatprep.subr.mxu0 0.0
        %3347 = vmatpush1.xpose.msra.mxu0 0.0
        %3348 = vmatprep.subr.mxu0 0.0
        %3349 = vmatpush1.xpose.msra.mxu0 0.0
        %3350 = vmatprep.subr.mxu0 0.0
        %3351 = vmatpush1.xpose.msra.mxu0 0.0
        %3352 = vmatprep.subr.mxu0 0.0
        %3353 = vmatpush1.xpose.msra.mxu0 0.0
        %3354 = vmatprep.subr.mxu0 0.0
        %3355 = vmatpush1.xpose.msra.mxu0 0.0
        %3356 = vmatprep.subr.mxu0 0.0
        %3357 = vmatpush1.xpose.msra.mxu0 0.0
        %3358 = vmatprep.subr.mxu0 0.0
        %3359 = vmatpush1.xpose.msra.mxu0 0.0
        %3360 = vmatprep.subr.mxu0 0.0
        %3361 = vmatpush1.xpose.msra.mxu0 0.0
        %3362 = vmatprep.subr.mxu0 0.0
        %3363 = vmatpush1.xpose.msra.mxu0 0.0
        %3364 = vmatprep.mubr.f32.mxu0 0.0
        %3365 = vmatmul.mubr.f32.gmra.mrb[0].mxu0 %v3295
        %v3366 = vpop.f32.mrb[0].mxu0
        %v3367 = vadd.f32 0.0, %v3366
        %v3368 = vpop.f32.mrb[0].mxu0
        %3369 = vdwg.mxu0
        %vm3370 = vcmask 57344
        %3371 = vst.msk [vmem:[%s1164] sm:$0x1] %vm3370, %v3367
      $region148: #{_lambda_.1} parent=139 // pred_fallthru
        _
      %p3372 = scmp.lt.s32.totalorder %s76, 1
      %s3373 = scalar_select %p3372, %s76, 1
      %s3374 = scalar_lea.vmem %s61, %s3373
      // Predicated region
      $region149: #{_lambda_.1} parent=139 // pred_check
        %p3375 = pneg %p807
      $region150: #{_lambda_.1} parent=139 // pred_check_branch
        %3377 = sbr.rel (%p3375) target = $region152
      $region151: #{_lambda_.1} parent=139 // pred_region
        _
      $region152: #{_lambda_.1} parent=139 // pred_fallthru
        _
    $region140: #{_lambda_.1} parent=5 // pred_fallthru
      _
    %p3378 = scmp.le.s32.totalorder 2, %s67
    // Predicated region
    $region153: #{_lambda_.1} parent=5 // pred_check
      %p3379 = pneg %p3378
    $region154: #{_lambda_.1} parent=5 // pred_check_branch
      %3381 = sbr.rel (%p3379) target = $region156
    $region155: #{_lambda_.1} parent=5 // pred_region
      %s3382 = ssub.s32 %s67, 2
      // Predicated region
      $region157: #{_lambda_.1} parent=155 // pred_check
        %p3383 = pneg %p813
      $region158: #{_lambda_.1} parent=155 // pred_check_branch
        %3385 = sbr.rel (%p3383) target = $region160
      $region159: #{_lambda_.1} parent=155 // pred_region
        %p3386 = scmp.lt.s32.totalorder %s78, 1
        %s3387 = scalar_select %p3386, %s78, 1
        %s3388 = scalar_lea.vmem %s61, %s3387
      $region160: #{_lambda_.1} parent=155 // pred_fallthru
        _
    $region156: #{_lambda_.1} parent=5 // pred_fallthru
      _
  $region6: #{_lambda_.1} parent=0 // loop_footer
    %s71 = sadd.s32 1, %s67
  $region7: #{_lambda_.1} parent=0 // loop_footer_branch
    %66 = sbr.rel target = $region3
  $region8: #{_lambda_.1} parent=0 // loop_exit
    _

</llo_original>
